<compile_context>
chip_gen: v7x
topology: tpu7x:2x2x1
jax: 0.10.0
libtpu: 0.0.40
codegen_flags: <defaults>
</compile_context>

<pallas_src>
import math
from functools import partial

import jax
import jax.numpy as jnp
from jax.experimental import pallas as pl
from jax.experimental.pallas import tpu as pltpu


# ----------------------------- in-kernel helpers -----------------------------

def _layernorm(x, w, b, eps=1e-5):
    # LayerNorm over last dim in f32 (matches nn.LayerNorm / FP32LayerNorm).
    mu = jnp.mean(x, axis=-1, keepdims=True)
    var = jnp.mean(jnp.square(x - mu), axis=-1, keepdims=True)
    return (x - mu) * jax.lax.rsqrt(var + eps) * w + b


def _matmul(x, w):
    # x: (n, in) bf16, w: (in, out) bf16 (pre-transposed) -> (n, out) f32 accumulation.
    return jnp.dot(x, w, preferred_element_type=jnp.float32)


def _gelu_exact(x):
    # nn.GELU() default (exact, erf-based), in f32.
    return 0.5 * x * (1.0 + jax.lax.erf(x * 0.7071067811865476))


# --------------------------------- kernel ------------------------------------

def _resampler_kernel(num_heads,
                      x_ref, lat0_ref,
                      norm1_w, norm1_b, norm2_w, norm2_b,
                      to_q_w, to_kv_w, to_out_w,
                      ff_ln_w, ff_ln_b, ff_w1, ff_w2,
                      proj_out_w, proj_out_b, norm_out_w, norm_out_b,
                      out_ref, lat_scr, hln_scr):
    l = pl.program_id(1)          # depth (layer) index
    c = pl.program_id(2)          # FFN hidden-chunk index
    n_ff = pl.num_programs(2)
    bt, S, D = x_ref.shape
    T = lat_scr.shape[1]
    H = num_heads
    hd = D // H
    bf16 = jnp.bfloat16

    # ---- very first step for this batch tile: initialize latents ----
    @pl.when(jnp.logical_and(l == 0, c == 0))
    def _():
        lat_scr[...] = jnp.broadcast_to(lat0_ref[0].astype(jnp.float32), (bt, T, D))

    # ---- once per layer (first hidden chunk): attention + residual + FFN LayerNorm ----
    @pl.when(c == 0)
    def _():
        x = x_ref[...]                                              # (bt, S, D) bf16
        lat = lat_scr[...]                                          # (bt, T, D) f32

        xi = _layernorm(x.astype(jnp.float32), norm1_w[0], norm1_b[0]).astype(bf16)
        li = _layernorm(lat, norm2_w[0], norm2_b[0]).astype(bf16)

        xi2 = xi.reshape(bt * S, D)
        li2 = li.reshape(bt * T, D)

        q = _matmul(li2, to_q_w[0])                                 # (bt*T, D) f32
        # No [image, latents] concat: share the to_kv weight across two matmuls.
        # Cast to bf16 *before* the per-head relayout (halves the relayout bytes).
        kv_x = _matmul(xi2, to_kv_w[0]).astype(bf16)                # (bt*S, 2D)
        kv_l = _matmul(li2, to_kv_w[0]).astype(bf16)                # (bt*T, 2D)

        # Fold the attention scale into q (small tensor) instead of the score slabs.
        q = (q * (1.0 / math.sqrt(hd))).astype(bf16)

        def heads(t2d, n):
            # (bt*n, D) -> (bt*H, n, hd): fold (batch, head) into one batched-dot axis.
            return (t2d.reshape(bt, n, H, hd)
                    .transpose(0, 2, 1, 3)
                    .reshape(bt * H, n, hd))

        qh = heads(q, T)
        kx = heads(kv_x[:, :D], S)
        vx = heads(kv_x[:, D:], S)
        kl = heads(kv_l[:, :D], T)
        vl = heads(kv_l[:, D:], T)

        s_x = jnp.einsum('bqd,bkd->bqk', qh, kx,
                         preferred_element_type=jnp.float32)        # (bt*H, T, S)
        s_l = jnp.einsum('bqd,bkd->bqk', qh, kl,
                         preferred_element_type=jnp.float32)        # (bt*H, T, T)

        # Split softmax over the (S+T) key axis (identical to concat + softmax).
        m = jnp.maximum(s_x.max(-1, keepdims=True), s_l.max(-1, keepdims=True))
        p_x = jnp.exp(s_x - m)
        p_l = jnp.exp(s_l - m)
        denom = p_x.sum(-1, keepdims=True) + p_l.sum(-1, keepdims=True)
        o = (jnp.einsum('bqk,bkd->bqd', p_x.astype(bf16), vx,
                        preferred_element_type=jnp.float32)
             + jnp.einsum('bqk,bkd->bqd', p_l.astype(bf16), vl,
                          preferred_element_type=jnp.float32))      # (bt*H, T, hd)
        # NOTE: approx reciprocal (~1e-3 rel error) is fine at inference tolerances.
        o = o * pl.reciprocal(denom, approx=True)
        o = (o.reshape(bt, H, T, hd)
             .transpose(0, 2, 1, 3)
             .reshape(bt * T, D))

        attn = _matmul(o.astype(bf16), to_out_w[0]).reshape(bt, T, D)
        lat = attn + lat                                            # residual (f32)
        lat_scr[...] = lat

        # FFN pre-activation LayerNorm computed once per layer; every hidden chunk
        # consumes the same bf16 slab.
        hln = _layernorm(lat, ff_ln_w[0], ff_ln_b[0])
        hln_scr[...] = hln.reshape(bt * T, D).astype(bf16)

    # ---- every step: one FFN hidden chunk, accumulated into the residual stream ----
    h = _matmul(hln_scr[...], ff_w1[0])                             # (bt*T, ff_chunk) f32
    h = _gelu_exact(h)
    h = _matmul(h.astype(bf16), ff_w2[0])                           # (bt*T, D) f32
    lat_scr[...] = lat_scr[...] + h.reshape(bt, T, D)

    # ---- last step for this batch tile: proj_out + norm_out -> output block ----
    @pl.when(jnp.logical_and(l == pl.num_programs(1) - 1, c == n_ff - 1))
    def _():
        lat = lat_scr[...]
        y = _matmul(lat.reshape(bt * T, D).astype(bf16), proj_out_w[...])
        y = y + proj_out_b[...]
        y = _layernorm(y, norm_out_w[...], norm_out_b[...])
        out_ref[...] = y.reshape(bt, T, D).astype(out_ref.dtype)


# ------------------------------ sizing helpers --------------------------------

def _vmem_limit_bytes():
    # Generation-aware VMEM limit (~85% of physical, 8 MiB headroom); conservative
    # fallback if the query is unavailable.
    try:
        info = pltpu.get_tpu_info()
        cap = getattr(info, "vmem_capacity_bytes", None)
        if cap:
            return int(min(cap - 8 * 1024 * 1024, int(cap * 0.85)))
    except Exception:
        pass
    return 48 * 1024 * 1024


def _pick_ff_chunk(hidden):
    # Largest divisor of hidden that is a multiple of 128 lanes and <= cap.
    cap = min(1024, max(128, hidden // 2))
    for c in range(cap, 0, -1):
        if hidden % c == 0 and (c % 128 == 0 or c == hidden):
            return c
    return hidden


def _pick_batch_tile(B, S, T, D, ff_chunk, vmem_limit):
    # Per-layer resident bf16 weights, double-buffered: to_q + to_out (D*D each),
    # to_kv (2*D*D), plus one FFN hidden chunk of w1 + w2 (2*D*ff_chunk).
    weight_bytes = 2 * 2 * (4 * D * D + 2 * D * ff_chunk)
    # Rough per-batch-row activation bytes: bf16 x block (double-buffered) + bf16
    # kv/k/v transients + f32 LN/score-side transients + latents/out/misc.
    per_row = 2 * 2 * S * D + 8 * S * D + 8 * S * D + 40 * T * D
    budget = int(0.75 * vmem_limit) - weight_bytes
    bt_cap = max(1, budget // max(per_row, 1))
    if B >= 2:
        bt_cap = min(bt_cap, B // 2)   # keep >= 2 batch tiles (v7x megacore)
    bt = 1
    for cand in range(1, B + 1):
        if B % cand == 0 and cand <= bt_cap:
            bt = cand
    return bt


# --------------------------------- wrapper ------------------------------------

def resampler_projector(image_features, params, num_heads, batch_tile=None):
    B, S, F = image_features.shape
    _, T, D = params["latents"].shape
    depth = params["to_q_w"].shape[0]
    hidden = params["ff_w1"].shape[1]
    bf16 = jnp.bfloat16

    # proj_in hoisted out of the kernel (plain XLA matmul, bf16 operands / f32 acc).
    x = jnp.einsum('bsf,df->bsd', image_features.astype(bf16),
                   params["proj_in_w"].astype(bf16),
                   preferred_element_type=jnp.float32) + params["proj_in_b"]
    x = x.astype(bf16)                                               # (B, S, D)

    # Pre-transpose stacked weights to (depth, in, out) so the kernel never emits
    # per-step weight transposes.  (One-time cost; in production do this at load time.)
    to_q_w_t = jnp.swapaxes(params["to_q_w"], -1, -2).astype(bf16)     # (depth, D, D)
    to_kv_w_t = jnp.swapaxes(params["to_kv_w"], -1, -2).astype(bf16)   # (depth, D, 2D)
    to_out_w_t = jnp.swapaxes(params["to_out_w"], -1, -2).astype(bf16) # (depth, D, D)
    ff_w1_t = jnp.swapaxes(params["ff_w1"], -1, -2).astype(bf16)       # (depth, D, hidden)
    ff_w2_t = jnp.swapaxes(params["ff_w2"], -1, -2).astype(bf16)       # (depth, hidden, D)
    proj_out_w_t = params["proj_out_w"].T.astype(bf16)                 # (D, D)

    ff_chunk = _pick_ff_chunk(hidden)
    n_ff = hidden // ff_chunk
    vmem_limit = _vmem_limit_bytes()

    if batch_tile is None:
        batch_tile = _pick_batch_tile(B, S, T, D, ff_chunk, vmem_limit)
    bt = batch_tile
    assert B % bt == 0, "batch_tile must divide the batch"

    arrays = [x, params["latents"],
              params["norm1_w"], params["norm1_b"],
              params["norm2_w"], params["norm2_b"],
              to_q_w_t, to_kv_w_t, to_out_w_t,
              params["ff_ln_w"], params["ff_ln_b"], ff_w1_t, ff_w2_t,
              proj_out_w_t, params["proj_out_b"],
              params["norm_out_w"], params["norm_out_b"]]

    def const_spec(a):
        nd = a.ndim
        return pl.BlockSpec(a.shape, lambda b, l, c, _nd=nd: (0,) * _nd)

    def layer_spec(a):
        nd = a.ndim
        blk = (1,) + a.shape[1:]
        return pl.BlockSpec(blk, lambda b, l, c, _nd=nd: (l,) + (0,) * (_nd - 1))

    in_specs = [
        pl.BlockSpec((bt, S, D), lambda b, l, c: (b, 0, 0)),            # x
        const_spec(params["latents"]),                                  # latents
        layer_spec(params["norm1_w"]), layer_spec(params["norm1_b"]),
        layer_spec(params["norm2_w"]), layer_spec(params["norm2_b"]),
        layer_spec(to_q_w_t), layer_spec(to_kv_w_t), layer_spec(to_out_w_t),
        layer_spec(params["ff_ln_w"]), layer_spec(params["ff_ln_b"]),
        pl.BlockSpec((1, D, ff_chunk), lambda b, l, c: (l, 0, c)),      # ff_w1 chunk
        pl.BlockSpec((1, ff_chunk, D), lambda b, l, c: (l, c, 0)),      # ff_w2 chunk
        const_spec(proj_out_w_t), const_spec(params["proj_out_b"]),
        const_spec(params["norm_out_w"]), const_spec(params["norm_out_b"]),
    ]
    out_specs = pl.BlockSpec((bt, T, D), lambda b, l, c: (b, 0, 0))

    return pl.pallas_call(
        partial(_resampler_kernel, num_heads),
        out_shape=jax.ShapeDtypeStruct((B, T, D), jnp.float32),
        grid_spec=pltpu.PrefetchScalarGridSpec(
            num_scalar_prefetch=0,
            grid=(B // bt, depth, n_ff),
            in_specs=in_specs,
            out_specs=out_specs,
            scratch_shapes=[pltpu.VMEM((bt, T, D), jnp.float32),        # running latents
                            pltpu.VMEM((bt * T, D), jnp.bfloat16)],     # FFN LN activations
        ),
        compiler_params=pltpu.CompilerParams(
            dimension_semantics=("parallel", "arbitrary", "arbitrary"),
            vmem_limit_bytes=int(vmem_limit)),
    )(*arrays)


# ------------------------------ param init ------------------------------------

def init_params(key, in_features, dim, num_ip_tokens, depth, mlp_ratio):
    hidden = int(dim * mlp_ratio)
    ks = jax.random.split(key, 10)

    def w(k, shape, std=0.02):
        return std * jax.random.normal(k, shape, dtype=jnp.float32)

    params = {
        "latents": jax.random.normal(ks[0], (1, num_ip_tokens, dim),
                                     dtype=jnp.float32) / math.sqrt(dim),
        "proj_in_w": w(ks[1], (dim, in_features)),       # PyTorch (out, in) layout
        "proj_in_b": jnp.zeros((1, dim), jnp.float32),
        # per-layer (stacked along depth)
        "norm1_w": jnp.ones((depth, 1, dim), jnp.float32),
        "norm1_b": jnp.zeros((depth, 1, dim), jnp.float32),
        "norm2_w": jnp.ones((depth, 1, dim), jnp.float32),
        "norm2_b": jnp.zeros((depth, 1, dim), jnp.float32),
        "to_q_w": w(ks[2], (depth, dim, dim)),
        "to_kv_w": w(ks[3], (depth, 2 * dim, dim)),
        "to_out_w": w(ks[4], (depth, dim, dim)),
        "ff_ln_w": jnp.ones((depth, 1, dim), jnp.float32),
        "ff_ln_b": jnp.zeros((depth, 1, dim), jnp.float32),
        "ff_w1": w(ks[5], (depth, hidden, dim)),
        "ff_w2": w(ks[6], (depth, dim, hidden)),
        "proj_out_w": w(ks[7], (dim, dim)),
        "proj_out_b": jnp.zeros((1, dim), jnp.float32),
        "norm_out_w": jnp.ones((1, dim), jnp.float32),
        "norm_out_b": jnp.zeros((1, dim), jnp.float32),
    }
    return params


# ----------------------------- pure-JAX reference -----------------------------

def reference(image_features, params, num_heads):
    B, S, F = image_features.shape
    D = params["latents"].shape[-1]
    hd = D // num_heads
    lat = jnp.broadcast_to(params["latents"],
                           (B,) + params["latents"].shape[1:])

    def ln(x, w, b, eps=1e-5):
        mu = x.mean(-1, keepdims=True)
        var = ((x - mu) ** 2).mean(-1, keepdims=True)
        return (x - mu) / jnp.sqrt(var + eps) * w + b

    x = jnp.einsum('bsf,df->bsd', image_features, params["proj_in_w"]) + params["proj_in_b"]
    depth = params["to_q_w"].shape[0]
    for l in range(depth):
        xi = ln(x, params["norm1_w"][l], params["norm1_b"][l])
        li = ln(lat, params["norm2_w"][l], params["norm2_b"][l])
        q = jnp.einsum('btd,ed->bte', li, params["to_q_w"][l])
        kv_in = jnp.concatenate([xi, li], axis=1)
        kv = jnp.einsum('bsd,ed->bse', kv_in, params["to_kv_w"][l])
        k, v = kv[..., :D], kv[..., D:]
        qh = q.reshape(B, -1, num_heads, hd).transpose(0, 2, 1, 3)
        kh = k.reshape(B, -1, num_heads, hd).transpose(0, 2, 1, 3)
        vh = v.reshape(B, -1, num_heads, hd).transpose(0, 2, 1, 3)
        s = jnp.einsum('bhtd,bhsd->bhts', qh, kh) / math.sqrt(hd)
        p = jax.nn.softmax(s, axis=-1)
        o = jnp.einsum('bhts,bhsd->bhtd', p, vh)
        o = o.transpose(0, 2, 1, 3).reshape(B, -1, D)
        attn = jnp.einsum('btd,ed->bte', o, params["to_out_w"][l])
        lat = attn + lat
        h = ln(lat, params["ff_ln_w"][l], params["ff_ln_b"][l])
        h = jnp.einsum('btd,hd->bth', h, params["ff_w1"][l])
        h = jax.nn.gelu(h, approximate=False)
        h = jnp.einsum('bth,dh->btd', h, params["ff_w2"][l])
        lat = h + lat
    lat = jnp.einsum('btd,ed->bte', lat, params["proj_out_w"]) + params["proj_out_b"]
    return ln(lat, params["norm_out_w"], params["norm_out_b"])


# ----------------------------------- main -------------------------------------

if __name__ == "__main__":
    # Small, module-consistent shapes (production: dim=768..1664, depth=4, S~257).
    B, S, in_features = 2, 8, 32
    dim = 64                  # cross_attention_dim
    num_heads = 4
    num_ip_tokens = 4
    depth = 2
    mlp_ratio = 4.0           # hidden = 256 -> ff_chunk = 128 -> 2 hidden chunks

    key = jax.random.PRNGKey(0)
    k_x, k_p = jax.random.split(key)
    image_features = jax.random.normal(k_x, (B, S, in_features), dtype=jnp.float32)
    params = init_params(k_p, in_features, dim, num_ip_tokens, depth, mlp_ratio)

    out = jax.block_until_ready(resampler_projector(image_features, params, num_heads))
    ref = jax.block_until_ready(reference(image_features, params, num_heads))

    assert out.shape == (B, num_ip_tokens, dim)
    max_diff = float(jnp.max(jnp.abs(out - ref)))
    # bf16 MXU matmuls (f32 accumulation / LN / softmax / residuals) vs f32 reference.
    assert jnp.allclose(out, ref, atol=3e-2, rtol=3e-2), \
        f"mismatch: max abs diff = {max_diff}"
    print("KERNEL_OK")
</pallas_src>

<mosaic_0001>
module attributes {stable_mosaic.version = 11 : i64} {
  func.func @_resampler_kernel(%arg0: i32, %arg1: i32, %arg2: i32, %arg3: memref<1x8x64xbf16, #tpu.memory_space<vmem>>, %arg4: memref<1x4x64xf32, #tpu.memory_space<vmem>>, %arg5: memref<1x1x64xf32, #tpu.memory_space<vmem>>, %arg6: memref<1x1x64xf32, #tpu.memory_space<vmem>>, %arg7: memref<1x1x64xf32, #tpu.memory_space<vmem>>, %arg8: memref<1x1x64xf32, #tpu.memory_space<vmem>>, %arg9: memref<1x64x64xbf16, #tpu.memory_space<vmem>>, %arg10: memref<1x64x128xbf16, #tpu.memory_space<vmem>>, %arg11: memref<1x64x64xbf16, #tpu.memory_space<vmem>>, %arg12: memref<1x1x64xf32, #tpu.memory_space<vmem>>, %arg13: memref<1x1x64xf32, #tpu.memory_space<vmem>>, %arg14: memref<1x64x128xbf16, #tpu.memory_space<vmem>>, %arg15: memref<1x128x64xbf16, #tpu.memory_space<vmem>>, %arg16: memref<64x64xbf16, #tpu.memory_space<vmem>>, %arg17: memref<1x64xf32, #tpu.memory_space<vmem>>, %arg18: memref<1x64xf32, #tpu.memory_space<vmem>>, %arg19: memref<1x64xf32, #tpu.memory_space<vmem>>, %arg20: memref<1x4x64xf32, #tpu.memory_space<vmem>>, %arg21: memref<1x4x64xf32, #tpu.memory_space<vmem>>, %arg22: memref<4x64xbf16, #tpu.memory_space<vmem>>) attributes {dimension_semantics = [#tpu.dimension_semantics<parallel>, #tpu.dimension_semantics<arbitrary>, #tpu.dimension_semantics<arbitrary>], iteration_bounds = array<i64: 2, 2, 2>, scalar_prefetch = 0 : i64, scratch_operands = 2 : i64, tpu.core_type = #tpu.core_type<tc>, window_params = [{transform_indices = @transform_0, window_bounds = array<i64: 1, 8, 64>}, {pipeline_mode = #tpu.pipeline_mode<synchronous>, transform_indices = @transform_1, window_bounds = array<i64: 1, 4, 64>}, {transform_indices = @transform_2, window_bounds = array<i64: 1, 1, 64>}, {transform_indices = @transform_3, window_bounds = array<i64: 1, 1, 64>}, {transform_indices = @transform_4, window_bounds = array<i64: 1, 1, 64>}, {transform_indices = @transform_5, window_bounds = array<i64: 1, 1, 64>}, {transform_indices = @transform_6, window_bounds = array<i64: 1, 64, 64>}, {transform_indices = @transform_7, window_bounds = array<i64: 1, 64, 128>}, {transform_indices = @transform_8, window_bounds = array<i64: 1, 64, 64>}, {transform_indices = @transform_9, window_bounds = array<i64: 1, 1, 64>}, {transform_indices = @transform_10, window_bounds = array<i64: 1, 1, 64>}, {transform_indices = @transform_11, window_bounds = array<i64: 1, 64, 128>}, {transform_indices = @transform_12, window_bounds = array<i64: 1, 128, 64>}, {pipeline_mode = #tpu.pipeline_mode<synchronous>, transform_indices = @transform_13, window_bounds = array<i64: 64, 64>}, {pipeline_mode = #tpu.pipeline_mode<synchronous>, transform_indices = @transform_14, window_bounds = array<i64: 1, 64>}, {pipeline_mode = #tpu.pipeline_mode<synchronous>, transform_indices = @transform_15, window_bounds = array<i64: 1, 64>}, {pipeline_mode = #tpu.pipeline_mode<synchronous>, transform_indices = @transform_16, window_bounds = array<i64: 1, 64>}, {transform_indices = @transform_17, window_bounds = array<i64: 1, 4, 64>}]} {
    %c0_i32 = arith.constant 0 : i32
    %0 = arith.cmpi eq, %arg1, %c0_i32 : i32
    %c0_i32_0 = arith.constant 0 : i32
    %1 = arith.cmpi eq, %arg2, %c0_i32_0 : i32
    %2 = arith.andi %0, %1 : i1
    %3 = arith.extui %2 : i1 to i32
    %c0_i32_1 = arith.constant 0 : i32
    %4 = arith.cmpi ne, %3, %c0_i32_1 : i32
    scf.if %4 {
      %c0_23 = arith.constant 0 : index
      %c0_24 = arith.constant 0 : index
      %c0_25 = arith.constant 0 : index
      %33 = vector.load %arg4[%c0_23, %c0_24, %c0_25] : memref<1x4x64xf32, #tpu.memory_space<vmem>>, vector<1x4x64xf32>
      %34 = vector.shape_cast %33 : vector<1x4x64xf32> to vector<4x64xf32>
      %35 = vector.shape_cast %34 : vector<4x64xf32> to vector<1x4x64xf32>
      %c0_26 = arith.constant 0 : index
      %c0_27 = arith.constant 0 : index
      %c0_28 = arith.constant 0 : index
      %36 = vector.load %arg21[%c0_26, %c0_27, %c0_28] : memref<1x4x64xf32, #tpu.memory_space<vmem>>, vector<1x4x64xf32>
      tpu.vector_store %arg21[%c0_26, %c0_27, %c0_28], %35 {strides = array<i32>} : memref<1x4x64xf32, #tpu.memory_space<vmem>>, vector<1x4x64xf32>,
    } else {
    }
    %c0_i32_2 = arith.constant 0 : i32
    %5 = arith.cmpi eq, %arg2, %c0_i32_2 : i32
    %6 = arith.extui %5 : i1 to i32
    %c0_i32_3 = arith.constant 0 : i32
    %7 = arith.cmpi ne, %6, %c0_i32_3 : i32
    scf.if %7 {
      %c0_23 = arith.constant 0 : index
      %c0_24 = arith.constant 0 : index
      %c0_25 = arith.constant 0 : index
      %33 = vector.load %arg3[%c0_23, %c0_24, %c0_25] : memref<1x8x64xbf16, #tpu.memory_space<vmem>>, vector<1x8x64xbf16>
      %c0_26 = arith.constant 0 : index
      %c0_27 = arith.constant 0 : index
      %c0_28 = arith.constant 0 : index
      %34 = vector.load %arg21[%c0_26, %c0_27, %c0_28] : memref<1x4x64xf32, #tpu.memory_space<vmem>>, vector<1x4x64xf32>
      %35 = arith.extf %33 : vector<1x8x64xbf16> to vector<1x8x64xf32>
      %c0_29 = arith.constant 0 : index
      %c0_30 = arith.constant 0 : index
      %c0_31 = arith.constant 0 : index
      %36 = vector.load %arg5[%c0_29, %c0_30, %c0_31] : memref<1x1x64xf32, #tpu.memory_space<vmem>>, vector<1x1x64xf32>
      %37 = vector.shape_cast %36 : vector<1x1x64xf32> to vector<1x64xf32>
      %c0_32 = arith.constant 0 : index
      %c0_33 = arith.constant 0 : index
      %c0_34 = arith.constant 0 : index
      %38 = vector.load %arg6[%c0_32, %c0_33, %c0_34] : memref<1x1x64xf32, #tpu.memory_space<vmem>>, vector<1x1x64xf32>
      %39 = vector.shape_cast %38 : vector<1x1x64xf32> to vector<1x64xf32>
      %cst_35 = arith.constant dense<0.000000e+00> : vector<1x8xf32>
      %40 = vector.multi_reduction <add>, %35, %cst_35 [2] : vector<1x8x64xf32> to vector<1x8xf32>
      %41 = vector.shape_cast %40 : vector<1x8xf32> to vector<1x8x1xf32>
      %cst_36 = arith.constant 6.400000e+01 : f32
      %42 = vector.broadcast %cst_36 : f32 to vector<1x8x1xf32>
      %43 = arith.divf %41, %42 : vector<1x8x1xf32>
      %44 = vector.broadcast %43 : vector<1x8x1xf32> to vector<1x8x64xf32>
      %45 = arith.subf %35, %44 : vector<1x8x64xf32>
      %46 = arith.mulf %45, %45 : vector<1x8x64xf32>
      %cst_37 = arith.constant dense<0.000000e+00> : vector<1x8xf32>
      %47 = vector.multi_reduction <add>, %46, %cst_37 [2] : vector<1x8x64xf32> to vector<1x8xf32>
      %48 = vector.shape_cast %47 : vector<1x8xf32> to vector<1x8x1xf32>
      %cst_38 = arith.constant 6.400000e+01 : f32
      %49 = vector.broadcast %cst_38 : f32 to vector<1x8x1xf32>
      %50 = arith.divf %48, %49 : vector<1x8x1xf32>
      %51 = vector.broadcast %43 : vector<1x8x1xf32> to vector<1x8x64xf32>
      %52 = arith.subf %35, %51 : vector<1x8x64xf32>
      %cst_39 = arith.constant 9.99999974E-6 : f32
      %53 = vector.broadcast %cst_39 : f32 to vector<1x8x1xf32>
      %54 = arith.addf %50, %53 : vector<1x8x1xf32>
      %55 = math.rsqrt %54 : vector<1x8x1xf32>
      %56 = vector.broadcast %55 : vector<1x8x1xf32> to vector<1x8x64xf32>
      %57 = arith.mulf %52, %56 : vector<1x8x64xf32>
      %58 = vector.shape_cast %37 : vector<1x64xf32> to vector<1x1x64xf32>
      %59 = vector.broadcast %58 : vector<1x1x64xf32> to vector<1x8x64xf32>
      %60 = arith.mulf %57, %59 : vector<1x8x64xf32>
      %61 = vector.shape_cast %39 : vector<1x64xf32> to vector<1x1x64xf32>
      %62 = vector.broadcast %61 : vector<1x1x64xf32> to vector<1x8x64xf32>
      %63 = arith.addf %60, %62 : vector<1x8x64xf32>
      %64 = arith.truncf %63 : vector<1x8x64xf32> to vector<1x8x64xbf16>
      %c0_40 = arith.constant 0 : index
      %c0_41 = arith.constant 0 : index
      %c0_42 = arith.constant 0 : index
      %65 = vector.load %arg7[%c0_40, %c0_41, %c0_42] : memref<1x1x64xf32, #tpu.memory_space<vmem>>, vector<1x1x64xf32>
      %66 = vector.shape_cast %65 : vector<1x1x64xf32> to vector<1x64xf32>
      %c0_43 = arith.constant 0 : index
      %c0_44 = arith.constant 0 : index
      %c0_45 = arith.constant 0 : index
      %67 = vector.load %arg8[%c0_43, %c0_44, %c0_45] : memref<1x1x64xf32, #tpu.memory_space<vmem>>, vector<1x1x64xf32>
      %68 = vector.shape_cast %67 : vector<1x1x64xf32> to vector<1x64xf32>
      %cst_46 = arith.constant dense<0.000000e+00> : vector<1x4xf32>
      %69 = vector.multi_reduction <add>, %34, %cst_46 [2] : vector<1x4x64xf32> to vector<1x4xf32>
      %70 = vector.shape_cast %69 : vector<1x4xf32> to vector<1x4x1xf32>
      %cst_47 = arith.constant 6.400000e+01 : f32
      %71 = vector.broadcast %cst_47 : f32 to vector<1x4x1xf32>
      %72 = arith.divf %70, %71 : vector<1x4x1xf32>
      %73 = vector.broadcast %72 : vector<1x4x1xf32> to vector<1x4x64xf32>
      %74 = arith.subf %34, %73 : vector<1x4x64xf32>
      %75 = arith.mulf %74, %74 : vector<1x4x64xf32>
      %cst_48 = arith.constant dense<0.000000e+00> : vector<1x4xf32>
      %76 = vector.multi_reduction <add>, %75, %cst_48 [2] : vector<1x4x64xf32> to vector<1x4xf32>
      %77 = vector.shape_cast %76 : vector<1x4xf32> to vector<1x4x1xf32>
      %cst_49 = arith.constant 6.400000e+01 : f32
      %78 = vector.broadcast %cst_49 : f32 to vector<1x4x1xf32>
      %79 = arith.divf %77, %78 : vector<1x4x1xf32>
      %80 = vector.broadcast %72 : vector<1x4x1xf32> to vector<1x4x64xf32>
      %81 = arith.subf %34, %80 : vector<1x4x64xf32>
      %cst_50 = arith.constant 9.99999974E-6 : f32
      %82 = vector.broadcast %cst_50 : f32 to vector<1x4x1xf32>
      %83 = arith.addf %79, %82 : vector<1x4x1xf32>
      %84 = math.rsqrt %83 : vector<1x4x1xf32>
      %85 = vector.broadcast %84 : vector<1x4x1xf32> to vector<1x4x64xf32>
      %86 = arith.mulf %81, %85 : vector<1x4x64xf32>
      %87 = vector.shape_cast %66 : vector<1x64xf32> to vector<1x1x64xf32>
      %88 = vector.broadcast %87 : vector<1x1x64xf32> to vector<1x4x64xf32>
      %89 = arith.mulf %86, %88 : vector<1x4x64xf32>
      %90 = vector.shape_cast %68 : vector<1x64xf32> to vector<1x1x64xf32>
      %91 = vector.broadcast %90 : vector<1x1x64xf32> to vector<1x4x64xf32>
      %92 = arith.addf %89, %91 : vector<1x4x64xf32>
      %93 = arith.truncf %92 : vector<1x4x64xf32> to vector<1x4x64xbf16>
      %94 = vector.shape_cast %64 : vector<1x8x64xbf16> to vector<8x64xbf16>
      %95 = vector.shape_cast %93 : vector<1x4x64xbf16> to vector<4x64xbf16>
      %c0_51 = arith.constant 0 : index
      %c0_52 = arith.constant 0 : index
      %c0_53 = arith.constant 0 : index
      %96 = vector.load %arg9[%c0_51, %c0_52, %c0_53] : memref<1x64x64xbf16, #tpu.memory_space<vmem>>, vector<1x64x64xbf16>
      %97 = vector.shape_cast %96 : vector<1x64x64xbf16> to vector<64x64xbf16>
      %cst_54 = arith.constant dense<0.000000e+00> : vector<4x64xf32>
      %98 = tpu.matmul %95, %97, %cst_54 {dimension_numbers = #tpu.dot_dimension_numbers<[1], [0], [0], [1], [0, 0, 1, 1], [], []>} : vector<4x64xbf16>, vector<64x64xbf16>, vector<4x64xf32> -> vector<4x64xf32>
      %c0_55 = arith.constant 0 : index
      %c0_56 = arith.constant 0 : index
      %c0_57 = arith.constant 0 : index
      %99 = vector.load %arg10[%c0_55, %c0_56, %c0_57] : memref<1x64x128xbf16, #tpu.memory_space<vmem>>, vector<1x64x128xbf16>
      %100 = vector.shape_cast %99 : vector<1x64x128xbf16> to vector<64x128xbf16>
      %cst_58 = arith.constant dense<0.000000e+00> : vector<8x128xf32>
      %101 = tpu.matmul %94, %100, %cst_58 {dimension_numbers = #tpu.dot_dimension_numbers<[1], [0], [0], [1], [0, 0, 1, 1], [], []>} : vector<8x64xbf16>, vector<64x128xbf16>, vector<8x128xf32> -> vector<8x128xf32>
      %102 = arith.truncf %101 : vector<8x128xf32> to vector<8x128xbf16>
      %c0_59 = arith.constant 0 : index
      %c0_60 = arith.constant 0 : index
      %c0_61 = arith.constant 0 : index
      %103 = vector.load %arg10[%c0_59, %c0_60, %c0_61] : memref<1x64x128xbf16, #tpu.memory_space<vmem>>, vector<1x64x128xbf16>
      %104 = vector.shape_cast %103 : vector<1x64x128xbf16> to vector<64x128xbf16>
      %cst_62 = arith.constant dense<0.000000e+00> : vector<4x128xf32>
      %105 = tpu.matmul %95, %104, %cst_62 {dimension_numbers = #tpu.dot_dimension_numbers<[1], [0], [0], [1], [0, 0, 1, 1], [], []>} : vector<4x64xbf16>, vector<64x128xbf16>, vector<4x128xf32> -> vector<4x128xf32>
      %106 = arith.truncf %105 : vector<4x128xf32> to vector<4x128xbf16>
      %cst_63 = arith.constant 2.500000e-01 : f32
      %107 = vector.broadcast %cst_63 : f32 to vector<4x64xf32>
      %108 = arith.mulf %98, %107 : vector<4x64xf32>
      %109 = arith.truncf %108 : vector<4x64xf32> to vector<4x64xbf16>
      %110 = vector.shape_cast %109 : vector<4x64xbf16> to vector<1x4x4x16xbf16>
      %111 = tpu.transpose %110, [0, 2, 1, 3] : vector<1x4x4x16xbf16> -> vector<1x4x4x16xbf16>
      %112 = vector.shape_cast %111 : vector<1x4x4x16xbf16> to vector<4x4x16xbf16>
      %113 = vector.extract_strided_slice %102 {offsets = [0, 0], sizes = [8, 64], strides = [1, 1]} : vector<8x128xbf16> to vector<8x64xbf16>
      %114 = vector.shape_cast %113 : vector<8x64xbf16> to vector<1x8x4x16xbf16>
      %115 = tpu.transpose %114, [0, 2, 1, 3] : vector<1x8x4x16xbf16> -> vector<1x4x8x16xbf16>
      %116 = vector.shape_cast %115 : vector<1x4x8x16xbf16> to vector<4x8x16xbf16>
      %117 = vector.extract_strided_slice %102 {offsets = [0, 64], sizes = [8, 64], strides = [1, 1]} : vector<8x128xbf16> to vector<8x64xbf16>
      %118 = vector.shape_cast %117 : vector<8x64xbf16> to vector<1x8x4x16xbf16>
      %119 = tpu.transpose %118, [0, 2, 1, 3] : vector<1x8x4x16xbf16> -> vector<1x4x8x16xbf16>
      %120 = vector.shape_cast %119 : vector<1x4x8x16xbf16> to vector<4x8x16xbf16>
      %121 = vector.extract_strided_slice %106 {offsets = [0, 0], sizes = [4, 64], strides = [1, 1]} : vector<4x128xbf16> to vector<4x64xbf16>
      %122 = vector.shape_cast %121 : vector<4x64xbf16> to vector<1x4x4x16xbf16>
      %123 = tpu.transpose %122, [0, 2, 1, 3] : vector<1x4x4x16xbf16> -> vector<1x4x4x16xbf16>
      %124 = vector.shape_cast %123 : vector<1x4x4x16xbf16> to vector<4x4x16xbf16>
      %125 = vector.extract_strided_slice %106 {offsets = [0, 64], sizes = [4, 64], strides = [1, 1]} : vector<4x128xbf16> to vector<4x64xbf16>
      %126 = vector.shape_cast %125 : vector<4x64xbf16> to vector<1x4x4x16xbf16>
      %127 = tpu.transpose %126, [0, 2, 1, 3] : vector<1x4x4x16xbf16> -> vector<1x4x4x16xbf16>
      %128 = vector.shape_cast %127 : vector<1x4x4x16xbf16> to vector<4x4x16xbf16>
      "tpu.trace_start"() <{level = 10 : i32, message = "bqd,bkd->bqk"}> : () -> ()
      %cst_64 = arith.constant dense<0.000000e+00> : vector<4x4x8xf32>
      %129 = tpu.matmul %112, %116, %cst_64 {dimension_numbers = #tpu.dot_dimension_numbers<[2], [2], [1], [1], [0, 0, 0, 1, 1, 1], [0], [0]>} : vector<4x4x16xbf16>, vector<4x8x16xbf16>, vector<4x4x8xf32> -> vector<4x4x8xf32>
      %cst_65 = arith.constant dense<0.000000e+00> : vector<4x4x4xf32>
      %130 = tpu.matmul %112, %124, %cst_65 {dimension_numbers = #tpu.dot_dimension_numbers<[2], [2], [1], [1], [0, 0, 0, 1, 1, 1], [0], [0]>} : vector<4x4x16xbf16>, vector<4x4x16xbf16>, vector<4x4x4xf32> -> vector<4x4x4xf32>
      "tpu.trace_stop"() : () -> ()
      %cst_66 = arith.constant dense<0xFF800000> : vector<4x4xf32>
      %131 = vector.multi_reduction <maximumf>, %129, %cst_66 [2] : vector<4x4x8xf32> to vector<4x4xf32>
      %132 = vector.shape_cast %131 : vector<4x4xf32> to vector<4x4x1xf32>
      %cst_67 = arith.constant dense<0xFF800000> : vector<4x4xf32>
      %133 = vector.multi_reduction <maximumf>, %130, %cst_67 [2] : vector<4x4x4xf32> to vector<4x4xf32>
      %134 = vector.shape_cast %133 : vector<4x4xf32> to vector<4x4x1xf32>
      %135 = arith.maximumf %132, %134 : vector<4x4x1xf32>
      %136 = vector.broadcast %135 : vector<4x4x1xf32> to vector<4x4x8xf32>
      %137 = arith.subf %129, %136 : vector<4x4x8xf32>
      %138 = math.exp %137 : vector<4x4x8xf32>
      %139 = vector.broadcast %135 : vector<4x4x1xf32> to vector<4x4x4xf32>
      %140 = arith.subf %130, %139 : vector<4x4x4xf32>
      %141 = math.exp %140 : vector<4x4x4xf32>
      %cst_68 = arith.constant dense<0.000000e+00> : vector<4x4xf32>
      %142 = vector.multi_reduction <add>, %138, %cst_68 [2] : vector<4x4x8xf32> to vector<4x4xf32>
      %143 = vector.shape_cast %142 : vector<4x4xf32> to vector<4x4x1xf32>
      %cst_69 = arith.constant dense<0.000000e+00> : vector<4x4xf32>
      %144 = vector.multi_reduction <add>, %141, %cst_69 [2] : vector<4x4x4xf32> to vector<4x4xf32>
      %145 = vector.shape_cast %144 : vector<4x4xf32> to vector<4x4x1xf32>
      %146 = arith.addf %143, %145 : vector<4x4x1xf32>
      %147 = arith.truncf %138 : vector<4x4x8xf32> to vector<4x4x8xbf16>
      "tpu.trace_start"() <{level = 10 : i32, message = "bqk,bkd->bqd"}> : () -> ()
      %cst_70 = arith.constant dense<0.000000e+00> : vector<4x4x16xf32>
      %148 = tpu.matmul %147, %120, %cst_70 {dimension_numbers = #tpu.dot_dimension_numbers<[2], [1], [1], [2], [0, 0, 0, 1, 1, 2], [0], [0]>} : vector<4x4x8xbf16>, vector<4x8x16xbf16>, vector<4x4x16xf32> -> vector<4x4x16xf32>
      "tpu.trace_stop"() : () -> ()
      %149 = arith.truncf %141 : vector<4x4x4xf32> to vector<4x4x4xbf16>
      "tpu.trace_start"() <{level = 10 : i32, message = "bqk,bkd->bqd"}> : () -> ()
      %cst_71 = arith.constant dense<0.000000e+00> : vector<4x4x16xf32>
      %150 = tpu.matmul %149, %128, %cst_71 {dimension_numbers = #tpu.dot_dimension_numbers<[2], [1], [1], [2], [0, 0, 0, 1, 1, 2], [0], [0]>} : vector<4x4x4xbf16>, vector<4x4x16xbf16>, vector<4x4x16xf32> -> vector<4x4x16xf32>
      "tpu.trace_stop"() : () -> ()
      %151 = arith.addf %148, %150 : vector<4x4x16xf32>
      %152 = tpu.reciprocal %146 {approx = true} : vector<4x4x1xf32> -> vector<4x4x1xf32>
      %153 = vector.broadcast %152 : vector<4x4x1xf32> to vector<4x4x16xf32>
      %154 = arith.mulf %151, %153 : vector<4x4x16xf32>
      %155 = vector.shape_cast %154 : vector<4x4x16xf32> to vector<1x4x4x16xf32>
      %156 = tpu.transpose %155, [0, 2, 1, 3] : vector<1x4x4x16xf32> -> vector<1x4x4x16xf32>
      %157 = vector.shape_cast %156 : vector<1x4x4x16xf32> to vector<4x64xf32>
      %158 = arith.truncf %157 : vector<4x64xf32> to vector<4x64xbf16>
      %c0_72 = arith.constant 0 : index
      %c0_73 = arith.constant 0 : index
      %c0_74 = arith.constant 0 : index
      %159 = vector.load %arg11[%c0_72, %c0_73, %c0_74] : memref<1x64x64xbf16, #tpu.memory_space<vmem>>, vector<1x64x64xbf16>
      %160 = vector.shape_cast %159 : vector<1x64x64xbf16> to vector<64x64xbf16>
      %cst_75 = arith.constant dense<0.000000e+00> : vector<4x64xf32>
      %161 = tpu.matmul %158, %160, %cst_75 {dimension_numbers = #tpu.dot_dimension_numbers<[1], [0], [0], [1], [0, 0, 1, 1], [], []>} : vector<4x64xbf16>, vector<64x64xbf16>, vector<4x64xf32> -> vector<4x64xf32>
      %162 = vector.shape_cast %161 : vector<4x64xf32> to vector<1x4x64xf32>
      %163 = arith.addf %162, %34 : vector<1x4x64xf32>
      %c0_76 = arith.constant 0 : index
      %c0_77 = arith.constant 0 : index
      %c0_78 = arith.constant 0 : index
      %164 = vector.load %arg21[%c0_76, %c0_77, %c0_78] : memref<1x4x64xf32, #tpu.memory_space<vmem>>, vector<1x4x64xf32>
      tpu.vector_store %arg21[%c0_76, %c0_77, %c0_78], %163 {strides = array<i32>} : memref<1x4x64xf32, #tpu.memory_space<vmem>>, vector<1x4x64xf32>,
      %c0_79 = arith.constant 0 : index
      %c0_80 = arith.constant 0 : index
      %c0_81 = arith.constant 0 : index
      %165 = vector.load %arg12[%c0_79, %c0_80, %c0_81] : memref<1x1x64xf32, #tpu.memory_space<vmem>>, vector<1x1x64xf32>
      %166 = vector.shape_cast %165 : vector<1x1x64xf32> to vector<1x64xf32>
      %c0_82 = arith.constant 0 : index
      %c0_83 = arith.constant 0 : index
      %c0_84 = arith.constant 0 : index
      %167 = vector.load %arg13[%c0_82, %c0_83, %c0_84] : memref<1x1x64xf32, #tpu.memory_space<vmem>>, vector<1x1x64xf32>
      %168 = vector.shape_cast %167 : vector<1x1x64xf32> to vector<1x64xf32>
      %cst_85 = arith.constant dense<0.000000e+00> : vector<1x4xf32>
      %169 = vector.multi_reduction <add>, %163, %cst_85 [2] : vector<1x4x64xf32> to vector<1x4xf32>
      %170 = vector.shape_cast %169 : vector<1x4xf32> to vector<1x4x1xf32>
      %cst_86 = arith.constant 6.400000e+01 : f32
      %171 = vector.broadcast %cst_86 : f32 to vector<1x4x1xf32>
      %172 = arith.divf %170, %171 : vector<1x4x1xf32>
      %173 = vector.broadcast %172 : vector<1x4x1xf32> to vector<1x4x64xf32>
      %174 = arith.subf %163, %173 : vector<1x4x64xf32>
      %175 = arith.mulf %174, %174 : vector<1x4x64xf32>
      %cst_87 = arith.constant dense<0.000000e+00> : vector<1x4xf32>
      %176 = vector.multi_reduction <add>, %175, %cst_87 [2] : vector<1x4x64xf32> to vector<1x4xf32>
      %177 = vector.shape_cast %176 : vector<1x4xf32> to vector<1x4x1xf32>
      %cst_88 = arith.constant 6.400000e+01 : f32
      %178 = vector.broadcast %cst_88 : f32 to vector<1x4x1xf32>
      %179 = arith.divf %177, %178 : vector<1x4x1xf32>
      %180 = vector.broadcast %172 : vector<1x4x1xf32> to vector<1x4x64xf32>
      %181 = arith.subf %163, %180 : vector<1x4x64xf32>
      %cst_89 = arith.constant 9.99999974E-6 : f32
      %182 = vector.broadcast %cst_89 : f32 to vector<1x4x1xf32>
      %183 = arith.addf %179, %182 : vector<1x4x1xf32>
      %184 = math.rsqrt %183 : vector<1x4x1xf32>
      %185 = vector.broadcast %184 : vector<1x4x1xf32> to vector<1x4x64xf32>
      %186 = arith.mulf %181, %185 : vector<1x4x64xf32>
      %187 = vector.shape_cast %166 : vector<1x64xf32> to vector<1x1x64xf32>
      %188 = vector.broadcast %187 : vector<1x1x64xf32> to vector<1x4x64xf32>
      %189 = arith.mulf %186, %188 : vector<1x4x64xf32>
      %190 = vector.shape_cast %168 : vector<1x64xf32> to vector<1x1x64xf32>
      %191 = vector.broadcast %190 : vector<1x1x64xf32> to vector<1x4x64xf32>
      %192 = arith.addf %189, %191 : vector<1x4x64xf32>
      %193 = vector.shape_cast %192 : vector<1x4x64xf32> to vector<4x64xf32>
      %194 = arith.truncf %193 : vector<4x64xf32> to vector<4x64xbf16>
      %c0_90 = arith.constant 0 : index
      %c0_91 = arith.constant 0 : index
      %195 = vector.load %arg22[%c0_90, %c0_91] : memref<4x64xbf16, #tpu.memory_space<vmem>>, vector<4x64xbf16>
      tpu.vector_store %arg22[%c0_90, %c0_91], %194 {strides = array<i32>} : memref<4x64xbf16, #tpu.memory_space<vmem>>, vector<4x64xbf16>,
    } else {
    }
    %c0 = arith.constant 0 : index
    %c0_4 = arith.constant 0 : index
    %8 = vector.load %arg22[%c0, %c0_4] : memref<4x64xbf16, #tpu.memory_space<vmem>>, vector<4x64xbf16>
    %c0_5 = arith.constant 0 : index
    %c0_6 = arith.constant 0 : index
    %c0_7 = arith.constant 0 : index
    %9 = vector.load %arg14[%c0_5, %c0_6, %c0_7] : memref<1x64x128xbf16, #tpu.memory_space<vmem>>, vector<1x64x128xbf16>
    %10 = vector.shape_cast %9 : vector<1x64x128xbf16> to vector<64x128xbf16>
    %cst = arith.constant dense<0.000000e+00> : vector<4x128xf32>
    %11 = tpu.matmul %8, %10, %cst {dimension_numbers = #tpu.dot_dimension_numbers<[1], [0], [0], [1], [0, 0, 1, 1], [], []>} : vector<4x64xbf16>, vector<64x128xbf16>, vector<4x128xf32> -> vector<4x128xf32>
    %cst_8 = arith.constant 5.000000e-01 : f32
    %12 = vector.broadcast %cst_8 : f32 to vector<4x128xf32>
    %13 = arith.mulf %12, %11 : vector<4x128xf32>
    %cst_9 = arith.constant 0.707106769 : f32
    %14 = vector.broadcast %cst_9 : f32 to vector<4x128xf32>
    %15 = arith.mulf %11, %14 : vector<4x128xf32>
    %16 = math.erf %15 : vector<4x128xf32>
    %cst_10 = arith.constant 1.000000e+00 : f32
    %17 = vector.broadcast %cst_10 : f32 to vector<4x128xf32>
    %18 = arith.addf %17, %16 : vector<4x128xf32>
    %19 = arith.mulf %13, %18 : vector<4x128xf32>
    %20 = arith.truncf %19 : vector<4x128xf32> to vector<4x128xbf16>
    %c0_11 = arith.constant 0 : index
    %c0_12 = arith.constant 0 : index
    %c0_13 = arith.constant 0 : index
    %21 = vector.load %arg15[%c0_11, %c0_12, %c0_13] : memref<1x128x64xbf16, #tpu.memory_space<vmem>>, vector<1x128x64xbf16>
    %22 = vector.shape_cast %21 : vector<1x128x64xbf16> to vector<128x64xbf16>
    %cst_14 = arith.constant dense<0.000000e+00> : vector<4x64xf32>
    %23 = tpu.matmul %20, %22, %cst_14 {dimension_numbers = #tpu.dot_dimension_numbers<[1], [0], [0], [1], [0, 0, 1, 1], [], []>} : vector<4x128xbf16>, vector<128x64xbf16>, vector<4x64xf32> -> vector<4x64xf32>
    %c0_15 = arith.constant 0 : index
    %c0_16 = arith.constant 0 : index
    %c0_17 = arith.constant 0 : index
    %24 = vector.load %arg21[%c0_15, %c0_16, %c0_17] : memref<1x4x64xf32, #tpu.memory_space<vmem>>, vector<1x4x64xf32>
    %25 = vector.shape_cast %23 : vector<4x64xf32> to vector<1x4x64xf32>
    %26 = arith.addf %24, %25 : vector<1x4x64xf32>
    %c0_18 = arith.constant 0 : index
    %c0_19 = arith.constant 0 : index
    %c0_20 = arith.constant 0 : index
    %27 = vector.load %arg21[%c0_18, %c0_19, %c0_20] : memref<1x4x64xf32, #tpu.memory_space<vmem>>, vector<1x4x64xf32>
    tpu.vector_store %arg21[%c0_18, %c0_19, %c0_20], %26 {strides = array<i32>} : memref<1x4x64xf32, #tpu.memory_space<vmem>>, vector<1x4x64xf32>,
    %c1_i32 = arith.constant 1 : i32
    %28 = arith.cmpi eq, %arg1, %c1_i32 : i32
    %c1_i32_21 = arith.constant 1 : i32
    %29 = arith.cmpi eq, %arg2, %c1_i32_21 : i32
    %30 = arith.andi %28, %29 : i1
    %31 = arith.extui %30 : i1 to i32
    %c0_i32_22 = arith.constant 0 : i32
    %32 = arith.cmpi ne, %31, %c0_i32_22 : i32
    scf.if %32 {
      %c0_23 = arith.constant 0 : index
      %c0_24 = arith.constant 0 : index
      %c0_25 = arith.constant 0 : index
      %33 = vector.load %arg21[%c0_23, %c0_24, %c0_25] : memref<1x4x64xf32, #tpu.memory_space<vmem>>, vector<1x4x64xf32>
      %34 = vector.shape_cast %33 : vector<1x4x64xf32> to vector<4x64xf32>
      %35 = arith.truncf %34 : vector<4x64xf32> to vector<4x64xbf16>
      %c0_26 = arith.constant 0 : index
      %c0_27 = arith.constant 0 : index
      %36 = vector.load %arg16[%c0_26, %c0_27] : memref<64x64xbf16, #tpu.memory_space<vmem>>, vector<64x64xbf16>
      %cst_28 = arith.constant dense<0.000000e+00> : vector<4x64xf32>
      %37 = tpu.matmul %35, %36, %cst_28 {dimension_numbers = #tpu.dot_dimension_numbers<[1], [0], [0], [1], [0, 0, 1, 1], [], []>} : vector<4x64xbf16>, vector<64x64xbf16>, vector<4x64xf32> -> vector<4x64xf32>
      %c0_29 = arith.constant 0 : index
      %c0_30 = arith.constant 0 : index
      %38 = vector.load %arg17[%c0_29, %c0_30] : memref<1x64xf32, #tpu.memory_space<vmem>>, vector<1x64xf32>
      %39 = vector.broadcast %38 : vector<1x64xf32> to vector<4x64xf32>
      %40 = arith.addf %37, %39 : vector<4x64xf32>
      %c0_31 = arith.constant 0 : index
      %c0_32 = arith.constant 0 : index
      %41 = vector.load %arg18[%c0_31, %c0_32] : memref<1x64xf32, #tpu.memory_space<vmem>>, vector<1x64xf32>
      %c0_33 = arith.constant 0 : index
      %c0_34 = arith.constant 0 : index
      %42 = vector.load %arg19[%c0_33, %c0_34] : memref<1x64xf32, #tpu.memory_space<vmem>>, vector<1x64xf32>
      %cst_35 = arith.constant dense<0.000000e+00> : vector<4xf32>
      %43 = vector.multi_reduction <add>, %40, %cst_35 [1] : vector<4x64xf32> to vector<4xf32>
      %44 = vector.shape_cast %43 : vector<4xf32> to vector<4x1xf32>
      %cst_36 = arith.constant 6.400000e+01 : f32
      %45 = vector.broadcast %cst_36 : f32 to vector<4x1xf32>
      %46 = arith.divf %44, %45 : vector<4x1xf32>
      %47 = vector.broadcast %46 : vector<4x1xf32> to vector<4x64xf32>
      %48 = arith.subf %40, %47 : vector<4x64xf32>
      %49 = arith.mulf %48, %48 : vector<4x64xf32>
      %cst_37 = arith.constant dense<0.000000e+00> : vector<4xf32>
      %50 = vector.multi_reduction <add>, %49, %cst_37 [1] : vector<4x64xf32> to vector<4xf32>
      %51 = vector.shape_cast %50 : vector<4xf32> to vector<4x1xf32>
      %cst_38 = arith.constant 6.400000e+01 : f32
      %52 = vector.broadcast %cst_38 : f32 to vector<4x1xf32>
      %53 = arith.divf %51, %52 : vector<4x1xf32>
      %54 = vector.broadcast %46 : vector<4x1xf32> to vector<4x64xf32>
      %55 = arith.subf %40, %54 : vector<4x64xf32>
      %cst_39 = arith.constant 9.99999974E-6 : f32
      %56 = vector.broadcast %cst_39 : f32 to vector<4x1xf32>
      %57 = arith.addf %53, %56 : vector<4x1xf32>
      %58 = math.rsqrt %57 : vector<4x1xf32>
      %59 = vector.broadcast %58 : vector<4x1xf32> to vector<4x64xf32>
      %60 = arith.mulf %55, %59 : vector<4x64xf32>
      %61 = vector.broadcast %41 : vector<1x64xf32> to vector<4x64xf32>
      %62 = arith.mulf %60, %61 : vector<4x64xf32>
      %63 = vector.broadcast %42 : vector<1x64xf32> to vector<4x64xf32>
      %64 = arith.addf %62, %63 : vector<4x64xf32>
      %65 = vector.shape_cast %64 : vector<4x64xf32> to vector<1x4x64xf32>
      %c0_40 = arith.constant 0 : index
      %c0_41 = arith.constant 0 : index
      %c0_42 = arith.constant 0 : index
      %66 = vector.load %arg20[%c0_40, %c0_41, %c0_42] : memref<1x4x64xf32, #tpu.memory_space<vmem>>, vector<1x4x64xf32>
      tpu.vector_store %arg20[%c0_40, %c0_41, %c0_42], %65 {strides = array<i32>} : memref<1x4x64xf32, #tpu.memory_space<vmem>>, vector<1x4x64xf32>,
    } else {
    }
    return
  }
  func.func @transform_0(%arg0: i32, %arg1: i32, %arg2: i32) -> (i32, i32, i32) {
    %c0_i32 = arith.constant 0 : i32
    %c0_i32_0 = arith.constant 0 : i32
    %c0_i32_1 = arith.constant 0 : i32
    return %arg0, %c0_i32, %c0_i32_0 : i32, i32, i32
  }
  func.func @transform_1(%arg0: i32, %arg1: i32, %arg2: i32) -> (i32, i32, i32) {
    %c0_i32 = arith.constant 0 : i32
    %c0_i32_0 = arith.constant 0 : i32
    %c0_i32_1 = arith.constant 0 : i32
    %c0_i32_2 = arith.constant 0 : i32
    return %c0_i32, %c0_i32_0, %c0_i32_1 : i32, i32, i32
  }
  func.func @transform_2(%arg0: i32, %arg1: i32, %arg2: i32) -> (i32, i32, i32) {
    %c0_i32 = arith.constant 0 : i32
    %c0_i32_0 = arith.constant 0 : i32
    %c0_i32_1 = arith.constant 0 : i32
    return %arg1, %c0_i32, %c0_i32_0 : i32, i32, i32
  }
  func.func @transform_3(%arg0: i32, %arg1: i32, %arg2: i32) -> (i32, i32, i32) {
    %c0_i32 = arith.constant 0 : i32
    %c0_i32_0 = arith.constant 0 : i32
    %c0_i32_1 = arith.constant 0 : i32
    return %arg1, %c0_i32, %c0_i32_0 : i32, i32, i32
  }
  func.func @transform_4(%arg0: i32, %arg1: i32, %arg2: i32) -> (i32, i32, i32) {
    %c0_i32 = arith.constant 0 : i32
    %c0_i32_0 = arith.constant 0 : i32
    %c0_i32_1 = arith.constant 0 : i32
    return %arg1, %c0_i32, %c0_i32_0 : i32, i32, i32
  }
  func.func @transform_5(%arg0: i32, %arg1: i32, %arg2: i32) -> (i32, i32, i32) {
    %c0_i32 = arith.constant 0 : i32
    %c0_i32_0 = arith.constant 0 : i32
    %c0_i32_1 = arith.constant 0 : i32
    return %arg1, %c0_i32, %c0_i32_0 : i32, i32, i32
  }
  func.func @transform_6(%arg0: i32, %arg1: i32, %arg2: i32) -> (i32, i32, i32) {
    %c0_i32 = arith.constant 0 : i32
    %c0_i32_0 = arith.constant 0 : i32
    %c0_i32_1 = arith.constant 0 : i32
    return %arg1, %c0_i32, %c0_i32_0 : i32, i32, i32
  }
  func.func @transform_7(%arg0: i32, %arg1: i32, %arg2: i32) -> (i32, i32, i32) {
    %c0_i32 = arith.constant 0 : i32
    %c0_i32_0 = arith.constant 0 : i32
    %c0_i32_1 = arith.constant 0 : i32
    return %arg1, %c0_i32, %c0_i32_0 : i32, i32, i32
  }
  func.func @transform_8(%arg0: i32, %arg1: i32, %arg2: i32) -> (i32, i32, i32) {
    %c0_i32 = arith.constant 0 : i32
    %c0_i32_0 = arith.constant 0 : i32
    %c0_i32_1 = arith.constant 0 : i32
    return %arg1, %c0_i32, %c0_i32_0 : i32, i32, i32
  }
  func.func @transform_9(%arg0: i32, %arg1: i32, %arg2: i32) -> (i32, i32, i32) {
    %c0_i32 = arith.constant 0 : i32
    %c0_i32_0 = arith.constant 0 : i32
    %c0_i32_1 = arith.constant 0 : i32
    return %arg1, %c0_i32, %c0_i32_0 : i32, i32, i32
  }
  func.func @transform_10(%arg0: i32, %arg1: i32, %arg2: i32) -> (i32, i32, i32) {
    %c0_i32 = arith.constant 0 : i32
    %c0_i32_0 = arith.constant 0 : i32
    %c0_i32_1 = arith.constant 0 : i32
    return %arg1, %c0_i32, %c0_i32_0 : i32, i32, i32
  }
  func.func @transform_11(%arg0: i32, %arg1: i32, %arg2: i32) -> (i32, i32, i32) {
    %c0_i32 = arith.constant 0 : i32
    %c0_i32_0 = arith.constant 0 : i32
    return %arg1, %c0_i32, %arg2 : i32, i32, i32
  }
  func.func @transform_12(%arg0: i32, %arg1: i32, %arg2: i32) -> (i32, i32, i32) {
    %c0_i32 = arith.constant 0 : i32
    %c0_i32_0 = arith.constant 0 : i32
    return %arg1, %arg2, %c0_i32 : i32, i32, i32
  }
  func.func @transform_13(%arg0: i32, %arg1: i32, %arg2: i32) -> (i32, i32) {
    %c0_i32 = arith.constant 0 : i32
    %c0_i32_0 = arith.constant 0 : i32
    %c0_i32_1 = arith.constant 0 : i32
    return %c0_i32, %c0_i32_0 : i32, i32
  }
  func.func @transform_14(%arg0: i32, %arg1: i32, %arg2: i32) -> (i32, i32) {
    %c0_i32 = arith.constant 0 : i32
    %c0_i32_0 = arith.constant 0 : i32
    %c0_i32_1 = arith.constant 0 : i32
    return %c0_i32, %c0_i32_0 : i32, i32
  }
  func.func @transform_15(%arg0: i32, %arg1: i32, %arg2: i32) -> (i32, i32) {
    %c0_i32 = arith.constant 0 : i32
    %c0_i32_0 = arith.constant 0 : i32
    %c0_i32_1 = arith.constant 0 : i32
    return %c0_i32, %c0_i32_0 : i32, i32
  }
  func.func @transform_16(%arg0: i32, %arg1: i32, %arg2: i32) -> (i32, i32) {
    %c0_i32 = arith.constant 0 : i32
    %c0_i32_0 = arith.constant 0 : i32
    %c0_i32_1 = arith.constant 0 : i32
    return %c0_i32, %c0_i32_0 : i32, i32
  }
  func.func @transform_17(%arg0: i32, %arg1: i32, %arg2: i32) -> (i32, i32, i32) {
    %c0_i32 = arith.constant 0 : i32
    %c0_i32_0 = arith.constant 0 : i32
    %c0_i32_1 = arith.constant 0 : i32
    return %arg0, %c0_i32, %c0_i32_0 : i32, i32, i32
  }
}

</mosaic_0001>

<llo_original>
// kernel: tpu_custom_call.1
$region0: #{tpu_custom_call.1}
  #allocation0 [shape = 'u32[]', space=smem, size = 0x4, offset = 0x4, fixed_abs, tag = 'smem constant byte address 0x4 - core index']
  #allocation1 [shape = 'u32[144,128]{1,0:T(1,128)}', space=vmem, size = 0x12000, scoped, tag = 'internal scratch']
  #allocation2 [shape = 'f32[1,4,64]{2,1,0:T(4,128)}', space=vmem, size = 0x800, scoped, tag = 'scratch operand']
  #allocation3 [shape = 'bf16[4,64]{1,0:T(4,128)(2,1)}', space=vmem, size = 0x400, scoped, tag = 'scratch operand']
  %s0 = inlined_call_operand.vmem [shape: bf16[2,8,64], index: 0, kind: input, shape index: {}]
  %s1 = inlined_call_operand.vmem [shape: f32[1,4,64], index: 1, kind: input, shape index: {}]
  %s2 = inlined_call_operand.vmem [shape: f32[2,1,64], index: 2, kind: input, shape index: {}]
  %s3 = inlined_call_operand.vmem [shape: f32[2,1,64], index: 3, kind: input, shape index: {}]
  %s4 = inlined_call_operand.vmem [shape: f32[2,1,64], index: 4, kind: input, shape index: {}]
  %s5 = inlined_call_operand.vmem [shape: f32[2,1,64], index: 5, kind: input, shape index: {}]
  %s6 = inlined_call_operand.vmem [shape: bf16[2,64,64], index: 6, kind: input, shape index: {}]
  %s7 = inlined_call_operand.vmem [shape: bf16[2,64,128], index: 7, kind: input, shape index: {}]
  %s8 = inlined_call_operand.vmem [shape: bf16[2,64,64], index: 8, kind: input, shape index: {}]
  %s9 = inlined_call_operand.vmem [shape: f32[2,1,64], index: 9, kind: input, shape index: {}]
  %s10 = inlined_call_operand.vmem [shape: f32[2,1,64], index: 10, kind: input, shape index: {}]
  %s11 = inlined_call_operand.vmem [shape: bf16[2,64,256], index: 11, kind: input, shape index: {}]
  %s12 = inlined_call_operand.vmem [shape: bf16[2,256,64], index: 12, kind: input, shape index: {}]
  %s13 = inlined_call_operand.vmem [shape: bf16[64,64], index: 13, kind: input, shape index: {}]
  %s14 = inlined_call_operand.vmem [shape: f32[1,64], index: 14, kind: input, shape index: {}]
  %s15 = inlined_call_operand.vmem [shape: f32[1,64], index: 15, kind: input, shape index: {}]
  %s16 = inlined_call_operand.vmem [shape: f32[1,64], index: 16, kind: input, shape index: {}]
  %s17 = inlined_call_operand.hbm [shape: f32[2,4,64], index: 17, kind: output, shape index: {}]
  %s18 = sld [smem:[#allocation0]]
  $region154: #{tpu_custom_call.1} parent=0
    _
  %s20 = ssub.s32 1, %s18
  %s21 = scalar_select 0, %s20, %s18
  $region1: #{tpu_custom_call.1} parent=0
    #allocation4 [shape = 'u8[32768]{0}', space=vmem, size = 0x8000, scoped, tag = 'input window, operand 11']
    #allocation5 [shape = 'u8[4096]{0}', space=vmem, size = 0x1000, scoped, tag = 'output window, operand 0']
    #allocation6 [shape = 's32[2]{0}', space=sflag, size = 0x8, scoped, tag = 'scoped memory for tpu_custom_call.1']
    %22 = vsyncpa [#allocation6], 0
    %s23 = scalar_lea.sflag [#allocation6], 1
    %24 = vsyncpa %s23, 0
    loop: start=0, step=1, limit=10
    $region2: #{tpu_custom_call.1} parent=1 // loop_pre_header
      _
    $region3: #{tpu_custom_call.1} parent=1 // loop_header
      %s26 = sphi 0, %s30
      %p27 = scmp.ge.s32.totalorder %s26, 10
      %s33 = sphi 0, %s52
      %s34 = sphi 0, %s48
      %s35 = sphi 0, %s44
      %s36 = sphi 0, %s33
      %s37 = sphi 0, %s34
      %s38 = sphi 0, %s35
      %s39 = sphi 0, %s36
      %s40 = sphi 0, %s37
      %s41 = sphi 0, %s38
      %s55 = sphi 0, %s57
      %s58 = sphi 0, %s55
      %s59 = sphi 0, %s58
      %s75 = sphi 0, %s59
      %s79 = sphi 0, %s79
      %s81 = sphi 0, %s79
      %s82 = sphi 0, %s81
      %s96 = sphi 0, %s82
      %s102 = sphi 0, %s104
      %s105 = sphi 0, %s102
      %s106 = sphi 0, %s105
      %s122 = sphi 0, %s106
      %s128 = sphi 0, %s130
      %s131 = sphi 0, %s128
      %s132 = sphi 0, %s131
      %s148 = sphi 0, %s132
      %s154 = sphi 0, %s156
      %s157 = sphi 0, %s154
      %s158 = sphi 0, %s157
      %s174 = sphi 0, %s158
      %s180 = sphi 0, %s182
      %s183 = sphi 0, %s180
      %s184 = sphi 0, %s183
      %s200 = sphi 0, %s184
      %s206 = sphi 0, %s208
      %s209 = sphi 0, %s206
      %s210 = sphi 0, %s209
      %s226 = sphi 0, %s210
      %s232 = sphi 0, %s234
      %s235 = sphi 0, %s232
      %s236 = sphi 0, %s235
      %s252 = sphi 0, %s236
      %s258 = sphi 0, %s260
      %s261 = sphi 0, %s258
      %s262 = sphi 0, %s261
      %s278 = sphi 0, %s262
      %s284 = sphi 0, %s286
      %s287 = sphi 0, %s284
      %s288 = sphi 0, %s287
      %s304 = sphi 0, %s288
      %s310 = sphi 0, %s312
      %s313 = sphi 0, %s310
      %s314 = sphi 0, %s313
      %s330 = sphi 0, %s314
      %s338 = sphi 0, %s340
      %s341 = sphi 0, %s338
      %s342 = sphi 0, %s341
      %s358 = sphi 0, %s342
      %s366 = sphi 0, %s368
      %s369 = sphi 0, %s366
      %s370 = sphi 0, %s369
      %s386 = sphi 0, %s370
      %s390 = sphi 0, %s390
      %s392 = sphi 0, %s390
      %s393 = sphi 0, %s392
      %s407 = sphi 0, %s393
      %s411 = sphi 0, %s411
      %s413 = sphi 0, %s411
      %s414 = sphi 0, %s413
      %s428 = sphi 0, %s414
      %s432 = sphi 0, %s432
      %s434 = sphi 0, %s432
      %s435 = sphi 0, %s434
      %s449 = sphi 0, %s435
      %s453 = sphi 0, %s453
      %s455 = sphi 0, %s453
      %s456 = sphi 0, %s455
      %s470 = sphi 0, %s456
      %s476 = sphi 0, %s478
      %s479 = sphi 0, %s476
      %s480 = sphi 0, %s479
      %s496 = sphi 0, %s480
    $region4: #{tpu_custom_call.1} parent=1 // loop_header_branch
      %29 = sbr.rel (%p27) target = $region8
    $region5: #{tpu_custom_call.1} parent=1 // loop_body
      %s31 = ssub.s32 %s26, 1
      %s32 = ssub.s32 %s26, 2
      %s42 = sadd.s32 1, %s35
      %p43 = scmp.ge.s32.totalorder %s42, 2
      %s44 = scalar_select %p43, 0, %s42
      %s45 = sadd.s32 1, %s34
      %s46 = scalar_select %p43, %s45, %s34
      %p47 = scmp.ge.s32.totalorder %s46, 2
      %s48 = scalar_select %p47, 0, %s46
      %s49 = sadd.s32 1, %s33
      %s50 = scalar_select %p47, %s49, %s33
      %p51 = scmp.ge.s32.totalorder %s50, 2
      %s52 = scalar_select %p51, 0, %s50
      %s53 = ssub.s32 %s33, %s52
      %p54 = scmp.eq.s32.totalorder %s53, 0
      %s56 = sadd.s32 %s55, 1
      %s57 = scalar_select %p54, %s55, %s56
      %p60 = pneg %p54
      %p61 = scmp.eq.s32.totalorder %s26, 7
      %p62 = por %p60, %p61
      %p63 = scmp.ne.s32.totalorder %s55, %s58
      %p64 = scmp.eq.s32.totalorder %s26, 0
      %p65 = por %p63, %p64
      %p66 = scmp.ne.s32.totalorder %s55, %s58
      %p67 = scmp.eq.s32.totalorder %s31, 7
      %p68 = por %p66, %p67
      %p69 = scmp.ne.s32.totalorder %s58, %s59
      %p70 = scmp.eq.s32.totalorder %s31, 0
      %p71 = por %p69, %p70
      %p72 = scmp.ne.s32.totalorder %s58, %s59
      %p73 = scmp.eq.s32.totalorder %s32, 7
      %p74 = por %p72, %p73
      %p76 = scmp.ne.s32.totalorder %s59, %s75
      %p77 = scmp.eq.s32.totalorder %s32, 0
      %p78 = por %p76, %p77
      %s80 = sadd.s32 %s79, 1
      %p83 = scmp.eq.s32.totalorder %s26, 7
      %p84 = scmp.ne.s32.totalorder %s79, %s81
      %p85 = scmp.eq.s32.totalorder %s26, 0
      %p86 = por %p84, %p85
      %p87 = scmp.ne.s32.totalorder %s79, %s81
      %p88 = scmp.eq.s32.totalorder %s31, 7
      %p89 = por %p87, %p88
      %p90 = scmp.ne.s32.totalorder %s81, %s82
      %p91 = scmp.eq.s32.totalorder %s31, 0
      %p92 = por %p90, %p91
      %p93 = scmp.ne.s32.totalorder %s81, %s82
      %p94 = scmp.eq.s32.totalorder %s32, 7
      %p95 = por %p93, %p94
      %p97 = scmp.ne.s32.totalorder %s82, %s96
      %p98 = scmp.eq.s32.totalorder %s32, 0
      %p99 = por %p97, %p98
      %s100 = ssub.s32 %s34, %s48
      %p101 = scmp.eq.s32.totalorder %s100, 0
      %s103 = sadd.s32 %s102, 1
      %s104 = scalar_select %p101, %s102, %s103
      %p107 = pneg %p101
      %p108 = scmp.eq.s32.totalorder %s26, 7
      %p109 = por %p107, %p108
      %p110 = scmp.ne.s32.totalorder %s102, %s105
      %p111 = scmp.eq.s32.totalorder %s26, 0
      %p112 = por %p110, %p111
      %p113 = scmp.ne.s32.totalorder %s102, %s105
      %p114 = scmp.eq.s32.totalorder %s31, 7
      %p115 = por %p113, %p114
      %p116 = scmp.ne.s32.totalorder %s105, %s106
      %p117 = scmp.eq.s32.totalorder %s31, 0
      %p118 = por %p116, %p117
      %p119 = scmp.ne.s32.totalorder %s105, %s106
      %p120 = scmp.eq.s32.totalorder %s32, 7
      %p121 = por %p119, %p120
      %p123 = scmp.ne.s32.totalorder %s106, %s122
      %p124 = scmp.eq.s32.totalorder %s32, 0
      %p125 = por %p123, %p124
      %s126 = ssub.s32 %s34, %s48
      %p127 = scmp.eq.s32.totalorder %s126, 0
      %s129 = sadd.s32 %s128, 1
      %s130 = scalar_select %p127, %s128, %s129
      %p133 = pneg %p127
      %p134 = scmp.eq.s32.totalorder %s26, 7
      %p135 = por %p133, %p134
      %p136 = scmp.ne.s32.totalorder %s128, %s131
      %p137 = scmp.eq.s32.totalorder %s26, 0
      %p138 = por %p136, %p137
      %p139 = scmp.ne.s32.totalorder %s128, %s131
      %p140 = scmp.eq.s32.totalorder %s31, 7
      %p141 = por %p139, %p140
      %p142 = scmp.ne.s32.totalorder %s131, %s132
      %p143 = scmp.eq.s32.totalorder %s31, 0
      %p144 = por %p142, %p143
      %p145 = scmp.ne.s32.totalorder %s131, %s132
      %p146 = scmp.eq.s32.totalorder %s32, 7
      %p147 = por %p145, %p146
      %p149 = scmp.ne.s32.totalorder %s132, %s148
      %p150 = scmp.eq.s32.totalorder %s32, 0
      %p151 = por %p149, %p150
      %s152 = ssub.s32 %s34, %s48
      %p153 = scmp.eq.s32.totalorder %s152, 0
      %s155 = sadd.s32 %s154, 1
      %s156 = scalar_select %p153, %s154, %s155
      %p159 = pneg %p153
      %p160 = scmp.eq.s32.totalorder %s26, 7
      %p161 = por %p159, %p160
      %p162 = scmp.ne.s32.totalorder %s154, %s157
      %p163 = scmp.eq.s32.totalorder %s26, 0
      %p164 = por %p162, %p163
      %p165 = scmp.ne.s32.totalorder %s154, %s157
      %p166 = scmp.eq.s32.totalorder %s31, 7
      %p167 = por %p165, %p166
      %p168 = scmp.ne.s32.totalorder %s157, %s158
      %p169 = scmp.eq.s32.totalorder %s31, 0
      %p170 = por %p168, %p169
      %p171 = scmp.ne.s32.totalorder %s157, %s158
      %p172 = scmp.eq.s32.totalorder %s32, 7
      %p173 = por %p171, %p172
      %p175 = scmp.ne.s32.totalorder %s158, %s174
      %p176 = scmp.eq.s32.totalorder %s32, 0
      %p177 = por %p175, %p176
      %s178 = ssub.s32 %s34, %s48
      %p179 = scmp.eq.s32.totalorder %s178, 0
      %s181 = sadd.s32 %s180, 1
      %s182 = scalar_select %p179, %s180, %s181
      %p185 = pneg %p179
      %p186 = scmp.eq.s32.totalorder %s26, 7
      %p187 = por %p185, %p186
      %p188 = scmp.ne.s32.totalorder %s180, %s183
      %p189 = scmp.eq.s32.totalorder %s26, 0
      %p190 = por %p188, %p189
      %p191 = scmp.ne.s32.totalorder %s180, %s183
      %p192 = scmp.eq.s32.totalorder %s31, 7
      %p193 = por %p191, %p192
      %p194 = scmp.ne.s32.totalorder %s183, %s184
      %p195 = scmp.eq.s32.totalorder %s31, 0
      %p196 = por %p194, %p195
      %p197 = scmp.ne.s32.totalorder %s183, %s184
      %p198 = scmp.eq.s32.totalorder %s32, 7
      %p199 = por %p197, %p198
      %p201 = scmp.ne.s32.totalorder %s184, %s200
      %p202 = scmp.eq.s32.totalorder %s32, 0
      %p203 = por %p201, %p202
      %s204 = ssub.s32 %s34, %s48
      %p205 = scmp.eq.s32.totalorder %s204, 0
      %s207 = sadd.s32 %s206, 1
      %s208 = scalar_select %p205, %s206, %s207
      %p211 = pneg %p205
      %p212 = scmp.eq.s32.totalorder %s26, 7
      %p213 = por %p211, %p212
      %p214 = scmp.ne.s32.totalorder %s206, %s209
      %p215 = scmp.eq.s32.totalorder %s26, 0
      %p216 = por %p214, %p215
      %p217 = scmp.ne.s32.totalorder %s206, %s209
      %p218 = scmp.eq.s32.totalorder %s31, 7
      %p219 = por %p217, %p218
      %p220 = scmp.ne.s32.totalorder %s209, %s210
      %p221 = scmp.eq.s32.totalorder %s31, 0
      %p222 = por %p220, %p221
      %p223 = scmp.ne.s32.totalorder %s209, %s210
      %p224 = scmp.eq.s32.totalorder %s32, 7
      %p225 = por %p223, %p224
      %p227 = scmp.ne.s32.totalorder %s210, %s226
      %p228 = scmp.eq.s32.totalorder %s32, 0
      %p229 = por %p227, %p228
      %s230 = ssub.s32 %s34, %s48
      %p231 = scmp.eq.s32.totalorder %s230, 0
      %s233 = sadd.s32 %s232, 1
      %s234 = scalar_select %p231, %s232, %s233
      %p237 = pneg %p231
      %p238 = scmp.eq.s32.totalorder %s26, 7
      %p239 = por %p237, %p238
      %p240 = scmp.ne.s32.totalorder %s232, %s235
      %p241 = scmp.eq.s32.totalorder %s26, 0
      %p242 = por %p240, %p241
      %p243 = scmp.ne.s32.totalorder %s232, %s235
      %p244 = scmp.eq.s32.totalorder %s31, 7
      %p245 = por %p243, %p244
      %p246 = scmp.ne.s32.totalorder %s235, %s236
      %p247 = scmp.eq.s32.totalorder %s31, 0
      %p248 = por %p246, %p247
      %p249 = scmp.ne.s32.totalorder %s235, %s236
      %p250 = scmp.eq.s32.totalorder %s32, 7
      %p251 = por %p249, %p250
      %p253 = scmp.ne.s32.totalorder %s236, %s252
      %p254 = scmp.eq.s32.totalorder %s32, 0
      %p255 = por %p253, %p254
      %s256 = ssub.s32 %s34, %s48
      %p257 = scmp.eq.s32.totalorder %s256, 0
      %s259 = sadd.s32 %s258, 1
      %s260 = scalar_select %p257, %s258, %s259
      %p263 = pneg %p257
      %p264 = scmp.eq.s32.totalorder %s26, 7
      %p265 = por %p263, %p264
      %p266 = scmp.ne.s32.totalorder %s258, %s261
      %p267 = scmp.eq.s32.totalorder %s26, 0
      %p268 = por %p266, %p267
      %p269 = scmp.ne.s32.totalorder %s258, %s261
      %p270 = scmp.eq.s32.totalorder %s31, 7
      %p271 = por %p269, %p270
      %p272 = scmp.ne.s32.totalorder %s261, %s262
      %p273 = scmp.eq.s32.totalorder %s31, 0
      %p274 = por %p272, %p273
      %p275 = scmp.ne.s32.totalorder %s261, %s262
      %p276 = scmp.eq.s32.totalorder %s32, 7
      %p277 = por %p275, %p276
      %p279 = scmp.ne.s32.totalorder %s262, %s278
      %p280 = scmp.eq.s32.totalorder %s32, 0
      %p281 = por %p279, %p280
      %s282 = ssub.s32 %s34, %s48
      %p283 = scmp.eq.s32.totalorder %s282, 0
      %s285 = sadd.s32 %s284, 1
      %s286 = scalar_select %p283, %s284, %s285
      %p289 = pneg %p283
      %p290 = scmp.eq.s32.totalorder %s26, 7
      %p291 = por %p289, %p290
      %p292 = scmp.ne.s32.totalorder %s284, %s287
      %p293 = scmp.eq.s32.totalorder %s26, 0
      %p294 = por %p292, %p293
      %p295 = scmp.ne.s32.totalorder %s284, %s287
      %p296 = scmp.eq.s32.totalorder %s31, 7
      %p297 = por %p295, %p296
      %p298 = scmp.ne.s32.totalorder %s287, %s288
      %p299 = scmp.eq.s32.totalorder %s31, 0
      %p300 = por %p298, %p299
      %p301 = scmp.ne.s32.totalorder %s287, %s288
      %p302 = scmp.eq.s32.totalorder %s32, 7
      %p303 = por %p301, %p302
      %p305 = scmp.ne.s32.totalorder %s288, %s304
      %p306 = scmp.eq.s32.totalorder %s32, 0
      %p307 = por %p305, %p306
      %s308 = ssub.s32 %s34, %s48
      %p309 = scmp.eq.s32.totalorder %s308, 0
      %s311 = sadd.s32 %s310, 1
      %s312 = scalar_select %p309, %s310, %s311
      %p315 = pneg %p309
      %p316 = scmp.eq.s32.totalorder %s26, 7
      %p317 = por %p315, %p316
      %p318 = scmp.ne.s32.totalorder %s310, %s313
      %p319 = scmp.eq.s32.totalorder %s26, 0
      %p320 = por %p318, %p319
      %p321 = scmp.ne.s32.totalorder %s310, %s313
      %p322 = scmp.eq.s32.totalorder %s31, 7
      %p323 = por %p321, %p322
      %p324 = scmp.ne.s32.totalorder %s313, %s314
      %p325 = scmp.eq.s32.totalorder %s31, 0
      %p326 = por %p324, %p325
      %p327 = scmp.ne.s32.totalorder %s313, %s314
      %p328 = scmp.eq.s32.totalorder %s32, 7
      %p329 = por %p327, %p328
      %p331 = scmp.ne.s32.totalorder %s314, %s330
      %p332 = scmp.eq.s32.totalorder %s32, 0
      %p333 = por %p331, %p332
      %s334 = ssub.s32 %s34, %s48
      %s335 = ssub.s32 %s35, %s44
      %s336 = sor.u32 %s334, %s335
      %p337 = scmp.eq.s32.totalorder %s336, 0
      %s339 = sadd.s32 %s338, 1
      %s340 = scalar_select %p337, %s338, %s339
      %p343 = pneg %p337
      %p344 = scmp.eq.s32.totalorder %s26, 7
      %p345 = por %p343, %p344
      %p346 = scmp.ne.s32.totalorder %s338, %s341
      %p347 = scmp.eq.s32.totalorder %s26, 0
      %p348 = por %p346, %p347
      %p349 = scmp.ne.s32.totalorder %s338, %s341
      %p350 = scmp.eq.s32.totalorder %s31, 7
      %p351 = por %p349, %p350
      %p352 = scmp.ne.s32.totalorder %s341, %s342
      %p353 = scmp.eq.s32.totalorder %s31, 0
      %p354 = por %p352, %p353
      %p355 = scmp.ne.s32.totalorder %s341, %s342
      %p356 = scmp.eq.s32.totalorder %s32, 7
      %p357 = por %p355, %p356
      %p359 = scmp.ne.s32.totalorder %s342, %s358
      %p360 = scmp.eq.s32.totalorder %s32, 0
      %p361 = por %p359, %p360
      %s362 = ssub.s32 %s34, %s48
      %s363 = ssub.s32 %s35, %s44
      %s364 = sor.u32 %s362, %s363
      %p365 = scmp.eq.s32.totalorder %s364, 0
      %s367 = sadd.s32 %s366, 1
      %s368 = scalar_select %p365, %s366, %s367
      %p371 = pneg %p365
      %p372 = scmp.eq.s32.totalorder %s26, 7
      %p373 = por %p371, %p372
      %p374 = scmp.ne.s32.totalorder %s366, %s369
      %p375 = scmp.eq.s32.totalorder %s26, 0
      %p376 = por %p374, %p375
      %p377 = scmp.ne.s32.totalorder %s366, %s369
      %p378 = scmp.eq.s32.totalorder %s31, 7
      %p379 = por %p377, %p378
      %p380 = scmp.ne.s32.totalorder %s369, %s370
      %p381 = scmp.eq.s32.totalorder %s31, 0
      %p382 = por %p380, %p381
      %p383 = scmp.ne.s32.totalorder %s369, %s370
      %p384 = scmp.eq.s32.totalorder %s32, 7
      %p385 = por %p383, %p384
      %p387 = scmp.ne.s32.totalorder %s370, %s386
      %p388 = scmp.eq.s32.totalorder %s32, 0
      %p389 = por %p387, %p388
      %s391 = sadd.s32 %s390, 1
      %p394 = scmp.eq.s32.totalorder %s26, 7
      %p395 = scmp.ne.s32.totalorder %s390, %s392
      %p396 = scmp.eq.s32.totalorder %s26, 0
      %p397 = por %p395, %p396
      %p398 = scmp.ne.s32.totalorder %s390, %s392
      %p399 = scmp.eq.s32.totalorder %s31, 7
      %p400 = por %p398, %p399
      %p401 = scmp.ne.s32.totalorder %s392, %s393
      %p402 = scmp.eq.s32.totalorder %s31, 0
      %p403 = por %p401, %p402
      %p404 = scmp.ne.s32.totalorder %s392, %s393
      %p405 = scmp.eq.s32.totalorder %s32, 7
      %p406 = por %p404, %p405
      %p408 = scmp.ne.s32.totalorder %s393, %s407
      %p409 = scmp.eq.s32.totalorder %s32, 0
      %p410 = por %p408, %p409
      %s412 = sadd.s32 %s411, 1
      %p415 = scmp.eq.s32.totalorder %s26, 7
      %p416 = scmp.ne.s32.totalorder %s411, %s413
      %p417 = scmp.eq.s32.totalorder %s26, 0
      %p418 = por %p416, %p417
      %p419 = scmp.ne.s32.totalorder %s411, %s413
      %p420 = scmp.eq.s32.totalorder %s31, 7
      %p421 = por %p419, %p420
      %p422 = scmp.ne.s32.totalorder %s413, %s414
      %p423 = scmp.eq.s32.totalorder %s31, 0
      %p424 = por %p422, %p423
      %p425 = scmp.ne.s32.totalorder %s413, %s414
      %p426 = scmp.eq.s32.totalorder %s32, 7
      %p427 = por %p425, %p426
      %p429 = scmp.ne.s32.totalorder %s414, %s428
      %p430 = scmp.eq.s32.totalorder %s32, 0
      %p431 = por %p429, %p430
      %s433 = sadd.s32 %s432, 1
      %p436 = scmp.eq.s32.totalorder %s26, 7
      %p437 = scmp.ne.s32.totalorder %s432, %s434
      %p438 = scmp.eq.s32.totalorder %s26, 0
      %p439 = por %p437, %p438
      %p440 = scmp.ne.s32.totalorder %s432, %s434
      %p441 = scmp.eq.s32.totalorder %s31, 7
      %p442 = por %p440, %p441
      %p443 = scmp.ne.s32.totalorder %s434, %s435
      %p444 = scmp.eq.s32.totalorder %s31, 0
      %p445 = por %p443, %p444
      %p446 = scmp.ne.s32.totalorder %s434, %s435
      %p447 = scmp.eq.s32.totalorder %s32, 7
      %p448 = por %p446, %p447
      %p450 = scmp.ne.s32.totalorder %s435, %s449
      %p451 = scmp.eq.s32.totalorder %s32, 0
      %p452 = por %p450, %p451
      %s454 = sadd.s32 %s453, 1
      %p457 = scmp.eq.s32.totalorder %s26, 7
      %p458 = scmp.ne.s32.totalorder %s453, %s455
      %p459 = scmp.eq.s32.totalorder %s26, 0
      %p460 = por %p458, %p459
      %p461 = scmp.ne.s32.totalorder %s453, %s455
      %p462 = scmp.eq.s32.totalorder %s31, 7
      %p463 = por %p461, %p462
      %p464 = scmp.ne.s32.totalorder %s455, %s456
      %p465 = scmp.eq.s32.totalorder %s31, 0
      %p466 = por %p464, %p465
      %p467 = scmp.ne.s32.totalorder %s455, %s456
      %p468 = scmp.eq.s32.totalorder %s32, 7
      %p469 = por %p467, %p468
      %p471 = scmp.ne.s32.totalorder %s456, %s470
      %p472 = scmp.eq.s32.totalorder %s32, 0
      %p473 = por %p471, %p472
      %s474 = ssub.s32 %s33, %s52
      %p475 = scmp.eq.s32.totalorder %s474, 0
      %s477 = sadd.s32 %s476, 1
      %s478 = scalar_select %p475, %s476, %s477
      %p481 = pneg %p475
      %p482 = scmp.eq.s32.totalorder %s26, 7
      %p483 = por %p481, %p482
      %p484 = scmp.ne.s32.totalorder %s476, %s479
      %p485 = scmp.eq.s32.totalorder %s26, 0
      %p486 = por %p484, %p485
      %p487 = scmp.ne.s32.totalorder %s476, %s479
      %p488 = scmp.eq.s32.totalorder %s31, 7
      %p489 = por %p487, %p488
      %p490 = scmp.ne.s32.totalorder %s479, %s480
      %p491 = scmp.eq.s32.totalorder %s31, 0
      %p492 = por %p490, %p491
      %p493 = scmp.ne.s32.totalorder %s479, %s480
      %p494 = scmp.eq.s32.totalorder %s32, 7
      %p495 = por %p493, %p494
      %p497 = scmp.ne.s32.totalorder %s480, %s496
      %p498 = scmp.eq.s32.totalorder %s32, 0
      %p499 = por %p497, %p498
      %p500 = scmp.le.s32.totalorder 1, %s26
      %p501 = scmp.lt.s32.totalorder %s26, 9
      %p502 = pnand %p500, %p501
      %p503 = pneg %p502
      // Predicated region
      $region9: #{tpu_custom_call.1} parent=5 // pred_check
        _
      $region10: #{tpu_custom_call.1} parent=5 // pred_check_branch
        %505 = sbr.rel (%p502) target = $region12
      $region11: #{tpu_custom_call.1} parent=5 // pred_region
        %s506 = ssub.s32 %s26, 1
        // Predicated region
        $region13: #{tpu_custom_call.1} parent=11 // pred_check
          %p507 = pneg %p92
        $region14: #{tpu_custom_call.1} parent=11 // pred_check_branch
          %509 = sbr.rel (%p507) target = $region16
        $region15: #{tpu_custom_call.1} parent=11 // pred_region
          _
        $region16: #{tpu_custom_call.1} parent=11 // pred_fallthru
          _
        // Predicated region
        $region17: #{tpu_custom_call.1} parent=11 // pred_check
          %p510 = pneg %p403
        $region18: #{tpu_custom_call.1} parent=11 // pred_check_branch
          %512 = sbr.rel (%p510) target = $region20
        $region19: #{tpu_custom_call.1} parent=11 // pred_region
          _
        $region20: #{tpu_custom_call.1} parent=11 // pred_fallthru
          _
        // Predicated region
        $region21: #{tpu_custom_call.1} parent=11 // pred_check
          %p513 = pneg %p424
        $region22: #{tpu_custom_call.1} parent=11 // pred_check_branch
          %515 = sbr.rel (%p513) target = $region24
        $region23: #{tpu_custom_call.1} parent=11 // pred_region
          _
        $region24: #{tpu_custom_call.1} parent=11 // pred_fallthru
          _
        // Predicated region
        $region25: #{tpu_custom_call.1} parent=11 // pred_check
          %p516 = pneg %p445
        $region26: #{tpu_custom_call.1} parent=11 // pred_check_branch
          %518 = sbr.rel (%p516) target = $region28
        $region27: #{tpu_custom_call.1} parent=11 // pred_region
          _
        $region28: #{tpu_custom_call.1} parent=11 // pred_fallthru
          _
        // Predicated region
        $region29: #{tpu_custom_call.1} parent=11 // pred_check
          %p519 = pneg %p466
        $region30: #{tpu_custom_call.1} parent=11 // pred_check_branch
          %521 = sbr.rel (%p519) target = $region32
        $region31: #{tpu_custom_call.1} parent=11 // pred_region
          _
        $region32: #{tpu_custom_call.1} parent=11 // pred_fallthru
          _
      $region12: #{tpu_custom_call.1} parent=5 // pred_fallthru
        _
      %p522 = scmp.lt.s32.totalorder %s26, 8
      // Predicated region
      $region33: #{tpu_custom_call.1} parent=5 // pred_check
        %p523 = pneg %p522
      $region34: #{tpu_custom_call.1} parent=5 // pred_check_branch
        %525 = sbr.rel (%p523) target = $region36
      $region35: #{tpu_custom_call.1} parent=5 // pred_region
        // Predicated region
        $region37: #{tpu_custom_call.1} parent=35 // pred_check
          %p526 = pneg %p65
        $region38: #{tpu_custom_call.1} parent=35 // pred_check_branch
          %528 = sbr.rel (%p526) target = $region40
        $region39: #{tpu_custom_call.1} parent=35 // pred_region
          %p529 = scmp.lt.s32.totalorder %s33, 1
          %s530 = scalar_select %p529, %s33, 1
          %s531 = smul.addr %s530, 4
          %s532 = scalar_lea.vmem %s0, %s531
        $region40: #{tpu_custom_call.1} parent=35 // pred_fallthru
          _
        // Predicated region
        $region41: #{tpu_custom_call.1} parent=35 // pred_check
          %p533 = pneg %p112
        $region42: #{tpu_custom_call.1} parent=35 // pred_check_branch
          %535 = sbr.rel (%p533) target = $region44
        $region43: #{tpu_custom_call.1} parent=35 // pred_region
          %p536 = scmp.lt.s32.totalorder %s34, 1
          %s537 = scalar_select %p536, %s34, 1
          %s538 = scalar_lea.vmem %s2, %s537
        $region44: #{tpu_custom_call.1} parent=35 // pred_fallthru
          _
        // Predicated region
        $region45: #{tpu_custom_call.1} parent=35 // pred_check
          %p539 = pneg %p138
        $region46: #{tpu_custom_call.1} parent=35 // pred_check_branch
          %541 = sbr.rel (%p539) target = $region48
        $region47: #{tpu_custom_call.1} parent=35 // pred_region
          %p542 = scmp.lt.s32.totalorder %s34, 1
          %s543 = scalar_select %p542, %s34, 1
          %s544 = scalar_lea.vmem %s3, %s543
        $region48: #{tpu_custom_call.1} parent=35 // pred_fallthru
          _
        // Predicated region
        $region49: #{tpu_custom_call.1} parent=35 // pred_check
          %p545 = pneg %p164
        $region50: #{tpu_custom_call.1} parent=35 // pred_check_branch
          %547 = sbr.rel (%p545) target = $region52
        $region51: #{tpu_custom_call.1} parent=35 // pred_region
          %p548 = scmp.lt.s32.totalorder %s34, 1
          %s549 = scalar_select %p548, %s34, 1
          %s550 = scalar_lea.vmem %s4, %s549
        $region52: #{tpu_custom_call.1} parent=35 // pred_fallthru
          _
        // Predicated region
        $region53: #{tpu_custom_call.1} parent=35 // pred_check
          %p551 = pneg %p190
        $region54: #{tpu_custom_call.1} parent=35 // pred_check_branch
          %553 = sbr.rel (%p551) target = $region56
        $region55: #{tpu_custom_call.1} parent=35 // pred_region
          %p554 = scmp.lt.s32.totalorder %s34, 1
          %s555 = scalar_select %p554, %s34, 1
          %s556 = scalar_lea.vmem %s5, %s555
        $region56: #{tpu_custom_call.1} parent=35 // pred_fallthru
          _
        // Predicated region
        $region57: #{tpu_custom_call.1} parent=35 // pred_check
          %p557 = pneg %p216
        $region58: #{tpu_custom_call.1} parent=35 // pred_check_branch
          %559 = sbr.rel (%p557) target = $region60
        $region59: #{tpu_custom_call.1} parent=35 // pred_region
          %p560 = scmp.lt.s32.totalorder %s34, 1
          %s561 = scalar_select %p560, %s34, 1
          %s562 = smul.addr %s561, 8
          %s563 = smul.addr %s562, 4
          %s564 = scalar_lea.vmem %s6, %s563
        $region60: #{tpu_custom_call.1} parent=35 // pred_fallthru
          _
        // Predicated region
        $region61: #{tpu_custom_call.1} parent=35 // pred_check
          %p565 = pneg %p242
        $region62: #{tpu_custom_call.1} parent=35 // pred_check_branch
          %567 = sbr.rel (%p565) target = $region64
        $region63: #{tpu_custom_call.1} parent=35 // pred_region
          %p568 = scmp.lt.s32.totalorder %s34, 1
          %s569 = scalar_select %p568, %s34, 1
          %s570 = smul.addr %s569, 8
          %s571 = smul.addr %s570, 4
          %s572 = scalar_lea.vmem %s7, %s571
        $region64: #{tpu_custom_call.1} parent=35 // pred_fallthru
          _
        // Predicated region
        $region65: #{tpu_custom_call.1} parent=35 // pred_check
          %p573 = pneg %p268
        $region66: #{tpu_custom_call.1} parent=35 // pred_check_branch
          %575 = sbr.rel (%p573) target = $region68
        $region67: #{tpu_custom_call.1} parent=35 // pred_region
          %p576 = scmp.lt.s32.totalorder %s34, 1
          %s577 = scalar_select %p576, %s34, 1
          %s578 = smul.addr %s577, 8
          %s579 = smul.addr %s578, 4
          %s580 = scalar_lea.vmem %s8, %s579
        $region68: #{tpu_custom_call.1} parent=35 // pred_fallthru
          _
        // Predicated region
        $region69: #{tpu_custom_call.1} parent=35 // pred_check
          %p581 = pneg %p294
        $region70: #{tpu_custom_call.1} parent=35 // pred_check_branch
          %583 = sbr.rel (%p581) target = $region72
        $region71: #{tpu_custom_call.1} parent=35 // pred_region
          %p584 = scmp.lt.s32.totalorder %s34, 1
          %s585 = scalar_select %p584, %s34, 1
          %s586 = scalar_lea.vmem %s9, %s585
        $region72: #{tpu_custom_call.1} parent=35 // pred_fallthru
          _
        // Predicated region
        $region73: #{tpu_custom_call.1} parent=35 // pred_check
          %p587 = pneg %p320
        $region74: #{tpu_custom_call.1} parent=35 // pred_check_branch
          %589 = sbr.rel (%p587) target = $region76
        $region75: #{tpu_custom_call.1} parent=35 // pred_region
          %p590 = scmp.lt.s32.totalorder %s34, 1
          %s591 = scalar_select %p590, %s34, 1
          %s592 = scalar_lea.vmem %s10, %s591
        $region76: #{tpu_custom_call.1} parent=35 // pred_fallthru
          _
        // Predicated region
        $region77: #{tpu_custom_call.1} parent=35 // pred_check
          %p593 = pneg %p348
        $region78: #{tpu_custom_call.1} parent=35 // pred_check_branch
          %595 = sbr.rel (%p593) target = $region80
        $region79: #{tpu_custom_call.1} parent=35 // pred_region
          %s596 = sand.u32 %s338, 1
          %s597 = sand.u32 %s338, 1
          %s598 = smul.addr %s597, 32
          %s599 = scalar_lea.vmem [#allocation4], %s598
          %s600 = smul.addr %s34, 16
          %s601 = sadd.s32 %s35, %s600
          %s602 = smul.addr %s601, 4
          %s603 = scalar_lea.vmem %s11, %s602
          // Predicated region
          $region81: #{tpu_custom_call.1} parent=79 // pred_check
            _
          $region82: #{tpu_custom_call.1} parent=79 // pred_check_branch
            %605 = sbr.rel (0) target = $region84
          $region83: #{tpu_custom_call.1} parent=79 // pred_region
            // Predicated region
            $region85: #{tpu_custom_call.1} parent=83 // pred_check
              _
            $region86: #{tpu_custom_call.1} parent=83 // pred_check_branch
              %607 = sbr.rel target = $region88
            $region87: #{tpu_custom_call.1} parent=83 // pred_region
              // Predicated region
              $region100: #{tpu_custom_call.1} parent=87 // pred_check
                _
              $region101: #{tpu_custom_call.1} parent=87 // pred_check_branch
                %636 = sbr.rel (0) target = $region103
              $region102: #{tpu_custom_call.1} parent=87 // pred_region
                loop: start=0, step=1, limit=1
                $region104: #{tpu_custom_call.1} parent=102 // loop_pre_header
                  _
                $region105: #{tpu_custom_call.1} parent=102 // loop_header
                  %s638 = sphi 0, %s642
                  %p639 = scmp.ge.s32.totalorder %s638, 1
                  %s643 = sphi %s603, %s603
                  %s644 = sphi %s599, %s599
                $region106: #{tpu_custom_call.1} parent=102 // loop_header_branch
                  %641 = sbr.rel (%p639) target = $region110
                $region107: #{tpu_custom_call.1} parent=102 // loop_body
                  _
                $region108: #{tpu_custom_call.1} parent=102 // loop_footer
                  %s642 = sadd.s32 1, %s638
                $region109: #{tpu_custom_call.1} parent=102 // loop_footer_branch
                  %637 = sbr.rel target = $region105
                $region110: #{tpu_custom_call.1} parent=102 // loop_exit
                  _
                loop: start=0, step=1, limit=1
                $region111: #{tpu_custom_call.1} parent=102 // loop_pre_header
                  _
                $region112: #{tpu_custom_call.1} parent=102 // loop_header
                  %s647 = sphi 0, %s651
                  %p648 = scmp.ge.s32.totalorder %s647, 1
                  %s652 = sphi %s603, %s603
                  %s653 = sphi %s599, %s599
                $region113: #{tpu_custom_call.1} parent=102 // loop_header_branch
                  %650 = sbr.rel (%p648) target = $region117
                $region114: #{tpu_custom_call.1} parent=102 // loop_body
                  %v654 = vld [vmem:[%s652] sm:$0xf]
                  %655 = vst [vmem:[%s653] sm:$0xf] %v654
                  %v656 = vld [vmem:[%s652 + $0x8] sm:$0xf]
                  %657 = vst [vmem:[%s653 + $0x4] sm:$0xf] %v656
                  %v658 = vld [vmem:[%s652 + $0x10] sm:$0xf]
                  %659 = vst [vmem:[%s653 + $0x8] sm:$0xf] %v658
                  %v660 = vld [vmem:[%s652 + $0x18] sm:$0xf]
                  %661 = vst [vmem:[%s653 + $0xc] sm:$0xf] %v660
                  %v662 = vld [vmem:[%s652 + $0x20] sm:$0xf]
                  %663 = vst [vmem:[%s653 + $0x10] sm:$0xf] %v662
                  %v664 = vld [vmem:[%s652 + $0x28] sm:$0xf]
                  %665 = vst [vmem:[%s653 + $0x14] sm:$0xf] %v664
                  %v666 = vld [vmem:[%s652 + $0x30] sm:$0xf]
                  %667 = vst [vmem:[%s653 + $0x18] sm:$0xf] %v666
                  %v668 = vld [vmem:[%s652 + $0x38] sm:$0xf]
                  %669 = vst [vmem:[%s653 + $0x1c] sm:$0xf] %v668
                $region115: #{tpu_custom_call.1} parent=102 // loop_footer
                  %s651 = sadd.s32 1, %s647
                $region116: #{tpu_custom_call.1} parent=102 // loop_footer_branch
                  %646 = sbr.rel target = $region112
                $region117: #{tpu_custom_call.1} parent=102 // loop_exit
                  _
              $region103: #{tpu_custom_call.1} parent=87 // pred_fallthru
                _
            $region88: #{tpu_custom_call.1} parent=83 // pred_fallthru
              _
            // Predicated region
            $region89: #{tpu_custom_call.1} parent=83 // pred_check
              _
            $region90: #{tpu_custom_call.1} parent=83 // pred_check_branch
              %609 = sbr.rel (0) target = $region92
            $region91: #{tpu_custom_call.1} parent=83 // pred_region
              loop: start=0, step=1, limit=1
              $region93: #{tpu_custom_call.1} parent=91 // loop_pre_header
                _
              $region94: #{tpu_custom_call.1} parent=91 // loop_header
                %s612 = sphi 0, %s616
                %p613 = scmp.ge.s32.totalorder %s612, 1
                %s617 = sphi %s603, %s603
                %s618 = sphi %s599, %s599
              $region95: #{tpu_custom_call.1} parent=91 // loop_header_branch
                %615 = sbr.rel (%p613) target = $region99
              $region96: #{tpu_custom_call.1} parent=91 // loop_body
                %v619 = vld [vmem:[%s617] sm:$0xf]
                %620 = vst [vmem:[%s618] sm:$0xf] %v619
                %v621 = vld [vmem:[%s617 + $0x8] sm:$0xf]
                %622 = vst [vmem:[%s618 + $0x4] sm:$0xf] %v621
                %v623 = vld [vmem:[%s617 + $0x10] sm:$0xf]
                %624 = vst [vmem:[%s618 + $0x8] sm:$0xf] %v623
                %v625 = vld [vmem:[%s617 + $0x18] sm:$0xf]
                %626 = vst [vmem:[%s618 + $0xc] sm:$0xf] %v625
                %v627 = vld [vmem:[%s617 + $0x20] sm:$0xf]
                %628 = vst [vmem:[%s618 + $0x10] sm:$0xf] %v627
                %v629 = vld [vmem:[%s617 + $0x28] sm:$0xf]
                %630 = vst [vmem:[%s618 + $0x14] sm:$0xf] %v629
                %v631 = vld [vmem:[%s617 + $0x30] sm:$0xf]
                %632 = vst [vmem:[%s618 + $0x18] sm:$0xf] %v631
                %v633 = vld [vmem:[%s617 + $0x38] sm:$0xf]
                %634 = vst [vmem:[%s618 + $0x1c] sm:$0xf] %v633
              $region97: #{tpu_custom_call.1} parent=91 // loop_footer
                %s616 = sadd.s32 1, %s612
              $region98: #{tpu_custom_call.1} parent=91 // loop_footer_branch
                %611 = sbr.rel target = $region94
              $region99: #{tpu_custom_call.1} parent=91 // loop_exit
                _
            $region92: #{tpu_custom_call.1} parent=83 // pred_fallthru
              _
          $region84: #{tpu_custom_call.1} parent=79 // pred_fallthru
            _
          %670 = vnop
        $region80: #{tpu_custom_call.1} parent=35 // pred_fallthru
          _
        // Predicated region
        $region118: #{tpu_custom_call.1} parent=35 // pred_check
          %p671 = pneg %p376
        $region119: #{tpu_custom_call.1} parent=35 // pred_check_branch
          %673 = sbr.rel (%p671) target = $region121
        $region120: #{tpu_custom_call.1} parent=35 // pred_region
          %s674 = smul.u32 16, %s35
          %p675 = scmp.lt.s32.totalorder %s34, 1
          %s676 = scalar_select %p675, %s34, 1
          %p677 = scmp.lt.s32.totalorder %s674, 31
          %s678 = scalar_select %p677, %s674, 31
          %s679 = smul.addr %s676, 32
          %s680 = sadd.s32 %s678, %s679
          %s681 = smul.addr %s680, 4
          %s682 = scalar_lea.vmem %s12, %s681
          %s683 = smul.u32 16, %s35
        $region121: #{tpu_custom_call.1} parent=35 // pred_fallthru
          _
      $region36: #{tpu_custom_call.1} parent=5 // pred_fallthru
        _
      %p684 = scmp.le.s32.totalorder 1, %s26
      %p685 = scmp.lt.s32.totalorder %s26, 9
      %p686 = pnand %p684, %p685
      %p687 = pneg %p686
      // Predicated region
      $region122: #{tpu_custom_call.1} parent=5 // pred_check
        _
      $region123: #{tpu_custom_call.1} parent=5 // pred_check_branch
        %689 = sbr.rel (%p686) target = $region125
      $region124: #{tpu_custom_call.1} parent=5 // pred_region
        %s690 = ssub.s32 %s26, 1
        %s691 = sand.u32 %s341, 1
        %s692 = sand.u32 %s341, 1
        %s693 = smul.addr %s692, 32
        %s694 = scalar_lea.vmem [#allocation4], %s693
        // Predicated region
        $region126: #{tpu_custom_call.1} parent=124 // pred_check
          %p695 = pneg %p354
        $region127: #{tpu_custom_call.1} parent=124 // pred_check_branch
          %697 = sbr.rel (%p695) target = $region129
        $region128: #{tpu_custom_call.1} parent=124 // pred_region
          _
        $region129: #{tpu_custom_call.1} parent=124 // pred_fallthru
          _
        %p698 = scmp.lt.s32.totalorder %s36, 1
        %s699 = scalar_select %p698, %s36, 1
        %s700 = smul.addr %s699, 4
        %s701 = scalar_lea.vmem %s0, %s700
        %p702 = pneg %p71
        %p703 = pneg %p68
        %p704 = pneg %p92
        %p705 = pneg %p89
        %p706 = scmp.lt.s32.totalorder %s37, 1
        %s707 = scalar_select %p706, %s37, 1
        %s708 = scalar_lea.vmem %s2, %s707
        %p709 = pneg %p118
        %p710 = pneg %p115
        %p711 = scmp.lt.s32.totalorder %s37, 1
        %s712 = scalar_select %p711, %s37, 1
        %s713 = scalar_lea.vmem %s3, %s712
        %p714 = pneg %p144
        %p715 = pneg %p141
        %p716 = scmp.lt.s32.totalorder %s37, 1
        %s717 = scalar_select %p716, %s37, 1
        %s718 = scalar_lea.vmem %s4, %s717
        %p719 = pneg %p170
        %p720 = pneg %p167
        %p721 = scmp.lt.s32.totalorder %s37, 1
        %s722 = scalar_select %p721, %s37, 1
        %s723 = scalar_lea.vmem %s5, %s722
        %p724 = pneg %p196
        %p725 = pneg %p193
        %p726 = scmp.lt.s32.totalorder %s37, 1
        %s727 = scalar_select %p726, %s37, 1
        %s728 = smul.addr %s727, 8
        %s729 = smul.addr %s728, 4
        %s730 = scalar_lea.vmem %s6, %s729
        %p731 = pneg %p222
        %p732 = pneg %p219
        %p733 = scmp.lt.s32.totalorder %s37, 1
        %s734 = scalar_select %p733, %s37, 1
        %s735 = smul.addr %s734, 8
        %s736 = smul.addr %s735, 4
        %s737 = scalar_lea.vmem %s7, %s736
        %p738 = pneg %p248
        %p739 = pneg %p245
        %p740 = scmp.lt.s32.totalorder %s37, 1
        %s741 = scalar_select %p740, %s37, 1
        %s742 = smul.addr %s741, 8
        %s743 = smul.addr %s742, 4
        %s744 = scalar_lea.vmem %s8, %s743
        %p745 = pneg %p274
        %p746 = pneg %p271
        %p747 = scmp.lt.s32.totalorder %s37, 1
        %s748 = scalar_select %p747, %s37, 1
        %s749 = scalar_lea.vmem %s9, %s748
        %p750 = pneg %p300
        %p751 = pneg %p297
        %p752 = scmp.lt.s32.totalorder %s37, 1
        %s753 = scalar_select %p752, %s37, 1
        %s754 = scalar_lea.vmem %s10, %s753
        %p755 = pneg %p326
        %p756 = pneg %p323
        %s757 = sand.u32 %s341, 1
        %s758 = sand.u32 %s341, 1
        %s759 = smul.addr %s758, 32
        %s760 = scalar_lea.vmem [#allocation4], %s759
        %p761 = pneg %p354
        %p762 = pneg %p351
        %s763 = smul.u32 16, %s38
        %p764 = scmp.lt.s32.totalorder %s37, 1
        %s765 = scalar_select %p764, %s37, 1
        %p766 = scmp.lt.s32.totalorder %s763, 31
        %s767 = scalar_select %p766, %s763, 31
        %s768 = smul.addr %s765, 32
        %s769 = sadd.s32 %s767, %s768
        %s770 = smul.addr %s769, 4
        %s771 = scalar_lea.vmem %s12, %s770
        %p772 = pneg %p382
        %p773 = pneg %p379
        %p774 = pneg %p403
        %p775 = pneg %p400
        %p776 = pneg %p424
        %p777 = pneg %p421
        %p778 = pneg %p445
        %p779 = pneg %p442
        %p780 = pneg %p466
        %p781 = pneg %p463
        %p782 = pneg %p492
        %p783 = pneg %p489
        %s784 = sand.u32 %s479, 1
        %s785 = scalar_lea.sflag [#allocation6], %s784
        %s786 = sand.u32 %s479, 1
        %s787 = smul.addr %s786, 4
        %s788 = scalar_lea.vmem [#allocation5], %s787
        %p789 = scmp.lt.s32.totalorder %s36, 1
        %s790 = scalar_select %p789, %s36, 1
        %s791 = smul.addr %s790, 4
        %s792 = scalar_lea.vmem %s0, %s791
        %p793 = scmp.lt.s32.totalorder %s37, 1
        %s794 = scalar_select %p793, %s37, 1
        %s795 = scalar_lea.vmem %s2, %s794
        %p796 = scmp.lt.s32.totalorder %s37, 1
        %s797 = scalar_select %p796, %s37, 1
        %s798 = scalar_lea.vmem %s3, %s797
        %p799 = scmp.lt.s32.totalorder %s37, 1
        %s800 = scalar_select %p799, %s37, 1
        %s801 = scalar_lea.vmem %s4, %s800
        %p802 = scmp.lt.s32.totalorder %s37, 1
        %s803 = scalar_select %p802, %s37, 1
        %s804 = scalar_lea.vmem %s5, %s803
        %p805 = scmp.lt.s32.totalorder %s37, 1
        %s806 = scalar_select %p805, %s37, 1
        %s807 = smul.addr %s806, 8
        %s808 = smul.addr %s807, 4
        %s809 = scalar_lea.vmem %s6, %s808
        %p810 = scmp.lt.s32.totalorder %s37, 1
        %s811 = scalar_select %p810, %s37, 1
        %s812 = smul.addr %s811, 8
        %s813 = smul.addr %s812, 4
        %s814 = scalar_lea.vmem %s7, %s813
        %p815 = scmp.lt.s32.totalorder %s37, 1
        %s816 = scalar_select %p815, %s37, 1
        %s817 = smul.addr %s816, 8
        %s818 = smul.addr %s817, 4
        %s819 = scalar_lea.vmem %s8, %s818
        %p820 = scmp.lt.s32.totalorder %s37, 1
        %s821 = scalar_select %p820, %s37, 1
        %s822 = scalar_lea.vmem %s9, %s821
        %p823 = scmp.lt.s32.totalorder %s37, 1
        %s824 = scalar_select %p823, %s37, 1
        %s825 = scalar_lea.vmem %s10, %s824
        %s826 = smul.u32 16, %s38
        %p827 = scmp.lt.s32.totalorder %s37, 1
        %s828 = scalar_select %p827, %s37, 1
        %p829 = scmp.lt.s32.totalorder %s826, 31
        %s830 = scalar_select %p829, %s826, 31
        %s831 = smul.addr %s828, 32
        %s832 = sadd.s32 %s830, %s831
        %s833 = smul.addr %s832, 4
        %s834 = scalar_lea.vmem %s12, %s833
        %s835 = smul.u32 16, %s38
        %p837 = scmp.eq.s32.totalorder %s37, 0
        %p838 = scmp.eq.s32.totalorder %s38, 0
        %p839 = pnand %p837, %p838
        %p840 = pneg %p839
        // Predicated region
        $region130: #{tpu_custom_call.1} parent=124 // pred_check
          _
        $region131: #{tpu_custom_call.1} parent=124 // pred_check_branch
          %842 = sbr.rel (%p839) target = $region133
        $region132: #{tpu_custom_call.1} parent=124 // pred_region
          %v843 = vld [vmem:[%s1] sm:$0xf]
          %vm844 = vcmask 519168
          %845 = vst.msk [vmem:[#allocation2] sm:$0xf] %vm844, %v843
        $region133: #{tpu_custom_call.1} parent=124 // pred_fallthru
          _
        // Predicated region
        $region134: #{tpu_custom_call.1} parent=124 // pred_check
          %p846 = pneg %p838
        $region135: #{tpu_custom_call.1} parent=124 // pred_check_branch
          %848 = sbr.rel (%p846) target = $region137
        $region136: #{tpu_custom_call.1} parent=124 // pred_region
          %v849 = vld [vmem:[%s792] sm:$0xf]
          %v850 = vld [vmem:[#allocation2] sm:$0xf]
          %v851 = vunpack.c.l.bf16 %v849
          %v852 = vld [vmem:[%s795] sm:$0x1]
          %v853 = vld [vmem:[%s798] sm:$0x1]
          %vm854 = vcmask 523264
          %v855 = vsel %vm854, %v851, 0.0
          %856 = vadd.xlane.f32.xlu0 %v855
          %v857 = vpop.xlane.xlu0 %856
          %v858 = vrcp.pop 64.0
          %v859 = vmul.f32 %v857, %v858
          %v860 = vsub.f32 %v851, %v859
          %v861 = vmul.f32 %v860, %v860
          %v862 = vsel %vm854, %v861, 0.0
          %863 = vadd.xlane.f32.xlu0 %v862
          %v864 = vpop.xlane.xlu0 %863
          %v865 = vmul.f32 %v864, %v858
          %v866 = vadd.f32 %v865, 1e-05
          %v867 = vrsqrt.pop %v866
          %v868 = vmul.f32 %v860, %v867
          %v870 = vlaneseq
          %v871 = vshrl.u32 %v870, 7
          %v872 = vsub.s32 0, %v871
          %v873 = vrot.slane %v852, %v872
          %v875 = vmul.f32 %v868, %v873
          %v877 = vlaneseq
          %v878 = vshrl.u32 %v877, 7
          %v879 = vsub.s32 0, %v878
          %v880 = vrot.slane %v853, %v879
          %v882 = vadd.f32 %v875, %v880
          %v883 = vpack.c.bf16 %v882, %v882
          %v884 = vld [vmem:[%s801] sm:$0x1]
          %v885 = vld [vmem:[%s804] sm:$0x1]
          %vm886 = vcmask 519168
          %v887 = vsel %vm886, %v850, 0.0
          %888 = vadd.xlane.f32.xlu0 %v887
          %v889 = vpop.xlane.xlu0 %888
          %v890 = vmul.f32 %v889, %v858
          %v891 = vsub.f32 %v850, %v890
          %v892 = vmul.f32 %v891, %v891
          %v893 = vsel %vm886, %v892, 0.0
          %894 = vadd.xlane.f32.xlu0 %v893
          %v895 = vpop.xlane.xlu0 %894
          %v896 = vmul.f32 %v895, %v858
          %v897 = vadd.f32 %v896, 1e-05
          %v898 = vrsqrt.pop %v897
          %v899 = vmul.f32 %v891, %v898
          %v901 = vlaneseq
          %v902 = vshrl.u32 %v901, 7
          %v903 = vsub.s32 0, %v902
          %v904 = vrot.slane %v884, %v903
          %v906 = vmul.f32 %v899, %v904
          %v908 = vlaneseq
          %v909 = vshrl.u32 %v908, 7
          %v910 = vsub.s32 0, %v909
          %v911 = vrot.slane %v885, %v910
          %v913 = vadd.f32 %v906, %v911
          %v914 = vpack.c.bf16 %v913, %v913
          %v915 = vld [vmem:[%s809] sm:$0xf]
          %v916 = vld [vmem:[%s809 + $0x4] sm:$0xf]
          %v917 = vld [vmem:[%s809 + $0x8] sm:$0xf]
          %v918 = vld [vmem:[%s809 + $0xc] sm:$0xf]
          %v919 = vld [vmem:[%s809 + $0x10] sm:$0xf]
          %v920 = vld [vmem:[%s809 + $0x14] sm:$0xf]
          %v921 = vld [vmem:[%s809 + $0x18] sm:$0xf]
          %v922 = vld [vmem:[%s809 + $0x1c] sm:$0xf]
          %v931 = vunpack.c.l.b16 %v915
          %v932 = vunpack.c.l.b16 %v916
          %v933 = vunpack.c.l.b16 %v917
          %v934 = vunpack.c.l.b16 %v918
          %v935 = vunpack.c.l.b16 %v919
          %v936 = vunpack.c.l.b16 %v920
          %v937 = vunpack.c.l.b16 %v921
          %v938 = vunpack.c.l.b16 %v922
          %v939 = vpack.c.b16 %v932, %v931
          %v940 = vpack.c.b16 %v934, %v933
          %v941 = vpack.c.b16 %v936, %v935
          %v942 = vpack.c.b16 %v938, %v937
          %v948 = vsel %vm854, %v914, 0
          %950 = vmatprep.subr.bf16.mxu0 0
          %951 = vmatpush1.bf16.msra.mxu0 %v939
          %952 = vmatprep.subr.bf16.mxu0 0
          %953 = vmatpush1.bf16.msra.mxu0 %v940
          %954 = vmatprep.subr.bf16.mxu0 0
          %955 = vmatpush1.bf16.msra.mxu0 %v941
          %956 = vmatprep.subr.bf16.mxu0 0
          %957 = vmatpush1.bf16.msra.mxu0 %v942
          %958 = vmatprep.subr.bf16.mxu0 0
          %959 = vmatpush1.bf16.msra.mxu0 0
          %960 = vmatprep.subr.bf16.mxu0 0
          %961 = vmatpush1.bf16.msra.mxu0 0
          %962 = vmatprep.subr.bf16.mxu0 0
          %963 = vmatpush1.bf16.msra.mxu0 0
          %964 = vmatprep.subr.bf16.mxu0 0
          %965 = vmatpush1.bf16.msra.mxu0 0
          %966 = vmatprep.subr.bf16.mxu0 0
          %967 = vmatpush1.bf16.msra.mxu0 0
          %968 = vmatprep.subr.bf16.mxu0 0
          %969 = vmatpush1.bf16.msra.mxu0 0
          %970 = vmatprep.subr.bf16.mxu0 0
          %971 = vmatpush1.bf16.msra.mxu0 0
          %972 = vmatprep.subr.bf16.mxu0 0
          %973 = vmatpush1.bf16.msra.mxu0 0
          %974 = vmatprep.subr.bf16.mxu0 0
          %975 = vmatpush1.bf16.msra.mxu0 0
          %976 = vmatprep.subr.bf16.mxu0 0
          %977 = vmatpush1.bf16.msra.mxu0 0
          %978 = vmatprep.subr.bf16.mxu0 0
          %979 = vmatpush1.bf16.msra.mxu0 0
          %980 = vmatprep.subr.bf16.mxu0 0
          %981 = vmatpush1.bf16.msra.mxu0 0
          %982 = vmatprep.mubr.bf16.mxu0 0
          %983 = vmatmul.mubr.bf16.gmra.mrb[0].mxu0 %v948
          %v984 = vpop.f32.mrb[0].mxu0
          %v985 = vadd.f32 0.0, %v984
          %v986 = vpop.f32.mrb[0].mxu0
          %v987 = vpop.f32.mrb[0].mxu0
          %v988 = vpop.f32.mrb[0].mxu0
          %989 = vdwg.mxu0
          %v990 = vld [vmem:[%s814] sm:$0xf]
          %v991 = vld [vmem:[%s814 + $0x4] sm:$0xf]
          %v992 = vld [vmem:[%s814 + $0x8] sm:$0xf]
          %v993 = vld [vmem:[%s814 + $0xc] sm:$0xf]
          %v994 = vld [vmem:[%s814 + $0x10] sm:$0xf]
          %v995 = vld [vmem:[%s814 + $0x14] sm:$0xf]
          %v996 = vld [vmem:[%s814 + $0x18] sm:$0xf]
          %v997 = vld [vmem:[%s814 + $0x1c] sm:$0xf]
          %v1006 = vunpack.c.l.b16 %v990
          %v1007 = vunpack.c.l.b16 %v991
          %v1008 = vunpack.c.l.b16 %v992
          %v1009 = vunpack.c.l.b16 %v993
          %v1010 = vunpack.c.l.b16 %v994
          %v1011 = vunpack.c.l.b16 %v995
          %v1012 = vunpack.c.l.b16 %v996
          %v1013 = vunpack.c.l.b16 %v997
          %v1014 = vpack.c.b16 %v1007, %v1006
          %v1015 = vpack.c.b16 %v1009, %v1008
          %v1016 = vpack.c.b16 %v1011, %v1010
          %v1017 = vpack.c.b16 %v1013, %v1012
          %v1023 = vsel %vm854, %v883, 0
          %1025 = vmatprep.subr.bf16.mxu0 0
          %1026 = vmatpush1.bf16.msra.mxu0 %v1014
          %1027 = vmatprep.subr.bf16.mxu0 0
          %1028 = vmatpush1.bf16.msra.mxu0 %v1015
          %1029 = vmatprep.subr.bf16.mxu0 0
          %1030 = vmatpush1.bf16.msra.mxu0 %v1016
          %1031 = vmatprep.subr.bf16.mxu0 0
          %1032 = vmatpush1.bf16.msra.mxu0 %v1017
          %1033 = vmatprep.subr.bf16.mxu0 0
          %1034 = vmatpush1.bf16.msra.mxu0 0
          %1035 = vmatprep.subr.bf16.mxu0 0
          %1036 = vmatpush1.bf16.msra.mxu0 0
          %1037 = vmatprep.subr.bf16.mxu0 0
          %1038 = vmatpush1.bf16.msra.mxu0 0
          %1039 = vmatprep.subr.bf16.mxu0 0
          %1040 = vmatpush1.bf16.msra.mxu0 0
          %1041 = vmatprep.subr.bf16.mxu0 0
          %1042 = vmatpush1.bf16.msra.mxu0 0
          %1043 = vmatprep.subr.bf16.mxu0 0
          %1044 = vmatpush1.bf16.msra.mxu0 0
          %1045 = vmatprep.subr.bf16.mxu0 0
          %1046 = vmatpush1.bf16.msra.mxu0 0
          %1047 = vmatprep.subr.bf16.mxu0 0
          %1048 = vmatpush1.bf16.msra.mxu0 0
          %1049 = vmatprep.subr.bf16.mxu0 0
          %1050 = vmatpush1.bf16.msra.mxu0 0
          %1051 = vmatprep.subr.bf16.mxu0 0
          %1052 = vmatpush1.bf16.msra.mxu0 0
          %1053 = vmatprep.subr.bf16.mxu0 0
          %1054 = vmatpush1.bf16.msra.mxu0 0
          %1055 = vmatprep.subr.bf16.mxu0 0
          %1056 = vmatpush1.bf16.msra.mxu0 0
          %1057 = vmatprep.mubr.bf16.mxu0 0
          %1058 = vmatmul.mubr.bf16.gmra.mrb[0].mxu0 %v1023
          %v1059 = vpop.f32.mrb[0].mxu0
          %v1060 = vadd.f32 0.0, %v1059
          %v1061 = vpop.f32.mrb[0].mxu0
          %v1062 = vpop.f32.mrb[0].mxu0
          %v1063 = vpop.f32.mrb[0].mxu0
          %1064 = vdwg.mxu0
          %v1065 = vpack.c.bf16 %v1060, %v1060
          %1066 = vmatprep.subr.bf16.mxu0 0
          %1067 = vmatpush1.bf16.msra.mxu0 %v1014
          %1068 = vmatprep.subr.bf16.mxu0 0
          %1069 = vmatpush1.bf16.msra.mxu0 %v1015
          %1070 = vmatprep.subr.bf16.mxu0 0
          %1071 = vmatpush1.bf16.msra.mxu0 %v1016
          %1072 = vmatprep.subr.bf16.mxu0 0
          %1073 = vmatpush1.bf16.msra.mxu0 %v1017
          %1074 = vmatprep.subr.bf16.mxu0 0
          %1075 = vmatpush1.bf16.msra.mxu0 0
          %1076 = vmatprep.subr.bf16.mxu0 0
          %1077 = vmatpush1.bf16.msra.mxu0 0
          %1078 = vmatprep.subr.bf16.mxu0 0
          %1079 = vmatpush1.bf16.msra.mxu0 0
          %1080 = vmatprep.subr.bf16.mxu0 0
          %1081 = vmatpush1.bf16.msra.mxu0 0
          %1082 = vmatprep.subr.bf16.mxu0 0
          %1083 = vmatpush1.bf16.msra.mxu0 0
          %1084 = vmatprep.subr.bf16.mxu0 0
          %1085 = vmatpush1.bf16.msra.mxu0 0
          %1086 = vmatprep.subr.bf16.mxu0 0
          %1087 = vmatpush1.bf16.msra.mxu0 0
          %1088 = vmatprep.subr.bf16.mxu0 0
          %1089 = vmatpush1.bf16.msra.mxu0 0
          %1090 = vmatprep.subr.bf16.mxu0 0
          %1091 = vmatpush1.bf16.msra.mxu0 0
          %1092 = vmatprep.subr.bf16.mxu0 0
          %1093 = vmatpush1.bf16.msra.mxu0 0
          %1094 = vmatprep.subr.bf16.mxu0 0
          %1095 = vmatpush1.bf16.msra.mxu0 0
          %1096 = vmatprep.subr.bf16.mxu0 0
          %1097 = vmatpush1.bf16.msra.mxu0 0
          %1098 = vmatprep.mubr.bf16.mxu0 0
          %1099 = vmatmul.mubr.bf16.gmra.mrb[0].mxu0 %v948
          %v1100 = vpop.f32.mrb[0].mxu0
          %v1101 = vadd.f32 0.0, %v1100
          %v1102 = vpop.f32.mrb[0].mxu0
          %v1103 = vpop.f32.mrb[0].mxu0
          %v1104 = vpop.f32.mrb[0].mxu0
          %1105 = vdwg.mxu0
          %v1106 = vpack.c.bf16 %v1101, %v1101
          %v1107 = vmul.f32 %v985, 0.25
          %v1108 = vpack.c.bf16 %v1107, %v1107
          %1110 = vrot.lane.b32.xlu0 %v1108, 112
          %v1111 = vpop.permute.xlu0 %1110
          %1112 = vrot.lane.b32.xlu0 %v1108, 96
          %v1113 = vpop.permute.xlu0 %1112
          %1114 = vrot.lane.b32.xlu0 %v1108, 80
          %v1115 = vpop.permute.xlu0 %1114
          %v1117 = vcombine.low %v1108, %v1113
          %v1119 = vunpack.c.l.s4 1934713408
          %v1120 = vunpack.c.0.s8 %v1119
          %v1121 = vlaneseq
          %v1122 = vshrl.u32 %v1121, 7
          %v1123 = vsub.s32 %v1120, %v1122
          %v1124 = vrot.slane %v1117, %v1123
          %v1125 = vcombine.high %v1124, 0
          %v1128 = vcombine.low %v1111, %v1115
          %v1130 = vunpack.c.l.s4 1934713408
          %v1131 = vunpack.c.0.s8 %v1130
          %v1132 = vlaneseq
          %v1133 = vshrl.u32 %v1132, 7
          %v1134 = vsub.s32 %v1131, %v1133
          %v1135 = vrot.slane %v1128, %v1134
          %v1136 = vcombine.high %v1135, 0
          %v1139 = vpack.i.b16 %v1135, %v1124
          %v1140 = vshrl.u32 %v1124, 16
          %v1141 = vshrl.u32 %v1135, 16
          %v1142 = vpack.i.b16 %v1141, %v1140
          %v1145 = vpack.i.b16 %v1136, %v1125
          %v1146 = vshrl.u32 %v1125, 16
          %v1147 = vshrl.u32 %v1136, 16
          %v1148 = vpack.i.b16 %v1147, %v1146
          %v1151 = vcombine.low %v1139, %v1145
          %v1153 = vunpack.c.l.s4 1934713408
          %v1154 = vunpack.c.0.s8 %v1153
          %v1155 = vlaneseq
          %v1156 = vshrl.u32 %v1155, 7
          %v1157 = vsub.s32 %v1154, %v1156
          %v1158 = vrot.slane %v1151, %v1157
          %v1159 = vcombine.high %v1158, 0
          %v1162 = vcombine.low %v1142, %v1148
          %v1164 = vunpack.c.l.s4 1934713408
          %v1165 = vunpack.c.0.s8 %v1164
          %v1166 = vlaneseq
          %v1167 = vshrl.u32 %v1166, 7
          %v1168 = vsub.s32 %v1165, %v1167
          %v1169 = vrot.slane %v1162, %v1168
          %v1170 = vcombine.high %v1169, 0
          %v1173 = vpack.i.b16 %v1169, %v1158
          %v1174 = vshrl.u32 %v1158, 16
          %v1175 = vshrl.u32 %v1169, 16
          %v1176 = vpack.i.b16 %v1175, %v1174
          %v1179 = vpack.i.b16 %v1170, %v1159
          %v1180 = vshrl.u32 %v1159, 16
          %v1181 = vshrl.u32 %v1170, 16
          %v1182 = vpack.i.b16 %v1181, %v1180
          %1184 = vrot.lane.b32.xlu0 %v1065, 112
          %v1185 = vpop.permute.xlu0 %1184
          %1186 = vrot.lane.b32.xlu0 %v1065, 96
          %v1187 = vpop.permute.xlu0 %1186
          %1188 = vrot.lane.b32.xlu0 %v1065, 80
          %v1189 = vpop.permute.xlu0 %1188
          %v1191 = vunpack.c.l.s4 1983009808
          %v1192 = vunpack.c.0.s8 %v1191
          %v1193 = vlaneseq
          %v1194 = vshrl.u32 %v1193, 7
          %v1195 = vsub.s32 %v1192, %v1194
          %v1196 = vrot.slane %v1065, %v1195
          %v1199 = vunpack.c.l.s4 1983009808
          %v1200 = vunpack.c.0.s8 %v1199
          %v1201 = vlaneseq
          %v1202 = vshrl.u32 %v1201, 7
          %v1203 = vsub.s32 %v1200, %v1202
          %v1204 = vrot.slane %v1187, %v1203
          %v1205 = vcombine.low %v1196, %v1204
          %v1206 = vcombine.high %v1196, %v1204
          %v1208 = vunpack.c.l.s4 1934713408
          %v1209 = vunpack.c.0.s8 %v1208
          %v1210 = vlaneseq
          %v1211 = vshrl.u32 %v1210, 7
          %v1212 = vsub.s32 %v1209, %v1211
          %v1213 = vrot.slane %v1205, %v1212
          %v1215 = vunpack.c.l.s4 1934713408
          %v1216 = vunpack.c.0.s8 %v1215
          %v1217 = vlaneseq
          %v1218 = vshrl.u32 %v1217, 7
          %v1219 = vsub.s32 %v1216, %v1218
          %v1220 = vrot.slane %v1206, %v1219
          %v1221 = vcombine.high %v1213, 0
          %v1222 = vcombine.high %v1220, 0
          %v1225 = vunpack.c.l.s4 1983009808
          %v1226 = vunpack.c.0.s8 %v1225
          %v1227 = vlaneseq
          %v1228 = vshrl.u32 %v1227, 7
          %v1229 = vsub.s32 %v1226, %v1228
          %v1230 = vrot.slane %v1185, %v1229
          %v1233 = vunpack.c.l.s4 1983009808
          %v1234 = vunpack.c.0.s8 %v1233
          %v1235 = vlaneseq
          %v1236 = vshrl.u32 %v1235, 7
          %v1237 = vsub.s32 %v1234, %v1236
          %v1238 = vrot.slane %v1189, %v1237
          %v1239 = vcombine.low %v1230, %v1238
          %v1240 = vcombine.high %v1230, %v1238
          %v1242 = vunpack.c.l.s4 1934713408
          %v1243 = vunpack.c.0.s8 %v1242
          %v1244 = vlaneseq
          %v1245 = vshrl.u32 %v1244, 7
          %v1246 = vsub.s32 %v1243, %v1245
          %v1247 = vrot.slane %v1239, %v1246
          %v1249 = vunpack.c.l.s4 1934713408
          %v1250 = vunpack.c.0.s8 %v1249
          %v1251 = vlaneseq
          %v1252 = vshrl.u32 %v1251, 7
          %v1253 = vsub.s32 %v1250, %v1252
          %v1254 = vrot.slane %v1240, %v1253
          %v1255 = vcombine.high %v1247, 0
          %v1256 = vcombine.high %v1254, 0
          %v1259 = vpack.i.b16 %v1247, %v1213
          %v1261 = vshrl.u32 %v1213, 16
          %v1262 = vshrl.u32 %v1247, 16
          %v1263 = vpack.i.b16 %v1262, %v1261
          %v1267 = vpack.i.b16 %v1255, %v1221
          %v1269 = vshrl.u32 %v1221, 16
          %v1270 = vshrl.u32 %v1255, 16
          %v1271 = vpack.i.b16 %v1270, %v1269
          %v1275 = vpack.i.b16 %v1254, %v1220
          %v1277 = vshrl.u32 %v1220, 16
          %v1278 = vshrl.u32 %v1254, 16
          %v1279 = vpack.i.b16 %v1278, %v1277
          %v1283 = vpack.i.b16 %v1256, %v1222
          %v1285 = vshrl.u32 %v1222, 16
          %v1286 = vshrl.u32 %v1256, 16
          %v1287 = vpack.i.b16 %v1286, %v1285
          %v1289 = vcombine.low %v1259, %v1275
          %v1291 = vunpack.c.l.s4 1983009808
          %v1292 = vunpack.c.0.s8 %v1291
          %v1293 = vlaneseq
          %v1294 = vshrl.u32 %v1293, 7
          %v1295 = vsub.s32 %v1292, %v1294
          %v1296 = vrot.slane %v1289, %v1295
          %v1297 = vcombine.low %v1267, %v1283
          %v1299 = vunpack.c.l.s4 1983009808
          %v1300 = vunpack.c.0.s8 %v1299
          %v1301 = vlaneseq
          %v1302 = vshrl.u32 %v1301, 7
          %v1303 = vsub.s32 %v1300, %v1302
          %v1304 = vrot.slane %v1297, %v1303
          %v1305 = vcombine.low %v1296, %v1304
          %v1307 = vunpack.c.l.s4 1934713408
          %v1308 = vunpack.c.0.s8 %v1307
          %v1309 = vlaneseq
          %v1310 = vshrl.u32 %v1309, 7
          %v1311 = vsub.s32 %v1308, %v1310
          %v1312 = vrot.slane %v1305, %v1311
          %v1313 = vcombine.high %v1312, 0
          %v1314 = vcombine.low %v1263, %v1279
          %v1316 = vunpack.c.l.s4 1983009808
          %v1317 = vunpack.c.0.s8 %v1316
          %v1318 = vlaneseq
          %v1319 = vshrl.u32 %v1318, 7
          %v1320 = vsub.s32 %v1317, %v1319
          %v1321 = vrot.slane %v1314, %v1320
          %v1322 = vcombine.low %v1271, %v1287
          %v1324 = vunpack.c.l.s4 1983009808
          %v1325 = vunpack.c.0.s8 %v1324
          %v1326 = vlaneseq
          %v1327 = vshrl.u32 %v1326, 7
          %v1328 = vsub.s32 %v1325, %v1327
          %v1329 = vrot.slane %v1322, %v1328
          %v1330 = vcombine.low %v1321, %v1329
          %v1332 = vunpack.c.l.s4 1934713408
          %v1333 = vunpack.c.0.s8 %v1332
          %v1334 = vlaneseq
          %v1335 = vshrl.u32 %v1334, 7
          %v1336 = vsub.s32 %v1333, %v1335
          %v1337 = vrot.slane %v1330, %v1336
          %v1338 = vcombine.high %v1337, 0
          %v1341 = vpack.i.b16 %v1337, %v1312
          %v1342 = vshrl.u32 %v1312, 16
          %v1343 = vshrl.u32 %v1337, 16
          %v1344 = vpack.i.b16 %v1343, %v1342
          %v1347 = vpack.i.b16 %v1338, %v1313
          %v1348 = vshrl.u32 %v1313, 16
          %v1349 = vshrl.u32 %v1338, 16
          %v1350 = vpack.i.b16 %v1349, %v1348
          %1351 = vrot.lane.b32.xlu0 %v1065, 64
          %v1352 = vpop.permute.xlu0 %1351
          %1353 = vrot.lane.b32.xlu0 %v1185, 64
          %v1354 = vpop.permute.xlu0 %1353
          %1355 = vrot.lane.b32.xlu0 %v1187, 64
          %v1356 = vpop.permute.xlu0 %1355
          %1357 = vrot.lane.b32.xlu0 %v1189, 64
          %v1358 = vpop.permute.xlu0 %1357
          %v1361 = vunpack.c.l.s4 1983009808
          %v1362 = vunpack.c.0.s8 %v1361
          %v1363 = vlaneseq
          %v1364 = vshrl.u32 %v1363, 7
          %v1365 = vsub.s32 %v1362, %v1364
          %v1366 = vrot.slane %v1352, %v1365
          %v1369 = vunpack.c.l.s4 1983009808
          %v1370 = vunpack.c.0.s8 %v1369
          %v1371 = vlaneseq
          %v1372 = vshrl.u32 %v1371, 7
          %v1373 = vsub.s32 %v1370, %v1372
          %v1374 = vrot.slane %v1356, %v1373
          %v1375 = vcombine.low %v1366, %v1374
          %v1376 = vcombine.high %v1366, %v1374
          %v1378 = vunpack.c.l.s4 1934713408
          %v1379 = vunpack.c.0.s8 %v1378
          %v1380 = vlaneseq
          %v1381 = vshrl.u32 %v1380, 7
          %v1382 = vsub.s32 %v1379, %v1381
          %v1383 = vrot.slane %v1375, %v1382
          %v1385 = vunpack.c.l.s4 1934713408
          %v1386 = vunpack.c.0.s8 %v1385
          %v1387 = vlaneseq
          %v1388 = vshrl.u32 %v1387, 7
          %v1389 = vsub.s32 %v1386, %v1388
          %v1390 = vrot.slane %v1376, %v1389
          %v1391 = vcombine.high %v1383, 0
          %v1392 = vcombine.high %v1390, 0
          %v1395 = vunpack.c.l.s4 1983009808
          %v1396 = vunpack.c.0.s8 %v1395
          %v1397 = vlaneseq
          %v1398 = vshrl.u32 %v1397, 7
          %v1399 = vsub.s32 %v1396, %v1398
          %v1400 = vrot.slane %v1354, %v1399
          %v1403 = vunpack.c.l.s4 1983009808
          %v1404 = vunpack.c.0.s8 %v1403
          %v1405 = vlaneseq
          %v1406 = vshrl.u32 %v1405, 7
          %v1407 = vsub.s32 %v1404, %v1406
          %v1408 = vrot.slane %v1358, %v1407
          %v1409 = vcombine.low %v1400, %v1408
          %v1410 = vcombine.high %v1400, %v1408
          %v1412 = vunpack.c.l.s4 1934713408
          %v1413 = vunpack.c.0.s8 %v1412
          %v1414 = vlaneseq
          %v1415 = vshrl.u32 %v1414, 7
          %v1416 = vsub.s32 %v1413, %v1415
          %v1417 = vrot.slane %v1409, %v1416
          %v1419 = vunpack.c.l.s4 1934713408
          %v1420 = vunpack.c.0.s8 %v1419
          %v1421 = vlaneseq
          %v1422 = vshrl.u32 %v1421, 7
          %v1423 = vsub.s32 %v1420, %v1422
          %v1424 = vrot.slane %v1410, %v1423
          %v1425 = vcombine.high %v1417, 0
          %v1426 = vcombine.high %v1424, 0
          %v1429 = vpack.i.b16 %v1417, %v1383
          %v1431 = vshrl.u32 %v1383, 16
          %v1432 = vshrl.u32 %v1417, 16
          %v1433 = vpack.i.b16 %v1432, %v1431
          %v1437 = vpack.i.b16 %v1425, %v1391
          %v1439 = vshrl.u32 %v1391, 16
          %v1440 = vshrl.u32 %v1425, 16
          %v1441 = vpack.i.b16 %v1440, %v1439
          %v1445 = vpack.i.b16 %v1424, %v1390
          %v1447 = vshrl.u32 %v1390, 16
          %v1448 = vshrl.u32 %v1424, 16
          %v1449 = vpack.i.b16 %v1448, %v1447
          %v1453 = vpack.i.b16 %v1426, %v1392
          %v1455 = vshrl.u32 %v1392, 16
          %v1456 = vshrl.u32 %v1426, 16
          %v1457 = vpack.i.b16 %v1456, %v1455
          %v1459 = vcombine.low %v1429, %v1445
          %v1461 = vunpack.c.l.s4 1983009808
          %v1462 = vunpack.c.0.s8 %v1461
          %v1463 = vlaneseq
          %v1464 = vshrl.u32 %v1463, 7
          %v1465 = vsub.s32 %v1462, %v1464
          %v1466 = vrot.slane %v1459, %v1465
          %v1467 = vcombine.low %v1437, %v1453
          %v1469 = vunpack.c.l.s4 1983009808
          %v1470 = vunpack.c.0.s8 %v1469
          %v1471 = vlaneseq
          %v1472 = vshrl.u32 %v1471, 7
          %v1473 = vsub.s32 %v1470, %v1472
          %v1474 = vrot.slane %v1467, %v1473
          %v1475 = vcombine.low %v1466, %v1474
          %v1477 = vunpack.c.l.s4 1934713408
          %v1478 = vunpack.c.0.s8 %v1477
          %v1479 = vlaneseq
          %v1480 = vshrl.u32 %v1479, 7
          %v1481 = vsub.s32 %v1478, %v1480
          %v1482 = vrot.slane %v1475, %v1481
          %v1483 = vcombine.high %v1482, 0
          %v1484 = vcombine.low %v1433, %v1449
          %v1486 = vunpack.c.l.s4 1983009808
          %v1487 = vunpack.c.0.s8 %v1486
          %v1488 = vlaneseq
          %v1489 = vshrl.u32 %v1488, 7
          %v1490 = vsub.s32 %v1487, %v1489
          %v1491 = vrot.slane %v1484, %v1490
          %v1492 = vcombine.low %v1441, %v1457
          %v1494 = vunpack.c.l.s4 1983009808
          %v1495 = vunpack.c.0.s8 %v1494
          %v1496 = vlaneseq
          %v1497 = vshrl.u32 %v1496, 7
          %v1498 = vsub.s32 %v1495, %v1497
          %v1499 = vrot.slane %v1492, %v1498
          %v1500 = vcombine.low %v1491, %v1499
          %v1502 = vunpack.c.l.s4 1934713408
          %v1503 = vunpack.c.0.s8 %v1502
          %v1504 = vlaneseq
          %v1505 = vshrl.u32 %v1504, 7
          %v1506 = vsub.s32 %v1503, %v1505
          %v1507 = vrot.slane %v1500, %v1506
          %v1508 = vcombine.high %v1507, 0
          %v1511 = vpack.i.b16 %v1507, %v1482
          %v1512 = vshrl.u32 %v1482, 16
          %v1513 = vshrl.u32 %v1507, 16
          %v1514 = vpack.i.b16 %v1513, %v1512
          %v1517 = vpack.i.b16 %v1508, %v1483
          %v1518 = vshrl.u32 %v1483, 16
          %v1519 = vshrl.u32 %v1508, 16
          %v1520 = vpack.i.b16 %v1519, %v1518
          %1522 = vrot.lane.b32.xlu0 %v1106, 112
          %v1523 = vpop.permute.xlu0 %1522
          %1524 = vrot.lane.b32.xlu0 %v1106, 96
          %v1525 = vpop.permute.xlu0 %1524
          %1526 = vrot.lane.b32.xlu0 %v1106, 80
          %v1527 = vpop.permute.xlu0 %1526
          %v1529 = vcombine.low %v1106, %v1525
          %v1531 = vunpack.c.l.s4 1934713408
          %v1532 = vunpack.c.0.s8 %v1531
          %v1533 = vlaneseq
          %v1534 = vshrl.u32 %v1533, 7
          %v1535 = vsub.s32 %v1532, %v1534
          %v1536 = vrot.slane %v1529, %v1535
          %v1537 = vcombine.high %v1536, 0
          %v1540 = vcombine.low %v1523, %v1527
          %v1542 = vunpack.c.l.s4 1934713408
          %v1543 = vunpack.c.0.s8 %v1542
          %v1544 = vlaneseq
          %v1545 = vshrl.u32 %v1544, 7
          %v1546 = vsub.s32 %v1543, %v1545
          %v1547 = vrot.slane %v1540, %v1546
          %v1548 = vcombine.high %v1547, 0
          %v1551 = vpack.i.b16 %v1547, %v1536
          %v1552 = vshrl.u32 %v1536, 16
          %v1553 = vshrl.u32 %v1547, 16
          %v1554 = vpack.i.b16 %v1553, %v1552
          %v1557 = vpack.i.b16 %v1548, %v1537
          %v1558 = vshrl.u32 %v1537, 16
          %v1559 = vshrl.u32 %v1548, 16
          %v1560 = vpack.i.b16 %v1559, %v1558
          %v1563 = vcombine.low %v1551, %v1557
          %v1565 = vunpack.c.l.s4 1934713408
          %v1566 = vunpack.c.0.s8 %v1565
          %v1567 = vlaneseq
          %v1568 = vshrl.u32 %v1567, 7
          %v1569 = vsub.s32 %v1566, %v1568
          %v1570 = vrot.slane %v1563, %v1569
          %v1571 = vcombine.high %v1570, 0
          %v1574 = vcombine.low %v1554, %v1560
          %v1576 = vunpack.c.l.s4 1934713408
          %v1577 = vunpack.c.0.s8 %v1576
          %v1578 = vlaneseq
          %v1579 = vshrl.u32 %v1578, 7
          %v1580 = vsub.s32 %v1577, %v1579
          %v1581 = vrot.slane %v1574, %v1580
          %v1582 = vcombine.high %v1581, 0
          %v1585 = vpack.i.b16 %v1581, %v1570
          %v1586 = vshrl.u32 %v1570, 16
          %v1587 = vshrl.u32 %v1581, 16
          %v1588 = vpack.i.b16 %v1587, %v1586
          %v1591 = vpack.i.b16 %v1582, %v1571
          %v1592 = vshrl.u32 %v1571, 16
          %v1593 = vshrl.u32 %v1582, 16
          %v1594 = vpack.i.b16 %v1593, %v1592
          %1595 = vrot.lane.b32.xlu0 %v1106, 64
          %v1596 = vpop.permute.xlu0 %1595
          %1597 = vrot.lane.b32.xlu0 %v1523, 64
          %v1598 = vpop.permute.xlu0 %1597
          %1599 = vrot.lane.b32.xlu0 %v1525, 64
          %v1600 = vpop.permute.xlu0 %1599
          %1601 = vrot.lane.b32.xlu0 %v1527, 64
          %v1602 = vpop.permute.xlu0 %1601
          %v1605 = vcombine.low %v1596, %v1600
          %v1607 = vunpack.c.l.s4 1934713408
          %v1608 = vunpack.c.0.s8 %v1607
          %v1609 = vlaneseq
          %v1610 = vshrl.u32 %v1609, 7
          %v1611 = vsub.s32 %v1608, %v1610
          %v1612 = vrot.slane %v1605, %v1611
          %v1613 = vcombine.high %v1612, 0
          %v1616 = vcombine.low %v1598, %v1602
          %v1618 = vunpack.c.l.s4 1934713408
          %v1619 = vunpack.c.0.s8 %v1618
          %v1620 = vlaneseq
          %v1621 = vshrl.u32 %v1620, 7
          %v1622 = vsub.s32 %v1619, %v1621
          %v1623 = vrot.slane %v1616, %v1622
          %v1624 = vcombine.high %v1623, 0
          %v1627 = vpack.i.b16 %v1623, %v1612
          %v1628 = vshrl.u32 %v1612, 16
          %v1629 = vshrl.u32 %v1623, 16
          %v1630 = vpack.i.b16 %v1629, %v1628
          %v1633 = vpack.i.b16 %v1624, %v1613
          %v1634 = vshrl.u32 %v1613, 16
          %v1635 = vshrl.u32 %v1624, 16
          %v1636 = vpack.i.b16 %v1635, %v1634
          %v1639 = vcombine.low %v1627, %v1633
          %v1641 = vunpack.c.l.s4 1934713408
          %v1642 = vunpack.c.0.s8 %v1641
          %v1643 = vlaneseq
          %v1644 = vshrl.u32 %v1643, 7
          %v1645 = vsub.s32 %v1642, %v1644
          %v1646 = vrot.slane %v1639, %v1645
          %v1647 = vcombine.high %v1646, 0
          %v1650 = vcombine.low %v1630, %v1636
          %v1652 = vunpack.c.l.s4 1934713408
          %v1653 = vunpack.c.0.s8 %v1652
          %v1654 = vlaneseq
          %v1655 = vshrl.u32 %v1654, 7
          %v1656 = vsub.s32 %v1653, %v1655
          %v1657 = vrot.slane %v1650, %v1656
          %v1658 = vcombine.high %v1657, 0
          %v1661 = vpack.i.b16 %v1657, %v1646
          %v1662 = vshrl.u32 %v1646, 16
          %v1663 = vshrl.u32 %v1657, 16
          %v1664 = vpack.i.b16 %v1663, %v1662
          %v1667 = vpack.i.b16 %v1658, %v1647
          %v1668 = vshrl.u32 %v1647, 16
          %v1669 = vshrl.u32 %v1658, 16
          %v1670 = vpack.i.b16 %v1669, %v1668
          %vm1671 = vcmask 130048
          %v1673 = vsel %vm1671, %v1173, 0
          %v1676 = vsel %vm1671, %v1341, 0
          %1678 = vmatprep.subr.bf16.mxu0 0
          %1679 = vmatpush1.bf16.xpose.msra.mxu0 %v1676
          %1680 = vmatprep.subr.bf16.mxu0 0
          %1681 = vmatpush1.bf16.xpose.msra.mxu0 0
          %1682 = vmatprep.subr.bf16.mxu0 0
          %1683 = vmatpush1.bf16.xpose.msra.mxu0 0
          %1684 = vmatprep.subr.bf16.mxu0 0
          %1685 = vmatpush1.bf16.xpose.msra.mxu0 0
          %1686 = vmatprep.subr.bf16.mxu0 0
          %1687 = vmatpush1.bf16.xpose.msra.mxu0 0
          %1688 = vmatprep.subr.bf16.mxu0 0
          %1689 = vmatpush1.bf16.xpose.msra.mxu0 0
          %1690 = vmatprep.subr.bf16.mxu0 0
          %1691 = vmatpush1.bf16.xpose.msra.mxu0 0
          %1692 = vmatprep.subr.bf16.mxu0 0
          %1693 = vmatpush1.bf16.xpose.msra.mxu0 0
          %1694 = vmatprep.subr.bf16.mxu0 0
          %1695 = vmatpush1.bf16.xpose.msra.mxu0 0
          %1696 = vmatprep.subr.bf16.mxu0 0
          %1697 = vmatpush1.bf16.xpose.msra.mxu0 0
          %1698 = vmatprep.subr.bf16.mxu0 0
          %1699 = vmatpush1.bf16.xpose.msra.mxu0 0
          %1700 = vmatprep.subr.bf16.mxu0 0
          %1701 = vmatpush1.bf16.xpose.msra.mxu0 0
          %1702 = vmatprep.subr.bf16.mxu0 0
          %1703 = vmatpush1.bf16.xpose.msra.mxu0 0
          %1704 = vmatprep.subr.bf16.mxu0 0
          %1705 = vmatpush1.bf16.xpose.msra.mxu0 0
          %1706 = vmatprep.subr.bf16.mxu0 0
          %1707 = vmatpush1.bf16.xpose.msra.mxu0 0
          %1708 = vmatprep.subr.bf16.mxu0 0
          %1709 = vmatpush1.bf16.xpose.msra.mxu0 0
          %1710 = vmatprep.mubr.bf16.mxu0 0
          %1711 = vmatmul.mubr.bf16.gmra.mrb[0].mxu0 %v1673
          %v1712 = vpop.f32.mrb[0].mxu0
          %v1713 = vadd.f32 0.0, %v1712
          %v1714 = vpop.f32.mrb[0].mxu0
          %v1715 = vpop.f32.mrb[0].mxu0
          %v1716 = vpop.f32.mrb[0].mxu0
          %1717 = vdwg.mxu0
          %v1719 = vsel %vm1671, %v1176, 0
          %v1722 = vsel %vm1671, %v1344, 0
          %1724 = vmatprep.subr.bf16.mxu0 0
          %1725 = vmatpush1.bf16.xpose.msra.mxu0 %v1722
          %1726 = vmatprep.subr.bf16.mxu0 0
          %1727 = vmatpush1.bf16.xpose.msra.mxu0 0
          %1728 = vmatprep.subr.bf16.mxu0 0
          %1729 = vmatpush1.bf16.xpose.msra.mxu0 0
          %1730 = vmatprep.subr.bf16.mxu0 0
          %1731 = vmatpush1.bf16.xpose.msra.mxu0 0
          %1732 = vmatprep.subr.bf16.mxu0 0
          %1733 = vmatpush1.bf16.xpose.msra.mxu0 0
          %1734 = vmatprep.subr.bf16.mxu0 0
          %1735 = vmatpush1.bf16.xpose.msra.mxu0 0
          %1736 = vmatprep.subr.bf16.mxu0 0
          %1737 = vmatpush1.bf16.xpose.msra.mxu0 0
          %1738 = vmatprep.subr.bf16.mxu0 0
          %1739 = vmatpush1.bf16.xpose.msra.mxu0 0
          %1740 = vmatprep.subr.bf16.mxu0 0
          %1741 = vmatpush1.bf16.xpose.msra.mxu0 0
          %1742 = vmatprep.subr.bf16.mxu0 0
          %1743 = vmatpush1.bf16.xpose.msra.mxu0 0
          %1744 = vmatprep.subr.bf16.mxu0 0
          %1745 = vmatpush1.bf16.xpose.msra.mxu0 0
          %1746 = vmatprep.subr.bf16.mxu0 0
          %1747 = vmatpush1.bf16.xpose.msra.mxu0 0
          %1748 = vmatprep.subr.bf16.mxu0 0
          %1749 = vmatpush1.bf16.xpose.msra.mxu0 0
          %1750 = vmatprep.subr.bf16.mxu0 0
          %1751 = vmatpush1.bf16.xpose.msra.mxu0 0
          %1752 = vmatprep.subr.bf16.mxu0 0
          %1753 = vmatpush1.bf16.xpose.msra.mxu0 0
          %1754 = vmatprep.subr.bf16.mxu0 0
          %1755 = vmatpush1.bf16.xpose.msra.mxu0 0
          %1756 = vmatprep.mubr.bf16.mxu0 0
          %1757 = vmatmul.mubr.bf16.gmra.mrb[0].mxu0 %v1719
          %v1758 = vpop.f32.mrb[0].mxu0
          %v1759 = vadd.f32 0.0, %v1758
          %v1760 = vpop.f32.mrb[0].mxu0
          %v1761 = vpop.f32.mrb[0].mxu0
          %v1762 = vpop.f32.mrb[0].mxu0
          %1763 = vdwg.mxu0
          %v1765 = vsel %vm1671, %v1179, 0
          %v1768 = vsel %vm1671, %v1347, 0
          %1770 = vmatprep.subr.bf16.mxu0 0
          %1771 = vmatpush1.bf16.xpose.msra.mxu0 %v1768
          %1772 = vmatprep.subr.bf16.mxu0 0
          %1773 = vmatpush1.bf16.xpose.msra.mxu0 0
          %1774 = vmatprep.subr.bf16.mxu0 0
          %1775 = vmatpush1.bf16.xpose.msra.mxu0 0
          %1776 = vmatprep.subr.bf16.mxu0 0
          %1777 = vmatpush1.bf16.xpose.msra.mxu0 0
          %1778 = vmatprep.subr.bf16.mxu0 0
          %1779 = vmatpush1.bf16.xpose.msra.mxu0 0
          %1780 = vmatprep.subr.bf16.mxu0 0
          %1781 = vmatpush1.bf16.xpose.msra.mxu0 0
          %1782 = vmatprep.subr.bf16.mxu0 0
          %1783 = vmatpush1.bf16.xpose.msra.mxu0 0
          %1784 = vmatprep.subr.bf16.mxu0 0
          %1785 = vmatpush1.bf16.xpose.msra.mxu0 0
          %1786 = vmatprep.subr.bf16.mxu0 0
          %1787 = vmatpush1.bf16.xpose.msra.mxu0 0
          %1788 = vmatprep.subr.bf16.mxu0 0
          %1789 = vmatpush1.bf16.xpose.msra.mxu0 0
          %1790 = vmatprep.subr.bf16.mxu0 0
          %1791 = vmatpush1.bf16.xpose.msra.mxu0 0
          %1792 = vmatprep.subr.bf16.mxu0 0
          %1793 = vmatpush1.bf16.xpose.msra.mxu0 0
          %1794 = vmatprep.subr.bf16.mxu0 0
          %1795 = vmatpush1.bf16.xpose.msra.mxu0 0
          %1796 = vmatprep.subr.bf16.mxu0 0
          %1797 = vmatpush1.bf16.xpose.msra.mxu0 0
          %1798 = vmatprep.subr.bf16.mxu0 0
          %1799 = vmatpush1.bf16.xpose.msra.mxu0 0
          %1800 = vmatprep.subr.bf16.mxu0 0
          %1801 = vmatpush1.bf16.xpose.msra.mxu0 0
          %1802 = vmatprep.mubr.bf16.mxu0 0
          %1803 = vmatmul.mubr.bf16.gmra.mrb[0].mxu0 %v1765
          %v1804 = vpop.f32.mrb[0].mxu0
          %v1805 = vadd.f32 0.0, %v1804
          %v1806 = vpop.f32.mrb[0].mxu0
          %v1807 = vpop.f32.mrb[0].mxu0
          %v1808 = vpop.f32.mrb[0].mxu0
          %1809 = vdwg.mxu0
          %v1811 = vsel %vm1671, %v1182, 0
          %v1814 = vsel %vm1671, %v1350, 0
          %1816 = vmatprep.subr.bf16.mxu0 0
          %1817 = vmatpush1.bf16.xpose.msra.mxu0 %v1814
          %1818 = vmatprep.subr.bf16.mxu0 0
          %1819 = vmatpush1.bf16.xpose.msra.mxu0 0
          %1820 = vmatprep.subr.bf16.mxu0 0
          %1821 = vmatpush1.bf16.xpose.msra.mxu0 0
          %1822 = vmatprep.subr.bf16.mxu0 0
          %1823 = vmatpush1.bf16.xpose.msra.mxu0 0
          %1824 = vmatprep.subr.bf16.mxu0 0
          %1825 = vmatpush1.bf16.xpose.msra.mxu0 0
          %1826 = vmatprep.subr.bf16.mxu0 0
          %1827 = vmatpush1.bf16.xpose.msra.mxu0 0
          %1828 = vmatprep.subr.bf16.mxu0 0
          %1829 = vmatpush1.bf16.xpose.msra.mxu0 0
          %1830 = vmatprep.subr.bf16.mxu0 0
          %1831 = vmatpush1.bf16.xpose.msra.mxu0 0
          %1832 = vmatprep.subr.bf16.mxu0 0
          %1833 = vmatpush1.bf16.xpose.msra.mxu0 0
          %1834 = vmatprep.subr.bf16.mxu0 0
          %1835 = vmatpush1.bf16.xpose.msra.mxu0 0
          %1836 = vmatprep.subr.bf16.mxu0 0
          %1837 = vmatpush1.bf16.xpose.msra.mxu0 0
          %1838 = vmatprep.subr.bf16.mxu0 0
          %1839 = vmatpush1.bf16.xpose.msra.mxu0 0
          %1840 = vmatprep.subr.bf16.mxu0 0
          %1841 = vmatpush1.bf16.xpose.msra.mxu0 0
          %1842 = vmatprep.subr.bf16.mxu0 0
          %1843 = vmatpush1.bf16.xpose.msra.mxu0 0
          %1844 = vmatprep.subr.bf16.mxu0 0
          %1845 = vmatpush1.bf16.xpose.msra.mxu0 0
          %1846 = vmatprep.subr.bf16.mxu0 0
          %1847 = vmatpush1.bf16.xpose.msra.mxu0 0
          %1848 = vmatprep.mubr.bf16.mxu0 0
          %1849 = vmatmul.mubr.bf16.gmra.mrb[0].mxu0 %v1811
          %v1850 = vpop.f32.mrb[0].mxu0
          %v1851 = vadd.f32 0.0, %v1850
          %v1852 = vpop.f32.mrb[0].mxu0
          %v1853 = vpop.f32.mrb[0].mxu0
          %v1854 = vpop.f32.mrb[0].mxu0
          %1855 = vdwg.mxu0
          %v1857 = vsel %vm1671, %v1585, 0
          %1859 = vmatprep.subr.bf16.mxu0 0
          %1860 = vmatpush1.bf16.xpose.msra.mxu0 %v1857
          %1861 = vmatprep.subr.bf16.mxu0 0
          %1862 = vmatpush1.bf16.xpose.msra.mxu0 0
          %1863 = vmatprep.subr.bf16.mxu0 0
          %1864 = vmatpush1.bf16.xpose.msra.mxu0 0
          %1865 = vmatprep.subr.bf16.mxu0 0
          %1866 = vmatpush1.bf16.xpose.msra.mxu0 0
          %1867 = vmatprep.subr.bf16.mxu0 0
          %1868 = vmatpush1.bf16.xpose.msra.mxu0 0
          %1869 = vmatprep.subr.bf16.mxu0 0
          %1870 = vmatpush1.bf16.xpose.msra.mxu0 0
          %1871 = vmatprep.subr.bf16.mxu0 0
          %1872 = vmatpush1.bf16.xpose.msra.mxu0 0
          %1873 = vmatprep.subr.bf16.mxu0 0
          %1874 = vmatpush1.bf16.xpose.msra.mxu0 0
          %1875 = vmatprep.subr.bf16.mxu0 0
          %1876 = vmatpush1.bf16.xpose.msra.mxu0 0
          %1877 = vmatprep.subr.bf16.mxu0 0
          %1878 = vmatpush1.bf16.xpose.msra.mxu0 0
          %1879 = vmatprep.subr.bf16.mxu0 0
          %1880 = vmatpush1.bf16.xpose.msra.mxu0 0
          %1881 = vmatprep.subr.bf16.mxu0 0
          %1882 = vmatpush1.bf16.xpose.msra.mxu0 0
          %1883 = vmatprep.subr.bf16.mxu0 0
          %1884 = vmatpush1.bf16.xpose.msra.mxu0 0
          %1885 = vmatprep.subr.bf16.mxu0 0
          %1886 = vmatpush1.bf16.xpose.msra.mxu0 0
          %1887 = vmatprep.subr.bf16.mxu0 0
          %1888 = vmatpush1.bf16.xpose.msra.mxu0 0
          %1889 = vmatprep.subr.bf16.mxu0 0
          %1890 = vmatpush1.bf16.xpose.msra.mxu0 0
          %1891 = vmatprep.mubr.bf16.mxu0 0
          %1892 = vmatmul.mubr.bf16.gmra.mrb[0].mxu0 %v1673
          %v1893 = vpop.f32.mrb[0].mxu0
          %v1894 = vadd.f32 0.0, %v1893
          %v1895 = vpop.f32.mrb[0].mxu0
          %v1896 = vpop.f32.mrb[0].mxu0
          %v1897 = vpop.f32.mrb[0].mxu0
          %1898 = vdwg.mxu0
          %v1900 = vsel %vm1671, %v1588, 0
          %1902 = vmatprep.subr.bf16.mxu0 0
          %1903 = vmatpush1.bf16.xpose.msra.mxu0 %v1900
          %1904 = vmatprep.subr.bf16.mxu0 0
          %1905 = vmatpush1.bf16.xpose.msra.mxu0 0
          %1906 = vmatprep.subr.bf16.mxu0 0
          %1907 = vmatpush1.bf16.xpose.msra.mxu0 0
          %1908 = vmatprep.subr.bf16.mxu0 0
          %1909 = vmatpush1.bf16.xpose.msra.mxu0 0
          %1910 = vmatprep.subr.bf16.mxu0 0
          %1911 = vmatpush1.bf16.xpose.msra.mxu0 0
          %1912 = vmatprep.subr.bf16.mxu0 0
          %1913 = vmatpush1.bf16.xpose.msra.mxu0 0
          %1914 = vmatprep.subr.bf16.mxu0 0
          %1915 = vmatpush1.bf16.xpose.msra.mxu0 0
          %1916 = vmatprep.subr.bf16.mxu0 0
          %1917 = vmatpush1.bf16.xpose.msra.mxu0 0
          %1918 = vmatprep.subr.bf16.mxu0 0
          %1919 = vmatpush1.bf16.xpose.msra.mxu0 0
          %1920 = vmatprep.subr.bf16.mxu0 0
          %1921 = vmatpush1.bf16.xpose.msra.mxu0 0
          %1922 = vmatprep.subr.bf16.mxu0 0
          %1923 = vmatpush1.bf16.xpose.msra.mxu0 0
          %1924 = vmatprep.subr.bf16.mxu0 0
          %1925 = vmatpush1.bf16.xpose.msra.mxu0 0
          %1926 = vmatprep.subr.bf16.mxu0 0
          %1927 = vmatpush1.bf16.xpose.msra.mxu0 0
          %1928 = vmatprep.subr.bf16.mxu0 0
          %1929 = vmatpush1.bf16.xpose.msra.mxu0 0
          %1930 = vmatprep.subr.bf16.mxu0 0
          %1931 = vmatpush1.bf16.xpose.msra.mxu0 0
          %1932 = vmatprep.subr.bf16.mxu0 0
          %1933 = vmatpush1.bf16.xpose.msra.mxu0 0
          %1934 = vmatprep.mubr.bf16.mxu0 0
          %1935 = vmatmul.mubr.bf16.gmra.mrb[0].mxu0 %v1719
          %v1936 = vpop.f32.mrb[0].mxu0
          %v1937 = vadd.f32 0.0, %v1936
          %v1938 = vpop.f32.mrb[0].mxu0
          %v1939 = vpop.f32.mrb[0].mxu0
          %v1940 = vpop.f32.mrb[0].mxu0
          %1941 = vdwg.mxu0
          %v1943 = vsel %vm1671, %v1591, 0
          %1945 = vmatprep.subr.bf16.mxu0 0
          %1946 = vmatpush1.bf16.xpose.msra.mxu0 %v1943
          %1947 = vmatprep.subr.bf16.mxu0 0
          %1948 = vmatpush1.bf16.xpose.msra.mxu0 0
          %1949 = vmatprep.subr.bf16.mxu0 0
          %1950 = vmatpush1.bf16.xpose.msra.mxu0 0
          %1951 = vmatprep.subr.bf16.mxu0 0
          %1952 = vmatpush1.bf16.xpose.msra.mxu0 0
          %1953 = vmatprep.subr.bf16.mxu0 0
          %1954 = vmatpush1.bf16.xpose.msra.mxu0 0
          %1955 = vmatprep.subr.bf16.mxu0 0
          %1956 = vmatpush1.bf16.xpose.msra.mxu0 0
          %1957 = vmatprep.subr.bf16.mxu0 0
          %1958 = vmatpush1.bf16.xpose.msra.mxu0 0
          %1959 = vmatprep.subr.bf16.mxu0 0
          %1960 = vmatpush1.bf16.xpose.msra.mxu0 0
          %1961 = vmatprep.subr.bf16.mxu0 0
          %1962 = vmatpush1.bf16.xpose.msra.mxu0 0
          %1963 = vmatprep.subr.bf16.mxu0 0
          %1964 = vmatpush1.bf16.xpose.msra.mxu0 0
          %1965 = vmatprep.subr.bf16.mxu0 0
          %1966 = vmatpush1.bf16.xpose.msra.mxu0 0
          %1967 = vmatprep.subr.bf16.mxu0 0
          %1968 = vmatpush1.bf16.xpose.msra.mxu0 0
          %1969 = vmatprep.subr.bf16.mxu0 0
          %1970 = vmatpush1.bf16.xpose.msra.mxu0 0
          %1971 = vmatprep.subr.bf16.mxu0 0
          %1972 = vmatpush1.bf16.xpose.msra.mxu0 0
          %1973 = vmatprep.subr.bf16.mxu0 0
          %1974 = vmatpush1.bf16.xpose.msra.mxu0 0
          %1975 = vmatprep.subr.bf16.mxu0 0
          %1976 = vmatpush1.bf16.xpose.msra.mxu0 0
          %1977 = vmatprep.mubr.bf16.mxu0 0
          %1978 = vmatmul.mubr.bf16.gmra.mrb[0].mxu0 %v1765
          %v1979 = vpop.f32.mrb[0].mxu0
          %v1980 = vadd.f32 0.0, %v1979
          %v1981 = vpop.f32.mrb[0].mxu0
          %v1982 = vpop.f32.mrb[0].mxu0
          %v1983 = vpop.f32.mrb[0].mxu0
          %1984 = vdwg.mxu0
          %v1986 = vsel %vm1671, %v1594, 0
          %1988 = vmatprep.subr.bf16.mxu0 0
          %1989 = vmatpush1.bf16.xpose.msra.mxu0 %v1986
          %1990 = vmatprep.subr.bf16.mxu0 0
          %1991 = vmatpush1.bf16.xpose.msra.mxu0 0
          %1992 = vmatprep.subr.bf16.mxu0 0
          %1993 = vmatpush1.bf16.xpose.msra.mxu0 0
          %1994 = vmatprep.subr.bf16.mxu0 0
          %1995 = vmatpush1.bf16.xpose.msra.mxu0 0
          %1996 = vmatprep.subr.bf16.mxu0 0
          %1997 = vmatpush1.bf16.xpose.msra.mxu0 0
          %1998 = vmatprep.subr.bf16.mxu0 0
          %1999 = vmatpush1.bf16.xpose.msra.mxu0 0
          %2000 = vmatprep.subr.bf16.mxu0 0
          %2001 = vmatpush1.bf16.xpose.msra.mxu0 0
          %2002 = vmatprep.subr.bf16.mxu0 0
          %2003 = vmatpush1.bf16.xpose.msra.mxu0 0
          %2004 = vmatprep.subr.bf16.mxu0 0
          %2005 = vmatpush1.bf16.xpose.msra.mxu0 0
          %2006 = vmatprep.subr.bf16.mxu0 0
          %2007 = vmatpush1.bf16.xpose.msra.mxu0 0
          %2008 = vmatprep.subr.bf16.mxu0 0
          %2009 = vmatpush1.bf16.xpose.msra.mxu0 0
          %2010 = vmatprep.subr.bf16.mxu0 0
          %2011 = vmatpush1.bf16.xpose.msra.mxu0 0
          %2012 = vmatprep.subr.bf16.mxu0 0
          %2013 = vmatpush1.bf16.xpose.msra.mxu0 0
          %2014 = vmatprep.subr.bf16.mxu0 0
          %2015 = vmatpush1.bf16.xpose.msra.mxu0 0
          %2016 = vmatprep.subr.bf16.mxu0 0
          %2017 = vmatpush1.bf16.xpose.msra.mxu0 0
          %2018 = vmatprep.subr.bf16.mxu0 0
          %2019 = vmatpush1.bf16.xpose.msra.mxu0 0
          %2020 = vmatprep.mubr.bf16.mxu0 0
          %2021 = vmatmul.mubr.bf16.gmra.mrb[0].mxu0 %v1811
          %v2022 = vpop.f32.mrb[0].mxu0
          %v2023 = vadd.f32 0.0, %v2022
          %v2024 = vpop.f32.mrb[0].mxu0
          %v2025 = vpop.f32.mrb[0].mxu0
          %v2026 = vpop.f32.mrb[0].mxu0
          %2027 = vdwg.mxu0
          %vm2028 = vcmask 60416
          %v2029 = vsel %vm2028, %v1713, -inf
          %2030 = vmax.xlane.f32.xlu0 %v2029
          %v2031 = vpop.xlane.xlu0 %2030
          %v2032 = vsel %vm2028, %v1759, -inf
          %2033 = vmax.xlane.f32.xlu0 %v2032
          %v2034 = vpop.xlane.xlu0 %2033
          %v2035 = vsel %vm2028, %v1805, -inf
          %2036 = vmax.xlane.f32.xlu0 %v2035
          %v2037 = vpop.xlane.xlu0 %2036
          %v2038 = vsel %vm2028, %v1851, -inf
          %2039 = vmax.xlane.f32.xlu0 %v2038
          %v2040 = vpop.xlane.xlu0 %2039
          %vm2041 = vcmask 27648
          %v2042 = vsel %vm2041, %v1894, -inf
          %2043 = vmax.xlane.f32.xlu0 %v2042
          %v2044 = vpop.xlane.xlu0 %2043
          %v2045 = vsel %vm2041, %v1937, -inf
          %2046 = vmax.xlane.f32.xlu0 %v2045
          %v2047 = vpop.xlane.xlu0 %2046
          %v2048 = vsel %vm2041, %v1980, -inf
          %2049 = vmax.xlane.f32.xlu0 %v2048
          %v2050 = vpop.xlane.xlu0 %2049
          %v2051 = vsel %vm2041, %v2023, -inf
          %2052 = vmax.xlane.f32.xlu0 %v2051
          %v2053 = vpop.xlane.xlu0 %2052
          %v2054 = vmax.f32 %v2031, %v2044
          %v2055 = vmax.f32 %v2034, %v2047
          %v2056 = vmax.f32 %v2037, %v2050
          %v2057 = vmax.f32 %v2040, %v2053
          %v2058 = vsub.f32 %v1713, %v2054
          %v2059 = vsub.f32 %v1759, %v2055
          %v2060 = vsub.f32 %v1805, %v2056
          %v2061 = vsub.f32 %v1851, %v2057
          %v2062 = vmul.f32 %v2058, 1.442695
          %v2063 = vpow.pop %v2062
          %v2064 = vmul.f32 %v2059, 1.442695
          %v2065 = vpow.pop %v2064
          %v2066 = vmul.f32 %v2060, 1.442695
          %v2067 = vpow.pop %v2066
          %v2068 = vmul.f32 %v2061, 1.442695
          %v2069 = vpow.pop %v2068
          %v2070 = vsub.f32 %v1894, %v2054
          %v2071 = vsub.f32 %v1937, %v2055
          %v2072 = vsub.f32 %v1980, %v2056
          %v2073 = vsub.f32 %v2023, %v2057
          %v2074 = vmul.f32 %v2070, 1.442695
          %v2075 = vpow.pop %v2074
          %v2076 = vmul.f32 %v2071, 1.442695
          %v2077 = vpow.pop %v2076
          %v2078 = vmul.f32 %v2072, 1.442695
          %v2079 = vpow.pop %v2078
          %v2080 = vmul.f32 %v2073, 1.442695
          %v2081 = vpow.pop %v2080
          %v2082 = vsel %vm2028, %v2063, 0.0
          %2083 = vadd.xlane.f32.xlu0 %v2082
          %v2084 = vpop.xlane.xlu0 %2083
          %v2085 = vsel %vm2028, %v2065, 0.0
          %2086 = vadd.xlane.f32.xlu0 %v2085
          %v2087 = vpop.xlane.xlu0 %2086
          %v2088 = vsel %vm2028, %v2067, 0.0
          %2089 = vadd.xlane.f32.xlu0 %v2088
          %v2090 = vpop.xlane.xlu0 %2089
          %v2091 = vsel %vm2028, %v2069, 0.0
          %2092 = vadd.xlane.f32.xlu0 %v2091
          %v2093 = vpop.xlane.xlu0 %2092
          %v2094 = vsel %vm2041, %v2075, 0.0
          %2095 = vadd.xlane.f32.xlu0 %v2094
          %v2096 = vpop.xlane.xlu0 %2095
          %v2097 = vsel %vm2041, %v2077, 0.0
          %2098 = vadd.xlane.f32.xlu0 %v2097
          %v2099 = vpop.xlane.xlu0 %2098
          %v2100 = vsel %vm2041, %v2079, 0.0
          %2101 = vadd.xlane.f32.xlu0 %v2100
          %v2102 = vpop.xlane.xlu0 %2101
          %v2103 = vsel %vm2041, %v2081, 0.0
          %2104 = vadd.xlane.f32.xlu0 %v2103
          %v2105 = vpop.xlane.xlu0 %2104
          %v2106 = vadd.f32 %v2084, %v2096
          %v2107 = vadd.f32 %v2087, %v2099
          %v2108 = vadd.f32 %v2090, %v2102
          %v2109 = vadd.f32 %v2093, %v2105
          %v2110 = vpack.c.bf16 %v2063, %v2063
          %v2111 = vpack.c.bf16 %v2065, %v2065
          %v2112 = vpack.c.bf16 %v2067, %v2067
          %v2113 = vpack.c.bf16 %v2069, %v2069
          %v2114 = vpack.c.bf16 %v2075, %v2075
          %v2115 = vpack.c.bf16 %v2077, %v2077
          %v2116 = vpack.c.bf16 %v2079, %v2079
          %v2117 = vpack.c.bf16 %v2081, %v2081
          %vm2118 = vcmask 31744
          %v2120 = vsel %vm2118, %v2114, 0
          %vm2122 = vcmask 1041408
          %v2124 = vsel %vm2122, %v1661, 0
          %2126 = vmatprep.subr.bf16.mxu0 0
          %2127 = vmatpush1.bf16.msra.mxu0 %v2124
          %2128 = vmatprep.subr.bf16.mxu0 0
          %2129 = vmatpush1.bf16.msra.mxu0 0
          %2130 = vmatprep.subr.bf16.mxu0 0
          %2131 = vmatpush1.bf16.msra.mxu0 0
          %2132 = vmatprep.subr.bf16.mxu0 0
          %2133 = vmatpush1.bf16.msra.mxu0 0
          %2134 = vmatprep.subr.bf16.mxu0 0
          %2135 = vmatpush1.bf16.msra.mxu0 0
          %2136 = vmatprep.subr.bf16.mxu0 0
          %2137 = vmatpush1.bf16.msra.mxu0 0
          %2138 = vmatprep.subr.bf16.mxu0 0
          %2139 = vmatpush1.bf16.msra.mxu0 0
          %2140 = vmatprep.subr.bf16.mxu0 0
          %2141 = vmatpush1.bf16.msra.mxu0 0
          %2142 = vmatprep.subr.bf16.mxu0 0
          %2143 = vmatpush1.bf16.msra.mxu0 0
          %2144 = vmatprep.subr.bf16.mxu0 0
          %2145 = vmatpush1.bf16.msra.mxu0 0
          %2146 = vmatprep.subr.bf16.mxu0 0
          %2147 = vmatpush1.bf16.msra.mxu0 0
          %2148 = vmatprep.subr.bf16.mxu0 0
          %2149 = vmatpush1.bf16.msra.mxu0 0
          %2150 = vmatprep.subr.bf16.mxu0 0
          %2151 = vmatpush1.bf16.msra.mxu0 0
          %2152 = vmatprep.subr.bf16.mxu0 0
          %2153 = vmatpush1.bf16.msra.mxu0 0
          %2154 = vmatprep.subr.bf16.mxu0 0
          %2155 = vmatpush1.bf16.msra.mxu0 0
          %2156 = vmatprep.subr.bf16.mxu0 0
          %2157 = vmatpush1.bf16.msra.mxu0 0
          %2158 = vmatprep.mubr.bf16.mxu0 0
          %2159 = vmatmul.mubr.bf16.gmra.mrb[0].mxu0 %v2120
          %v2160 = vpop.f32.mrb[0].mxu0
          %v2161 = vadd.f32 0.0, %v2160
          %v2162 = vpop.f32.mrb[0].mxu0
          %v2163 = vpop.f32.mrb[0].mxu0
          %v2164 = vpop.f32.mrb[0].mxu0
          %2165 = vdwg.mxu0
          %v2167 = vsel %vm2118, %v2115, 0
          %v2170 = vsel %vm2122, %v1664, 0
          %2172 = vmatprep.subr.bf16.mxu0 0
          %2173 = vmatpush1.bf16.msra.mxu0 %v2170
          %2174 = vmatprep.subr.bf16.mxu0 0
          %2175 = vmatpush1.bf16.msra.mxu0 0
          %2176 = vmatprep.subr.bf16.mxu0 0
          %2177 = vmatpush1.bf16.msra.mxu0 0
          %2178 = vmatprep.subr.bf16.mxu0 0
          %2179 = vmatpush1.bf16.msra.mxu0 0
          %2180 = vmatprep.subr.bf16.mxu0 0
          %2181 = vmatpush1.bf16.msra.mxu0 0
          %2182 = vmatprep.subr.bf16.mxu0 0
          %2183 = vmatpush1.bf16.msra.mxu0 0
          %2184 = vmatprep.subr.bf16.mxu0 0
          %2185 = vmatpush1.bf16.msra.mxu0 0
          %2186 = vmatprep.subr.bf16.mxu0 0
          %2187 = vmatpush1.bf16.msra.mxu0 0
          %2188 = vmatprep.subr.bf16.mxu0 0
          %2189 = vmatpush1.bf16.msra.mxu0 0
          %2190 = vmatprep.subr.bf16.mxu0 0
          %2191 = vmatpush1.bf16.msra.mxu0 0
          %2192 = vmatprep.subr.bf16.mxu0 0
          %2193 = vmatpush1.bf16.msra.mxu0 0
          %2194 = vmatprep.subr.bf16.mxu0 0
          %2195 = vmatpush1.bf16.msra.mxu0 0
          %2196 = vmatprep.subr.bf16.mxu0 0
          %2197 = vmatpush1.bf16.msra.mxu0 0
          %2198 = vmatprep.subr.bf16.mxu0 0
          %2199 = vmatpush1.bf16.msra.mxu0 0
          %2200 = vmatprep.subr.bf16.mxu0 0
          %2201 = vmatpush1.bf16.msra.mxu0 0
          %2202 = vmatprep.subr.bf16.mxu0 0
          %2203 = vmatpush1.bf16.msra.mxu0 0
          %2204 = vmatprep.mubr.bf16.mxu0 0
          %2205 = vmatmul.mubr.bf16.gmra.mrb[0].mxu0 %v2167
          %v2206 = vpop.f32.mrb[0].mxu0
          %v2207 = vadd.f32 0.0, %v2206
          %v2208 = vpop.f32.mrb[0].mxu0
          %v2209 = vpop.f32.mrb[0].mxu0
          %v2210 = vpop.f32.mrb[0].mxu0
          %2211 = vdwg.mxu0
          %v2213 = vsel %vm2118, %v2116, 0
          %v2216 = vsel %vm2122, %v1667, 0
          %2218 = vmatprep.subr.bf16.mxu0 0
          %2219 = vmatpush1.bf16.msra.mxu0 %v2216
          %2220 = vmatprep.subr.bf16.mxu0 0
          %2221 = vmatpush1.bf16.msra.mxu0 0
          %2222 = vmatprep.subr.bf16.mxu0 0
          %2223 = vmatpush1.bf16.msra.mxu0 0
          %2224 = vmatprep.subr.bf16.mxu0 0
          %2225 = vmatpush1.bf16.msra.mxu0 0
          %2226 = vmatprep.subr.bf16.mxu0 0
          %2227 = vmatpush1.bf16.msra.mxu0 0
          %2228 = vmatprep.subr.bf16.mxu0 0
          %2229 = vmatpush1.bf16.msra.mxu0 0
          %2230 = vmatprep.subr.bf16.mxu0 0
          %2231 = vmatpush1.bf16.msra.mxu0 0
          %2232 = vmatprep.subr.bf16.mxu0 0
          %2233 = vmatpush1.bf16.msra.mxu0 0
          %2234 = vmatprep.subr.bf16.mxu0 0
          %2235 = vmatpush1.bf16.msra.mxu0 0
          %2236 = vmatprep.subr.bf16.mxu0 0
          %2237 = vmatpush1.bf16.msra.mxu0 0
          %2238 = vmatprep.subr.bf16.mxu0 0
          %2239 = vmatpush1.bf16.msra.mxu0 0
          %2240 = vmatprep.subr.bf16.mxu0 0
          %2241 = vmatpush1.bf16.msra.mxu0 0
          %2242 = vmatprep.subr.bf16.mxu0 0
          %2243 = vmatpush1.bf16.msra.mxu0 0
          %2244 = vmatprep.subr.bf16.mxu0 0
          %2245 = vmatpush1.bf16.msra.mxu0 0
          %2246 = vmatprep.subr.bf16.mxu0 0
          %2247 = vmatpush1.bf16.msra.mxu0 0
          %2248 = vmatprep.subr.bf16.mxu0 0
          %2249 = vmatpush1.bf16.msra.mxu0 0
          %2250 = vmatprep.mubr.bf16.mxu0 0
          %2251 = vmatmul.mubr.bf16.gmra.mrb[0].mxu0 %v2213
          %v2252 = vpop.f32.mrb[0].mxu0
          %v2253 = vadd.f32 0.0, %v2252
          %v2254 = vpop.f32.mrb[0].mxu0
          %v2255 = vpop.f32.mrb[0].mxu0
          %v2256 = vpop.f32.mrb[0].mxu0
          %2257 = vdwg.mxu0
          %v2259 = vsel %vm2118, %v2117, 0
          %v2262 = vsel %vm2122, %v1670, 0
          %2264 = vmatprep.subr.bf16.mxu0 0
          %2265 = vmatpush1.bf16.msra.mxu0 %v2262
          %2266 = vmatprep.subr.bf16.mxu0 0
          %2267 = vmatpush1.bf16.msra.mxu0 0
          %2268 = vmatprep.subr.bf16.mxu0 0
          %2269 = vmatpush1.bf16.msra.mxu0 0
          %2270 = vmatprep.subr.bf16.mxu0 0
          %2271 = vmatpush1.bf16.msra.mxu0 0
          %2272 = vmatprep.subr.bf16.mxu0 0
          %2273 = vmatpush1.bf16.msra.mxu0 0
          %2274 = vmatprep.subr.bf16.mxu0 0
          %2275 = vmatpush1.bf16.msra.mxu0 0
          %2276 = vmatprep.subr.bf16.mxu0 0
          %2277 = vmatpush1.bf16.msra.mxu0 0
          %2278 = vmatprep.subr.bf16.mxu0 0
          %2279 = vmatpush1.bf16.msra.mxu0 0
          %2280 = vmatprep.subr.bf16.mxu0 0
          %2281 = vmatpush1.bf16.msra.mxu0 0
          %2282 = vmatprep.subr.bf16.mxu0 0
          %2283 = vmatpush1.bf16.msra.mxu0 0
          %2284 = vmatprep.subr.bf16.mxu0 0
          %2285 = vmatpush1.bf16.msra.mxu0 0
          %2286 = vmatprep.subr.bf16.mxu0 0
          %2287 = vmatpush1.bf16.msra.mxu0 0
          %2288 = vmatprep.subr.bf16.mxu0 0
          %2289 = vmatpush1.bf16.msra.mxu0 0
          %2290 = vmatprep.subr.bf16.mxu0 0
          %2291 = vmatpush1.bf16.msra.mxu0 0
          %2292 = vmatprep.subr.bf16.mxu0 0
          %2293 = vmatpush1.bf16.msra.mxu0 0
          %2294 = vmatprep.subr.bf16.mxu0 0
          %2295 = vmatpush1.bf16.msra.mxu0 0
          %2296 = vmatprep.mubr.bf16.mxu0 0
          %2297 = vmatmul.mubr.bf16.gmra.mrb[0].mxu0 %v2259
          %v2298 = vpop.f32.mrb[0].mxu0
          %v2299 = vadd.f32 0.0, %v2298
          %v2300 = vpop.f32.mrb[0].mxu0
          %v2301 = vpop.f32.mrb[0].mxu0
          %v2302 = vpop.f32.mrb[0].mxu0
          %2303 = vdwg.mxu0
          %vm2304 = vcmask 64512
          %v2306 = vsel %vm2304, %v2110, 0
          %vm2308 = vcmask 1043456
          %v2310 = vsel %vm2308, %v1511, 0
          %2312 = vmatprep.subr.bf16.mxu0 0
          %2313 = vmatpush1.bf16.msra.mxu0 %v2310
          %2314 = vmatprep.subr.bf16.mxu0 0
          %2315 = vmatpush1.bf16.msra.mxu0 0
          %2316 = vmatprep.subr.bf16.mxu0 0
          %2317 = vmatpush1.bf16.msra.mxu0 0
          %2318 = vmatprep.subr.bf16.mxu0 0
          %2319 = vmatpush1.bf16.msra.mxu0 0
          %2320 = vmatprep.subr.bf16.mxu0 0
          %2321 = vmatpush1.bf16.msra.mxu0 0
          %2322 = vmatprep.subr.bf16.mxu0 0
          %2323 = vmatpush1.bf16.msra.mxu0 0
          %2324 = vmatprep.subr.bf16.mxu0 0
          %2325 = vmatpush1.bf16.msra.mxu0 0
          %2326 = vmatprep.subr.bf16.mxu0 0
          %2327 = vmatpush1.bf16.msra.mxu0 0
          %2328 = vmatprep.subr.bf16.mxu0 0
          %2329 = vmatpush1.bf16.msra.mxu0 0
          %2330 = vmatprep.subr.bf16.mxu0 0
          %2331 = vmatpush1.bf16.msra.mxu0 0
          %2332 = vmatprep.subr.bf16.mxu0 0
          %2333 = vmatpush1.bf16.msra.mxu0 0
          %2334 = vmatprep.subr.bf16.mxu0 0
          %2335 = vmatpush1.bf16.msra.mxu0 0
          %2336 = vmatprep.subr.bf16.mxu0 0
          %2337 = vmatpush1.bf16.msra.mxu0 0
          %2338 = vmatprep.subr.bf16.mxu0 0
          %2339 = vmatpush1.bf16.msra.mxu0 0
          %2340 = vmatprep.subr.bf16.mxu0 0
          %2341 = vmatpush1.bf16.msra.mxu0 0
          %2342 = vmatprep.subr.bf16.mxu0 0
          %2343 = vmatpush1.bf16.msra.mxu0 0
          %2344 = vmatprep.mubr.bf16.mxu0 0
          %2345 = vmatmul.mubr.bf16.gmra.mrb[0].mxu0 %v2306
          %v2346 = vpop.f32.mrb[0].mxu0
          %v2347 = vadd.f32 %v2161, %v2346
          %v2348 = vpop.f32.mrb[0].mxu0
          %v2349 = vpop.f32.mrb[0].mxu0
          %v2350 = vpop.f32.mrb[0].mxu0
          %2351 = vdwg.mxu0
          %v2353 = vsel %vm2304, %v2111, 0
          %v2356 = vsel %vm2308, %v1514, 0
          %2358 = vmatprep.subr.bf16.mxu0 0
          %2359 = vmatpush1.bf16.msra.mxu0 %v2356
          %2360 = vmatprep.subr.bf16.mxu0 0
          %2361 = vmatpush1.bf16.msra.mxu0 0
          %2362 = vmatprep.subr.bf16.mxu0 0
          %2363 = vmatpush1.bf16.msra.mxu0 0
          %2364 = vmatprep.subr.bf16.mxu0 0
          %2365 = vmatpush1.bf16.msra.mxu0 0
          %2366 = vmatprep.subr.bf16.mxu0 0
          %2367 = vmatpush1.bf16.msra.mxu0 0
          %2368 = vmatprep.subr.bf16.mxu0 0
          %2369 = vmatpush1.bf16.msra.mxu0 0
          %2370 = vmatprep.subr.bf16.mxu0 0
          %2371 = vmatpush1.bf16.msra.mxu0 0
          %2372 = vmatprep.subr.bf16.mxu0 0
          %2373 = vmatpush1.bf16.msra.mxu0 0
          %2374 = vmatprep.subr.bf16.mxu0 0
          %2375 = vmatpush1.bf16.msra.mxu0 0
          %2376 = vmatprep.subr.bf16.mxu0 0
          %2377 = vmatpush1.bf16.msra.mxu0 0
          %2378 = vmatprep.subr.bf16.mxu0 0
          %2379 = vmatpush1.bf16.msra.mxu0 0
          %2380 = vmatprep.subr.bf16.mxu0 0
          %2381 = vmatpush1.bf16.msra.mxu0 0
          %2382 = vmatprep.subr.bf16.mxu0 0
          %2383 = vmatpush1.bf16.msra.mxu0 0
          %2384 = vmatprep.subr.bf16.mxu0 0
          %2385 = vmatpush1.bf16.msra.mxu0 0
          %2386 = vmatprep.subr.bf16.mxu0 0
          %2387 = vmatpush1.bf16.msra.mxu0 0
          %2388 = vmatprep.subr.bf16.mxu0 0
          %2389 = vmatpush1.bf16.msra.mxu0 0
          %2390 = vmatprep.mubr.bf16.mxu0 0
          %2391 = vmatmul.mubr.bf16.gmra.mrb[0].mxu0 %v2353
          %v2392 = vpop.f32.mrb[0].mxu0
          %v2393 = vadd.f32 %v2207, %v2392
          %v2394 = vpop.f32.mrb[0].mxu0
          %v2395 = vpop.f32.mrb[0].mxu0
          %v2396 = vpop.f32.mrb[0].mxu0
          %2397 = vdwg.mxu0
          %v2399 = vsel %vm2304, %v2112, 0
          %v2402 = vsel %vm2308, %v1517, 0
          %2404 = vmatprep.subr.bf16.mxu0 0
          %2405 = vmatpush1.bf16.msra.mxu0 %v2402
          %2406 = vmatprep.subr.bf16.mxu0 0
          %2407 = vmatpush1.bf16.msra.mxu0 0
          %2408 = vmatprep.subr.bf16.mxu0 0
          %2409 = vmatpush1.bf16.msra.mxu0 0
          %2410 = vmatprep.subr.bf16.mxu0 0
          %2411 = vmatpush1.bf16.msra.mxu0 0
          %2412 = vmatprep.subr.bf16.mxu0 0
          %2413 = vmatpush1.bf16.msra.mxu0 0
          %2414 = vmatprep.subr.bf16.mxu0 0
          %2415 = vmatpush1.bf16.msra.mxu0 0
          %2416 = vmatprep.subr.bf16.mxu0 0
          %2417 = vmatpush1.bf16.msra.mxu0 0
          %2418 = vmatprep.subr.bf16.mxu0 0
          %2419 = vmatpush1.bf16.msra.mxu0 0
          %2420 = vmatprep.subr.bf16.mxu0 0
          %2421 = vmatpush1.bf16.msra.mxu0 0
          %2422 = vmatprep.subr.bf16.mxu0 0
          %2423 = vmatpush1.bf16.msra.mxu0 0
          %2424 = vmatprep.subr.bf16.mxu0 0
          %2425 = vmatpush1.bf16.msra.mxu0 0
          %2426 = vmatprep.subr.bf16.mxu0 0
          %2427 = vmatpush1.bf16.msra.mxu0 0
          %2428 = vmatprep.subr.bf16.mxu0 0
          %2429 = vmatpush1.bf16.msra.mxu0 0
          %2430 = vmatprep.subr.bf16.mxu0 0
          %2431 = vmatpush1.bf16.msra.mxu0 0
          %2432 = vmatprep.subr.bf16.mxu0 0
          %2433 = vmatpush1.bf16.msra.mxu0 0
          %2434 = vmatprep.subr.bf16.mxu0 0
          %2435 = vmatpush1.bf16.msra.mxu0 0
          %2436 = vmatprep.mubr.bf16.mxu0 0
          %2437 = vmatmul.mubr.bf16.gmra.mrb[0].mxu0 %v2399
          %v2438 = vpop.f32.mrb[0].mxu0
          %v2439 = vadd.f32 %v2253, %v2438
          %v2440 = vpop.f32.mrb[0].mxu0
          %v2441 = vpop.f32.mrb[0].mxu0
          %v2442 = vpop.f32.mrb[0].mxu0
          %2443 = vdwg.mxu0
          %v2445 = vsel %vm2304, %v2113, 0
          %v2448 = vsel %vm2308, %v1520, 0
          %2450 = vmatprep.subr.bf16.mxu0 0
          %2451 = vmatpush1.bf16.msra.mxu0 %v2448
          %2452 = vmatprep.subr.bf16.mxu0 0
          %2453 = vmatpush1.bf16.msra.mxu0 0
          %2454 = vmatprep.subr.bf16.mxu0 0
          %2455 = vmatpush1.bf16.msra.mxu0 0
          %2456 = vmatprep.subr.bf16.mxu0 0
          %2457 = vmatpush1.bf16.msra.mxu0 0
          %2458 = vmatprep.subr.bf16.mxu0 0
          %2459 = vmatpush1.bf16.msra.mxu0 0
          %2460 = vmatprep.subr.bf16.mxu0 0
          %2461 = vmatpush1.bf16.msra.mxu0 0
          %2462 = vmatprep.subr.bf16.mxu0 0
          %2463 = vmatpush1.bf16.msra.mxu0 0
          %2464 = vmatprep.subr.bf16.mxu0 0
          %2465 = vmatpush1.bf16.msra.mxu0 0
          %2466 = vmatprep.subr.bf16.mxu0 0
          %2467 = vmatpush1.bf16.msra.mxu0 0
          %2468 = vmatprep.subr.bf16.mxu0 0
          %2469 = vmatpush1.bf16.msra.mxu0 0
          %2470 = vmatprep.subr.bf16.mxu0 0
          %2471 = vmatpush1.bf16.msra.mxu0 0
          %2472 = vmatprep.subr.bf16.mxu0 0
          %2473 = vmatpush1.bf16.msra.mxu0 0
          %2474 = vmatprep.subr.bf16.mxu0 0
          %2475 = vmatpush1.bf16.msra.mxu0 0
          %2476 = vmatprep.subr.bf16.mxu0 0
          %2477 = vmatpush1.bf16.msra.mxu0 0
          %2478 = vmatprep.subr.bf16.mxu0 0
          %2479 = vmatpush1.bf16.msra.mxu0 0
          %2480 = vmatprep.subr.bf16.mxu0 0
          %2481 = vmatpush1.bf16.msra.mxu0 0
          %2482 = vmatprep.mubr.bf16.mxu0 0
          %2483 = vmatmul.mubr.bf16.gmra.mrb[0].mxu0 %v2445
          %v2484 = vpop.f32.mrb[0].mxu0
          %v2485 = vadd.f32 %v2299, %v2484
          %v2486 = vpop.f32.mrb[0].mxu0
          %v2487 = vpop.f32.mrb[0].mxu0
          %v2488 = vpop.f32.mrb[0].mxu0
          %2489 = vdwg.mxu0
          %v2490 = vrcp.pop %v2106
          %v2491 = vrcp.pop %v2107
          %v2492 = vrcp.pop %v2108
          %v2493 = vrcp.pop %v2109
          %v2494 = vmul.f32 %v2347, %v2490
          %v2495 = vmul.f32 %v2393, %v2491
          %v2496 = vmul.f32 %v2439, %v2492
          %v2497 = vmul.f32 %v2485, %v2493
          %v2498 = vcombine.low %v2494, %v2496
          %v2500 = vunpack.c.l.s4 1983009808
          %v2501 = vunpack.c.0.s8 %v2500
          %v2502 = vlaneseq
          %v2503 = vshrl.u32 %v2502, 7
          %v2504 = vsub.s32 %v2501, %v2503
          %v2505 = vrot.slane %v2498, %v2504
          %v2506 = vcombine.low %v2495, %v2497
          %v2508 = vunpack.c.l.s4 1983009808
          %v2509 = vunpack.c.0.s8 %v2508
          %v2510 = vlaneseq
          %v2511 = vshrl.u32 %v2510, 7
          %v2512 = vsub.s32 %v2509, %v2511
          %v2513 = vrot.slane %v2506, %v2512
          %v2514 = vcombine.low %v2505, %v2513
          %v2515 = vcombine.high %v2505, %v2513
          %v2517 = vunpack.c.l.s4 1934713408
          %v2518 = vunpack.c.0.s8 %v2517
          %v2519 = vlaneseq
          %v2520 = vshrl.u32 %v2519, 7
          %v2521 = vsub.s32 %v2518, %v2520
          %v2522 = vrot.slane %v2514, %v2521
          %v2524 = vunpack.c.l.s4 1934713408
          %v2525 = vunpack.c.0.s8 %v2524
          %v2526 = vlaneseq
          %v2527 = vshrl.u32 %v2526, 7
          %v2528 = vsub.s32 %v2525, %v2527
          %v2529 = vrot.slane %v2515, %v2528
          %v2530 = vcombine.high %v2522, 0.0
          %v2531 = vcombine.high %v2529, 0.0
          %v2532 = vcombine.low %v2522, %v2529
          %v2534 = vunpack.c.l.s4 1983009808
          %v2535 = vunpack.c.0.s8 %v2534
          %v2536 = vlaneseq
          %v2537 = vshrl.u32 %v2536, 7
          %v2538 = vsub.s32 %v2535, %v2537
          %v2539 = vrot.slane %v2532, %v2538
          %v2540 = vcombine.low %v2530, %v2531
          %v2542 = vunpack.c.l.s4 1983009808
          %v2543 = vunpack.c.0.s8 %v2542
          %v2544 = vlaneseq
          %v2545 = vshrl.u32 %v2544, 7
          %v2546 = vsub.s32 %v2543, %v2545
          %v2547 = vrot.slane %v2540, %v2546
          %v2548 = vcombine.low %v2539, %v2547
          %v2549 = vcombine.high %v2539, %v2547
          %v2551 = vunpack.c.l.s4 1934713408
          %v2552 = vunpack.c.0.s8 %v2551
          %v2553 = vlaneseq
          %v2554 = vshrl.u32 %v2553, 7
          %v2555 = vsub.s32 %v2552, %v2554
          %v2556 = vrot.slane %v2548, %v2555
          %v2558 = vunpack.c.l.s4 1934713408
          %v2559 = vunpack.c.0.s8 %v2558
          %v2560 = vlaneseq
          %v2561 = vshrl.u32 %v2560, 7
          %v2562 = vsub.s32 %v2559, %v2561
          %v2563 = vrot.slane %v2549, %v2562
          %v2564 = vcombine.high %v2556, 0.0
          %v2565 = vcombine.high %v2563, 0.0
          %2567 = vrot.lane.b32.xlu0 %v2564, 16
          %v2568 = vpop.permute.xlu0 %2567
          %2571 = vrot.lane.b32.xlu0 %v2563, 32
          %v2572 = vpop.permute.xlu0 %2571
          %2575 = vrot.lane.b32.xlu0 %v2565, 48
          %v2576 = vpop.permute.xlu0 %2575
          %v2578 = vsel %vm1671, %v2556, %v2568
          %vm2579 = vcmask 261120
          %v2580 = vsel %vm2579, %v2578, %v2572
          %vm2581 = vcmask 392192
          %v2582 = vsel %vm2581, %v2580, %v2576
          %v2583 = vpack.c.bf16 %v2582, %v2582
          %v2584 = vld [vmem:[%s819] sm:$0xf]
          %v2585 = vld [vmem:[%s819 + $0x4] sm:$0xf]
          %v2586 = vld [vmem:[%s819 + $0x8] sm:$0xf]
          %v2587 = vld [vmem:[%s819 + $0xc] sm:$0xf]
          %v2588 = vld [vmem:[%s819 + $0x10] sm:$0xf]
          %v2589 = vld [vmem:[%s819 + $0x14] sm:$0xf]
          %v2590 = vld [vmem:[%s819 + $0x18] sm:$0xf]
          %v2591 = vld [vmem:[%s819 + $0x1c] sm:$0xf]
          %v2600 = vunpack.c.l.b16 %v2584
          %v2601 = vunpack.c.l.b16 %v2585
          %v2602 = vunpack.c.l.b16 %v2586
          %v2603 = vunpack.c.l.b16 %v2587
          %v2604 = vunpack.c.l.b16 %v2588
          %v2605 = vunpack.c.l.b16 %v2589
          %v2606 = vunpack.c.l.b16 %v2590
          %v2607 = vunpack.c.l.b16 %v2591
          %v2608 = vpack.c.b16 %v2601, %v2600
          %v2609 = vpack.c.b16 %v2603, %v2602
          %v2610 = vpack.c.b16 %v2605, %v2604
          %v2611 = vpack.c.b16 %v2607, %v2606
          %v2617 = vsel %vm854, %v2583, 0
          %2619 = vmatprep.subr.bf16.mxu0 0
          %2620 = vmatpush1.bf16.msra.mxu0 %v2608
          %2621 = vmatprep.subr.bf16.mxu0 0
          %2622 = vmatpush1.bf16.msra.mxu0 %v2609
          %2623 = vmatprep.subr.bf16.mxu0 0
          %2624 = vmatpush1.bf16.msra.mxu0 %v2610
          %2625 = vmatprep.subr.bf16.mxu0 0
          %2626 = vmatpush1.bf16.msra.mxu0 %v2611
          %2627 = vmatprep.subr.bf16.mxu0 0
          %2628 = vmatpush1.bf16.msra.mxu0 0
          %2629 = vmatprep.subr.bf16.mxu0 0
          %2630 = vmatpush1.bf16.msra.mxu0 0
          %2631 = vmatprep.subr.bf16.mxu0 0
          %2632 = vmatpush1.bf16.msra.mxu0 0
          %2633 = vmatprep.subr.bf16.mxu0 0
          %2634 = vmatpush1.bf16.msra.mxu0 0
          %2635 = vmatprep.subr.bf16.mxu0 0
          %2636 = vmatpush1.bf16.msra.mxu0 0
          %2637 = vmatprep.subr.bf16.mxu0 0
          %2638 = vmatpush1.bf16.msra.mxu0 0
          %2639 = vmatprep.subr.bf16.mxu0 0
          %2640 = vmatpush1.bf16.msra.mxu0 0
          %2641 = vmatprep.subr.bf16.mxu0 0
          %2642 = vmatpush1.bf16.msra.mxu0 0
          %2643 = vmatprep.subr.bf16.mxu0 0
          %2644 = vmatpush1.bf16.msra.mxu0 0
          %2645 = vmatprep.subr.bf16.mxu0 0
          %2646 = vmatpush1.bf16.msra.mxu0 0
          %2647 = vmatprep.subr.bf16.mxu0 0
          %2648 = vmatpush1.bf16.msra.mxu0 0
          %2649 = vmatprep.subr.bf16.mxu0 0
          %2650 = vmatpush1.bf16.msra.mxu0 0
          %2651 = vmatprep.mubr.bf16.mxu0 0
          %2652 = vmatmul.mubr.bf16.gmra.mrb[0].mxu0 %v2617
          %v2653 = vpop.f32.mrb[0].mxu0
          %v2654 = vadd.f32 0.0, %v2653
          %v2655 = vpop.f32.mrb[0].mxu0
          %v2656 = vpop.f32.mrb[0].mxu0
          %v2657 = vpop.f32.mrb[0].mxu0
          %2658 = vdwg.mxu0
          %v2659 = vadd.f32 %v2654, %v850
          %2660 = vst.msk [vmem:[#allocation2] sm:$0xf] %vm886, %v2659
          %v2661 = vld [vmem:[%s822] sm:$0x1]
          %v2662 = vld [vmem:[%s825] sm:$0x1]
          %v2663 = vsel %vm886, %v2659, 0.0
          %2664 = vadd.xlane.f32.xlu0 %v2663
          %v2665 = vpop.xlane.xlu0 %2664
          %v2666 = vmul.f32 %v2665, %v858
          %v2667 = vsub.f32 %v2659, %v2666
          %v2668 = vmul.f32 %v2667, %v2667
          %v2669 = vsel %vm886, %v2668, 0.0
          %2670 = vadd.xlane.f32.xlu0 %v2669
          %v2671 = vpop.xlane.xlu0 %2670
          %v2672 = vmul.f32 %v2671, %v858
          %v2673 = vadd.f32 %v2672, 1e-05
          %v2674 = vrsqrt.pop %v2673
          %v2675 = vmul.f32 %v2667, %v2674
          %v2677 = vlaneseq
          %v2678 = vshrl.u32 %v2677, 7
          %v2679 = vsub.s32 0, %v2678
          %v2680 = vrot.slane %v2661, %v2679
          %v2682 = vmul.f32 %v2675, %v2680
          %v2684 = vlaneseq
          %v2685 = vshrl.u32 %v2684, 7
          %v2686 = vsub.s32 0, %v2685
          %v2687 = vrot.slane %v2662, %v2686
          %v2689 = vadd.f32 %v2682, %v2687
          %v2690 = vpack.c.bf16 %v2689, %v2689
          %vm2691 = vcmask 517120
          %2692 = vst.msk [vmem:[#allocation3] sm:$0x3] %vm2691, %v2690
        $region137: #{tpu_custom_call.1} parent=124 // pred_fallthru
          _
        %v2693 = vld [vmem:[#allocation3] sm:$0x3]
        %v2694 = vld [vmem:[%s694] sm:$0xf]
        %v2695 = vld [vmem:[%s694 + $0x4] sm:$0xf]
        %v2696 = vld [vmem:[%s694 + $0x8] sm:$0xf]
        %v2697 = vld [vmem:[%s694 + $0xc] sm:$0xf]
        %v2698 = vld [vmem:[%s694 + $0x10] sm:$0xf]
        %v2699 = vld [vmem:[%s694 + $0x14] sm:$0xf]
        %v2700 = vld [vmem:[%s694 + $0x18] sm:$0xf]
        %v2701 = vld [vmem:[%s694 + $0x1c] sm:$0xf]
        %v2710 = vunpack.c.l.b16 %v2694
        %v2711 = vunpack.c.l.b16 %v2695
        %v2712 = vunpack.c.l.b16 %v2696
        %v2713 = vunpack.c.l.b16 %v2697
        %v2714 = vunpack.c.l.b16 %v2698
        %v2715 = vunpack.c.l.b16 %v2699
        %v2716 = vunpack.c.l.b16 %v2700
        %v2717 = vunpack.c.l.b16 %v2701
        %v2718 = vpack.c.b16 %v2711, %v2710
        %v2719 = vpack.c.b16 %v2713, %v2712
        %v2720 = vpack.c.b16 %v2715, %v2714
        %v2721 = vpack.c.b16 %v2717, %v2716
        %vm2726 = vcmask 523264
        %v2728 = vsel %vm2726, %v2693, 0
        %2730 = vmatprep.subr.bf16.mxu0 0
        %2731 = vmatpush1.bf16.msra.mxu0 %v2718
        %2732 = vmatprep.subr.bf16.mxu0 0
        %2733 = vmatpush1.bf16.msra.mxu0 %v2719
        %2734 = vmatprep.subr.bf16.mxu0 0
        %2735 = vmatpush1.bf16.msra.mxu0 %v2720
        %2736 = vmatprep.subr.bf16.mxu0 0
        %2737 = vmatpush1.bf16.msra.mxu0 %v2721
        %2738 = vmatprep.subr.bf16.mxu0 0
        %2739 = vmatpush1.bf16.msra.mxu0 0
        %2740 = vmatprep.subr.bf16.mxu0 0
        %2741 = vmatpush1.bf16.msra.mxu0 0
        %2742 = vmatprep.subr.bf16.mxu0 0
        %2743 = vmatpush1.bf16.msra.mxu0 0
        %2744 = vmatprep.subr.bf16.mxu0 0
        %2745 = vmatpush1.bf16.msra.mxu0 0
        %2746 = vmatprep.subr.bf16.mxu0 0
        %2747 = vmatpush1.bf16.msra.mxu0 0
        %2748 = vmatprep.subr.bf16.mxu0 0
        %2749 = vmatpush1.bf16.msra.mxu0 0
        %2750 = vmatprep.subr.bf16.mxu0 0
        %2751 = vmatpush1.bf16.msra.mxu0 0
        %2752 = vmatprep.subr.bf16.mxu0 0
        %2753 = vmatpush1.bf16.msra.mxu0 0
        %2754 = vmatprep.subr.bf16.mxu0 0
        %2755 = vmatpush1.bf16.msra.mxu0 0
        %2756 = vmatprep.subr.bf16.mxu0 0
        %2757 = vmatpush1.bf16.msra.mxu0 0
        %2758 = vmatprep.subr.bf16.mxu0 0
        %2759 = vmatpush1.bf16.msra.mxu0 0
        %2760 = vmatprep.subr.bf16.mxu0 0
        %2761 = vmatpush1.bf16.msra.mxu0 0
        %2762 = vmatprep.mubr.bf16.mxu0 0
        %2763 = vmatmul.mubr.bf16.gmra.mrb[0].mxu0 %v2728
        %v2764 = vpop.f32.mrb[0].mxu0
        %v2765 = vadd.f32 0.0, %v2764
        %v2766 = vpop.f32.mrb[0].mxu0
        %v2767 = vpop.f32.mrb[0].mxu0
        %v2768 = vpop.f32.mrb[0].mxu0
        %2769 = vdwg.mxu0
        %v2770 = vmul.f32 %v2765, 0.5
        %v2771 = vmul.f32 %v2765, 0.70710677
        %v2772 = verf.f32.pop %v2771
        %v2773 = vadd.f32 %v2772, 1.0
        %v2774 = vmul.f32 %v2770, %v2773
        %v2775 = vpack.c.bf16 %v2774, %v2774
        %v2776 = vld [vmem:[%s834] sm:$0xf]
        %v2777 = vld [vmem:[%s834 + $0x4] sm:$0xf]
        %v2778 = vld [vmem:[%s834 + $0x8] sm:$0xf]
        %v2779 = vld [vmem:[%s834 + $0xc] sm:$0xf]
        %v2780 = vld [vmem:[%s834 + $0x10] sm:$0xf]
        %v2781 = vld [vmem:[%s834 + $0x14] sm:$0xf]
        %v2782 = vld [vmem:[%s834 + $0x18] sm:$0xf]
        %v2783 = vld [vmem:[%s834 + $0x1c] sm:$0xf]
        %v2784 = vld [vmem:[%s834 + $0x20] sm:$0xf]
        %v2785 = vld [vmem:[%s834 + $0x24] sm:$0xf]
        %v2786 = vld [vmem:[%s834 + $0x28] sm:$0xf]
        %v2787 = vld [vmem:[%s834 + $0x2c] sm:$0xf]
        %v2788 = vld [vmem:[%s834 + $0x30] sm:$0xf]
        %v2789 = vld [vmem:[%s834 + $0x34] sm:$0xf]
        %v2790 = vld [vmem:[%s834 + $0x38] sm:$0xf]
        %v2791 = vld [vmem:[%s834 + $0x3c] sm:$0xf]
        %v2808 = vunpack.c.l.b16 %v2776
        %v2809 = vunpack.c.l.b16 %v2777
        %v2810 = vunpack.c.l.b16 %v2778
        %v2811 = vunpack.c.l.b16 %v2779
        %v2812 = vunpack.c.l.b16 %v2780
        %v2813 = vunpack.c.l.b16 %v2781
        %v2814 = vunpack.c.l.b16 %v2782
        %v2815 = vunpack.c.l.b16 %v2783
        %v2816 = vunpack.c.l.b16 %v2784
        %v2817 = vunpack.c.l.b16 %v2785
        %v2818 = vunpack.c.l.b16 %v2786
        %v2819 = vunpack.c.l.b16 %v2787
        %v2820 = vunpack.c.l.b16 %v2788
        %v2821 = vunpack.c.l.b16 %v2789
        %v2822 = vunpack.c.l.b16 %v2790
        %v2823 = vunpack.c.l.b16 %v2791
        %v2824 = vpack.c.b16 %v2809, %v2808
        %v2825 = vpack.c.b16 %v2811, %v2810
        %v2826 = vpack.c.b16 %v2813, %v2812
        %v2827 = vpack.c.b16 %v2815, %v2814
        %v2828 = vpack.c.b16 %v2817, %v2816
        %v2829 = vpack.c.b16 %v2819, %v2818
        %v2830 = vpack.c.b16 %v2821, %v2820
        %v2831 = vpack.c.b16 %v2823, %v2822
        %2840 = vmatprep.subr.bf16.mxu0 0
        %2841 = vmatpush1.bf16.msra.mxu0 %v2824
        %2842 = vmatprep.subr.bf16.mxu0 0
        %2843 = vmatpush1.bf16.msra.mxu0 %v2825
        %2844 = vmatprep.subr.bf16.mxu0 0
        %2845 = vmatpush1.bf16.msra.mxu0 %v2826
        %2846 = vmatprep.subr.bf16.mxu0 0
        %2847 = vmatpush1.bf16.msra.mxu0 %v2827
        %2848 = vmatprep.subr.bf16.mxu0 0
        %2849 = vmatpush1.bf16.msra.mxu0 %v2828
        %2850 = vmatprep.subr.bf16.mxu0 0
        %2851 = vmatpush1.bf16.msra.mxu0 %v2829
        %2852 = vmatprep.subr.bf16.mxu0 0
        %2853 = vmatpush1.bf16.msra.mxu0 %v2830
        %2854 = vmatprep.subr.bf16.mxu0 0
        %2855 = vmatpush1.bf16.msra.mxu0 %v2831
        %2856 = vmatprep.subr.bf16.mxu0 0
        %2857 = vmatpush1.bf16.msra.mxu0 0
        %2858 = vmatprep.subr.bf16.mxu0 0
        %2859 = vmatpush1.bf16.msra.mxu0 0
        %2860 = vmatprep.subr.bf16.mxu0 0
        %2861 = vmatpush1.bf16.msra.mxu0 0
        %2862 = vmatprep.subr.bf16.mxu0 0
        %2863 = vmatpush1.bf16.msra.mxu0 0
        %2864 = vmatprep.subr.bf16.mxu0 0
        %2865 = vmatpush1.bf16.msra.mxu0 0
        %2866 = vmatprep.subr.bf16.mxu0 0
        %2867 = vmatpush1.bf16.msra.mxu0 0
        %2868 = vmatprep.subr.bf16.mxu0 0
        %2869 = vmatpush1.bf16.msra.mxu0 0
        %2870 = vmatprep.subr.bf16.mxu0 0
        %2871 = vmatpush1.bf16.msra.mxu0 0
        %2872 = vmatprep.mubr.bf16.mxu0 0
        %2873 = vmatmul.mubr.bf16.gmra.mrb[0].mxu0 %v2775
        %v2874 = vpop.f32.mrb[0].mxu0
        %v2875 = vadd.f32 0.0, %v2874
        %v2876 = vpop.f32.mrb[0].mxu0
        %v2877 = vpop.f32.mrb[0].mxu0
        %v2878 = vpop.f32.mrb[0].mxu0
        %2879 = vdwg.mxu0
        %v2880 = vld [vmem:[#allocation2] sm:$0xf]
        %v2881 = vadd.f32 %v2880, %v2875
        %vm2882 = vcmask 519168
        %2883 = vst.msk [vmem:[#allocation2] sm:$0xf] %vm2882, %v2881
        %p2884 = scmp.eq.s32.totalorder %s37, 1
        %p2885 = scmp.eq.s32.totalorder %s38, 1
        %p2886 = pnand %p2884, %p2885
        %p2887 = pneg %p2886
        // Predicated region
        $region138: #{tpu_custom_call.1} parent=124 // pred_check
          _
        $region139: #{tpu_custom_call.1} parent=124 // pred_check_branch
          %2889 = sbr.rel (%p2886) target = $region141
        $region140: #{tpu_custom_call.1} parent=124 // pred_region
          %v2890 = vld [vmem:[#allocation2] sm:$0xf]
          %v2891 = vpack.c.bf16 %v2890, %v2890
          %v2892 = vld [vmem:[%s13] sm:$0xf]
          %v2893 = vld [vmem:[%s13 + $0x4] sm:$0xf]
          %v2894 = vld [vmem:[%s13 + $0x8] sm:$0xf]
          %v2895 = vld [vmem:[%s13 + $0xc] sm:$0xf]
          %v2896 = vld [vmem:[%s13 + $0x10] sm:$0xf]
          %v2897 = vld [vmem:[%s13 + $0x14] sm:$0xf]
          %v2898 = vld [vmem:[%s13 + $0x18] sm:$0xf]
          %v2899 = vld [vmem:[%s13 + $0x1c] sm:$0xf]
          %v2900 = vld [vmem:[%s14] sm:$0x1]
          %v2902 = vlaneseq
          %v2903 = vshrl.u32 %v2902, 7
          %v2904 = vsub.s32 0, %v2903
          %v2905 = vrot.slane %v2900, %v2904
          %v2915 = vunpack.c.l.b16 %v2892
          %v2916 = vunpack.c.l.b16 %v2893
          %v2917 = vunpack.c.l.b16 %v2894
          %v2918 = vunpack.c.l.b16 %v2895
          %v2919 = vunpack.c.l.b16 %v2896
          %v2920 = vunpack.c.l.b16 %v2897
          %v2921 = vunpack.c.l.b16 %v2898
          %v2922 = vunpack.c.l.b16 %v2899
          %v2923 = vpack.c.b16 %v2916, %v2915
          %v2924 = vpack.c.b16 %v2918, %v2917
          %v2925 = vpack.c.b16 %v2920, %v2919
          %v2926 = vpack.c.b16 %v2922, %v2921
          %v2932 = vsel %vm2726, %v2891, 0
          %2934 = vmatprep.subr.bf16.mxu0 0
          %2935 = vmatpush1.bf16.msra.mxu0 %v2923
          %2936 = vmatprep.subr.bf16.mxu0 0
          %2937 = vmatpush1.bf16.msra.mxu0 %v2924
          %2938 = vmatprep.subr.bf16.mxu0 0
          %2939 = vmatpush1.bf16.msra.mxu0 %v2925
          %2940 = vmatprep.subr.bf16.mxu0 0
          %2941 = vmatpush1.bf16.msra.mxu0 %v2926
          %2942 = vmatprep.subr.bf16.mxu0 0
          %2943 = vmatpush1.bf16.msra.mxu0 0
          %2944 = vmatprep.subr.bf16.mxu0 0
          %2945 = vmatpush1.bf16.msra.mxu0 0
          %2946 = vmatprep.subr.bf16.mxu0 0
          %2947 = vmatpush1.bf16.msra.mxu0 0
          %2948 = vmatprep.subr.bf16.mxu0 0
          %2949 = vmatpush1.bf16.msra.mxu0 0
          %2950 = vmatprep.subr.bf16.mxu0 0
          %2951 = vmatpush1.bf16.msra.mxu0 0
          %2952 = vmatprep.subr.bf16.mxu0 0
          %2953 = vmatpush1.bf16.msra.mxu0 0
          %2954 = vmatprep.subr.bf16.mxu0 0
          %2955 = vmatpush1.bf16.msra.mxu0 0
          %2956 = vmatprep.subr.bf16.mxu0 0
          %2957 = vmatpush1.bf16.msra.mxu0 0
          %2958 = vmatprep.subr.bf16.mxu0 0
          %2959 = vmatpush1.bf16.msra.mxu0 0
          %2960 = vmatprep.subr.bf16.mxu0 0
          %2961 = vmatpush1.bf16.msra.mxu0 0
          %2962 = vmatprep.subr.bf16.mxu0 0
          %2963 = vmatpush1.bf16.msra.mxu0 0
          %2964 = vmatprep.subr.bf16.mxu0 0
          %2965 = vmatpush1.bf16.msra.mxu0 0
          %2966 = vmatprep.mubr.bf16.mxu0 0
          %2967 = vmatmul.mubr.bf16.gmra.mrb[0].mxu0 %v2932
          %v2968 = vpop.f32.mrb[0].mxu0
          %v2969 = vadd.f32 %v2905, %v2968
          %v2970 = vpop.f32.mrb[0].mxu0
          %v2971 = vpop.f32.mrb[0].mxu0
          %v2972 = vpop.f32.mrb[0].mxu0
          %2973 = vdwg.mxu0
          %v2974 = vld [vmem:[%s15] sm:$0x1]
          %v2975 = vld [vmem:[%s16] sm:$0x1]
          %v2976 = vsel %vm2882, %v2969, 0.0
          %2977 = vadd.xlane.f32.xlu0 %v2976
          %v2978 = vpop.xlane.xlu0 %2977
          %v2979 = vrcp.pop 64.0
          %v2980 = vmul.f32 %v2978, %v2979
          %v2981 = vsub.f32 %v2969, %v2980
          %v2982 = vmul.f32 %v2981, %v2981
          %v2983 = vsel %vm2882, %v2982, 0.0
          %2984 = vadd.xlane.f32.xlu0 %v2983
          %v2985 = vpop.xlane.xlu0 %2984
          %v2986 = vmul.f32 %v2985, %v2979
          %v2987 = vadd.f32 %v2986, 1e-05
          %v2988 = vrsqrt.pop %v2987
          %v2989 = vmul.f32 %v2981, %v2988
          %v2991 = vlaneseq
          %v2992 = vshrl.u32 %v2991, 7
          %v2993 = vsub.s32 0, %v2992
          %v2994 = vrot.slane %v2974, %v2993
          %v2996 = vmul.f32 %v2989, %v2994
          %v2998 = vlaneseq
          %v2999 = vshrl.u32 %v2998, 7
          %v3000 = vsub.s32 0, %v2999
          %v3001 = vrot.slane %v2975, %v3000
          %v3003 = vadd.f32 %v2996, %v3001
          %3004 = vst.msk [vmem:[%s788] sm:$0xf] %vm2882, %v3003
        $region141: #{tpu_custom_call.1} parent=124 // pred_fallthru
          _
        %s3005 = sand.u32 %s479, 1
        %s3006 = scalar_lea.sflag [#allocation6], %s3005
        %s3007 = sand.u32 %s479, 1
        %s3008 = smul.addr %s3007, 4
        %s3009 = scalar_lea.vmem [#allocation5], %s3008
        // Predicated region
        $region142: #{tpu_custom_call.1} parent=124 // pred_check
          %p3010 = pneg %p489
        $region143: #{tpu_custom_call.1} parent=124 // pred_check_branch
          %3012 = sbr.rel (%p3010) target = $region145
        $region144: #{tpu_custom_call.1} parent=124 // pred_region
          %s3014 = ssub.s32 64, 64
          %3015 = vsyncadd %s3006, %s3014
          %s3016 = smul.addr %s36, 64
          %s3017 = scalar_lea.hbm %s17, %s3016
          %s3019 = sshll.u32 %s3009, 4
          %s3020 = int_to_ptr.vmem [resolvable:$true] %s3019
          %3022 = dma.vmem_to_hbm [thread:$0]  %s3020, 64, %s3017, %s3006
        $region145: #{tpu_custom_call.1} parent=124 // pred_fallthru
          _
      $region125: #{tpu_custom_call.1} parent=5 // pred_fallthru
        _
      %p3023 = scmp.le.s32.totalorder 2, %s26
      // Predicated region
      $region146: #{tpu_custom_call.1} parent=5 // pred_check
        %p3024 = pneg %p3023
      $region147: #{tpu_custom_call.1} parent=5 // pred_check_branch
        %3026 = sbr.rel (%p3024) target = $region149
      $region148: #{tpu_custom_call.1} parent=5 // pred_region
        %s3027 = ssub.s32 %s26, 2
        // Predicated region
        $region150: #{tpu_custom_call.1} parent=148 // pred_check
          %p3028 = pneg %p495
        $region151: #{tpu_custom_call.1} parent=148 // pred_check_branch
          %3030 = sbr.rel (%p3028) target = $region153
        $region152: #{tpu_custom_call.1} parent=148 // pred_region
          %s3031 = sand.u32 %s480, 1
          %s3032 = scalar_lea.sflag [#allocation6], %s3031
          %s3033 = sand.u32 %s480, 1
          %s3034 = smul.addr %s3033, 4
          %s3035 = scalar_lea.vmem [#allocation5], %s3034
          %3036 = dma.done %s3032, 64
        $region153: #{tpu_custom_call.1} parent=148 // pred_fallthru
          _
      $region149: #{tpu_custom_call.1} parent=5 // pred_fallthru
        _
    $region6: #{tpu_custom_call.1} parent=1 // loop_footer
      %s30 = sadd.s32 1, %s26
    $region7: #{tpu_custom_call.1} parent=1 // loop_footer_branch
      %25 = sbr.rel target = $region3
    $region8: #{tpu_custom_call.1} parent=1 // loop_exit
      _
    %3037 = vsyncpa [#allocation6], 1
    %s3038 = scalar_lea.sflag [#allocation6], 1
    %3039 = vsyncpa %s3038, 1

</llo_original>
